<compile_context>
chip_gen: v5e
topology: v5e:2x2
jax: 0.10.0
libtpu: 0.0.40
codegen_flags: <defaults>
</compile_context>

<pallas_src>
import functools
import math

import jax
import jax.numpy as jnp
from jax.experimental import pallas as pl
from jax.experimental.pallas import tpu as pltpu

LN_EPS = 1e-5

# Falls back automatically if pl.Buffered(1) is not supported by this backend.
_SINGLE_BUFFER_WEIGHTS = [True]


# --------------------------- hardware-aware sizing -------------------------- #
@functools.lru_cache(maxsize=None)
def _vmem_capacity_bytes():
    try:
        return int(pltpu.get_tpu_info().vmem_capacity_bytes)
    except Exception:
        return 0  # unknown generation


def _vmem_limit_bytes():
    cap = _vmem_capacity_bytes()
    if cap <= 0:
        return 64 * 1024 * 1024            # safe default (fits every generation)
    return (cap // 4) * 3                   # leave ~25% headroom for compiler scratch


def _pick_q_tile(s):
    cap = _vmem_capacity_bytes()
    max_tile = 128 if (0 < cap <= 64 * 1024 * 1024) else 256   # smaller tiles on v7x
    if s <= max_tile:
        return s
    for t in range(max_tile, 7, -8):       # multiples of 8 that divide S
        if s % t == 0:
            return t
    return s


# ----------------------------- kernel helpers ------------------------------ #
def _ln(x, g, b, eps):
    mu = jnp.mean(x, axis=-1, keepdims=True)
    xc = x - mu
    var = jnp.mean(xc * xc, axis=-1, keepdims=True)
    return xc * jax.lax.rsqrt(var + eps) * g + b


def _gelu(x):
    c = 0.7978845608028654
    return 0.5 * x * (1.0 + jnp.tanh(c * (x + 0.044715 * x * x * x)))


# ------------------------------ Pallas kernels ----------------------------- #
def layernorm_kernel(x_ref, g_ref, b_ref, o_ref, *, eps):
    o_ref[...] = _ln(x_ref[...], g_ref[...], b_ref[...], eps).astype(o_ref.dtype)


def encoder_layer_kernel(x_ref, mask_ref,
                         emb_g_ref, emb_b_ref,
                         ln1_g_ref, ln1_b_ref,
                         wq_ref, bq_ref, wk_ref, bk_ref, wv_ref, bv_ref,
                         wo_ref, bo_ref,
                         ln2_g_ref, ln2_b_ref,
                         w1_ref, b1_ref, w2_ref, b2_ref,
                         fin_g_ref, fin_b_ref,
                         o_ref,
                         kh_ref, vh_ref,
                         *, num_heads, q_tile, eps, apply_emb_ln, apply_final_ln):
    nh = num_heads
    S, H = x_ref.shape
    d = H // nh
    tq = q_tile
    q_idx = pl.program_id(1)

    # ---- K/V (and full-sequence LayerNorms): once per (batch, layer) ------
    @pl.when(q_idx == 0)
    def _():
        x_all = x_ref[...]                                          # (S, H) f32
        if apply_emb_ln:                                            # fused emb LN
            x_all = _ln(x_all, emb_g_ref[...], emb_b_ref[...], eps)
        h_all = _ln(x_all, ln1_g_ref[...], ln1_b_ref[...], eps).astype(jnp.bfloat16)
        k = jnp.dot(h_all, wk_ref[...],
                    preferred_element_type=jnp.float32) + bk_ref[...]
        v = jnp.dot(h_all, wv_ref[...],
                    preferred_element_type=jnp.float32) + bv_ref[...]
        for h in range(nh):                                         # head-major cache
            kh_ref[h] = k[:, h * d:(h + 1) * d].astype(jnp.bfloat16)
            vh_ref[h] = v[:, h * d:(h + 1) * d].astype(jnp.bfloat16)

    # ---- query tile sliced from the resident (S, H) block -----------------
    q_start = pl.multiple_of(q_idx * tq, tq)
    x_q = x_ref[pl.ds(q_start, tq), :]                              # (tq, H)
    if apply_emb_ln:
        x_q = _ln(x_q, emb_g_ref[...], emb_b_ref[...], eps)

    # ---------------- pre-norm multi-head self-attention -------------------
    h_q = _ln(x_q, ln1_g_ref[...], ln1_b_ref[...], eps).astype(jnp.bfloat16)
    q = jnp.dot(h_q, wq_ref[...],                    # 1/sqrt(d) folded into wq/bq
                preferred_element_type=jnp.float32) + bq_ref[...]
    qh = jnp.stack([q[:, h * d:(h + 1) * d] for h in range(nh)],
                   axis=0).astype(jnp.bfloat16)                     # (nh, tq, d)

    neg = mask_ref[...]                                             # (1, S) add. mask
    s = jnp.einsum("hqd,hkd->hqk", qh, kh_ref[...],
                   preferred_element_type=jnp.float32)              # (nh, tq, S)
    s = s + neg
    s = s - jnp.max(s, axis=-1, keepdims=True)
    p = jnp.exp(s)
    p = p * pl.reciprocal(jnp.sum(p, axis=-1, keepdims=True), approx=True)

    ctx = jnp.einsum("hqk,hkd->hqd", p.astype(jnp.bfloat16), vh_ref[...],
                     preferred_element_type=jnp.float32)            # (nh, tq, d)

    ctx_cat = jnp.concatenate([ctx[h] for h in range(nh)], axis=-1)  # (tq, H)
    attn = (jnp.dot(ctx_cat.astype(jnp.bfloat16), wo_ref[...],
                    preferred_element_type=jnp.float32) + bo_ref[...])
    x1 = x_q + attn

    # ------------------------ pre-norm feed-forward -------------------------
    h2 = _ln(x1, ln2_g_ref[...], ln2_b_ref[...], eps)
    ff = _gelu(jnp.dot(h2.astype(jnp.bfloat16), w1_ref[...],
                       preferred_element_type=jnp.float32) + b1_ref[...])
    y = x1 + (jnp.dot(ff.astype(jnp.bfloat16), w2_ref[...],
                      preferred_element_type=jnp.float32) + b2_ref[...])

    # Fused final encoder LayerNorm (last layer only).
    if apply_final_ln:
        y = _ln(y, fin_g_ref[...], fin_b_ref[...], eps)

    o_ref[...] = y.astype(o_ref.dtype)


# ------------------------------ pallas_call wrappers ------------------------ #
def _weight_spec(shape, single_buffer):
    # Grid-invariant inputs: single-buffer them (double-buffering is pure waste).
    if single_buffer:
        return pl.BlockSpec(shape, lambda b, q: (0, 0),
                            pipeline_mode=pl.Buffered(1))
    return pl.BlockSpec(shape, lambda b, q: (0, 0))


def layernorm_pallas(x, g, b, eps=LN_EPS):
    B, S, H = x.shape
    return pl.pallas_call(
        functools.partial(layernorm_kernel, eps=eps),
        out_shape=jax.ShapeDtypeStruct((B, S, H), x.dtype),
        grid=(B,),
        in_specs=[pl.BlockSpec((None, S, H), lambda i: (i, 0, 0)),
                  pl.BlockSpec(g.shape, lambda i: (0, 0)),
                  pl.BlockSpec(b.shape, lambda i: (0, 0))],
        out_specs=pl.BlockSpec((None, S, H), lambda i: (i, 0, 0)),
        compiler_params=pltpu.CompilerParams(
            dimension_semantics=("parallel",),
            vmem_limit_bytes=_vmem_limit_bytes()),
    )(x, g, b)


def encoder_layer_pallas(x, neg_mask, lp, emb_ln, final_ln, *, num_heads,
                         apply_emb_ln, apply_final_ln, eps=LN_EPS):
    B, S, H = x.shape
    d = H // num_heads
    q_tile = _pick_q_tile(S)
    nq = S // q_tile

    weights = (emb_ln[0], emb_ln[1],
               lp["ln1_g"], lp["ln1_b"],
               lp["wq"], lp["bq"], lp["wk"], lp["bk"], lp["wv"], lp["bv"],
               lp["wo"], lp["bo"],
               lp["ln2_g"], lp["ln2_b"],
               lp["w1"], lp["b1"], lp["w2"], lp["b2"],
               final_ln[0], final_ln[1])

    kernel = functools.partial(
        encoder_layer_kernel, num_heads=num_heads, q_tile=q_tile, eps=eps,
        apply_emb_ln=apply_emb_ln, apply_final_ln=apply_final_ln)

    def run(single_buffer):
        in_specs = [
            # x passed ONCE: full (S,H) block; query tile sliced in-kernel.
            pl.BlockSpec((None, S, H), lambda b, q: (b, 0, 0)),
            # additive key mask
            pl.BlockSpec((None, 1, S), lambda b, q: (b, 0, 0)),
        ] + [_weight_spec(w.shape, single_buffer) for w in weights]

        return pl.pallas_call(
            kernel,
            out_shape=jax.ShapeDtypeStruct((B, S, H), x.dtype),
            grid=(B, nq),
            in_specs=in_specs,
            out_specs=pl.BlockSpec((None, q_tile, H), lambda b, q: (b, q, 0)),
            scratch_shapes=[pltpu.VMEM((num_heads, S, d), jnp.bfloat16),   # K cache
                            pltpu.VMEM((num_heads, S, d), jnp.bfloat16)], # V cache
            compiler_params=pltpu.CompilerParams(
                # batch axis feeds megacore TCs; q axis sequential so the
                # per-batch K/V scratch cache is valid across query tiles.
                dimension_semantics=("parallel", "arbitrary"),
                vmem_limit_bytes=_vmem_limit_bytes()),
        )(x, neg_mask, *weights)

    if _SINGLE_BUFFER_WEIGHTS[0]:
        try:
            return run(True)
        except Exception:
            _SINGLE_BUFFER_WEIGHTS[0] = False   # Buffered(1) unsupported: fall back
    return run(False)


# ------------------------------- model setup -------------------------------- #
def init_params(key, *, vocab_size, max_pos, type_vocab, H, I, num_layers,
                num_heads):
    assert H % num_heads == 0
    d = H // num_heads
    scale = 1.0 / math.sqrt(d)

    def nrm(k, shape):
        return 0.02 * jax.random.normal(k, shape, jnp.float32)

    ks = iter(jax.random.split(key, 3 + 12 * num_layers))
    params = {
        "word_emb": nrm(next(ks), (vocab_size, H)),
        "pos_emb": nrm(next(ks), (max_pos, H)),
        "type_emb": nrm(next(ks), (type_vocab, H)),
        "emb_ln_g": jnp.ones((1, H), jnp.float32),
        "emb_ln_b": jnp.zeros((1, H), jnp.float32),
        "final_ln_g": jnp.ones((1, H), jnp.float32),
        "final_ln_b": jnp.zeros((1, H), jnp.float32),
        "layers": [],
    }
    for _ in range(num_layers):
        lp = {
            "ln1_g": jnp.ones((1, H), jnp.float32),
            "ln1_b": jnp.zeros((1, H), jnp.float32),
            # 1/sqrt(head_dim) folded into the query projection; weights bf16.
            "wq": (nrm(next(ks), (H, H)) * scale).astype(jnp.bfloat16),
            "bq": nrm(next(ks), (1, H)) * scale,
            "wk": nrm(next(ks), (H, H)).astype(jnp.bfloat16),
            "bk": nrm(next(ks), (1, H)),
            "wv": nrm(next(ks), (H, H)).astype(jnp.bfloat16),
            "bv": nrm(next(ks), (1, H)),
            "wo": nrm(next(ks), (H, H)).astype(jnp.bfloat16),
            "bo": nrm(next(ks), (1, H)),
            "ln2_g": jnp.ones((1, H), jnp.float32),
            "ln2_b": jnp.zeros((1, H), jnp.float32),
            "w1": nrm(next(ks), (H, I)).astype(jnp.bfloat16),
            "b1": nrm(next(ks), (1, I)),
            "w2": nrm(next(ks), (I, H)).astype(jnp.bfloat16),
            "b2": nrm(next(ks), (1, H)),
        }
        params["layers"].append(lp)
    return params


def slide_model_forward(params, input_ids, token_type_ids, position_ids,
                        attention_mask, *, num_heads):
    # Embeddings (gathers are glue; all LayerNorms run inside Pallas kernels).
    # Dropout = eval mode (identity).
    emb = (jnp.take(params["word_emb"], input_ids, axis=0)
           + jnp.take(params["pos_emb"], position_ids, axis=0)
           + jnp.take(params["type_emb"], token_type_ids, axis=0))

    # Additive key mask computed once per forward (not per layer / grid step).
    neg_mask = ((1.0 - attention_mask.astype(jnp.float32))
                * jnp.float32(-10000.0))[:, None, :]            # (B, 1, S)

    emb_ln = (params["emb_ln_g"], params["emb_ln_b"])
    final_ln = (params["final_ln_g"], params["final_ln_b"])
    layers = params["layers"]

    if not layers:   # degenerate case: no encoder layers
        x = layernorm_pallas(emb, *emb_ln)
        x = layernorm_pallas(x, *final_ln)
        return x, {}

    x = emb
    n = len(layers)
    for i, lp in enumerate(layers):
        x = encoder_layer_pallas(
            x, neg_mask, lp, emb_ln, final_ln, num_heads=num_heads,
            apply_emb_ln=(i == 0), apply_final_ln=(i == n - 1))
    return x, {}


# ---------------------------------- main ------------------------------------ #
if __name__ == "__main__":
    B, S, H, I = 2, 8, 32, 64
    num_heads, num_layers = 2, 2
    vocab_size, max_pos, type_vocab = 100, 40, 2

    key = jax.random.PRNGKey(0)
    kp, ki = jax.random.split(key)
    params = init_params(kp, vocab_size=vocab_size, max_pos=max_pos,
                         type_vocab=type_vocab, H=H, I=I,
                         num_layers=num_layers, num_heads=num_heads)

    input_ids = jax.random.randint(ki, (B, S), 0, vocab_size, dtype=jnp.int32)
    token_type_ids = jnp.zeros((B, S), dtype=jnp.int32)
    # Roberta-style positions: padding_idx=1, real tokens start at 2.
    position_ids = jnp.broadcast_to(jnp.arange(2, 2 + S, dtype=jnp.int32), (B, S))
    attention_mask = jnp.ones((B, S), dtype=jnp.float32)
    attention_mask = attention_mask.at[1, S - 1].set(0.0)  # mask one key token

    seq_out, extras = slide_model_forward(
        params, input_ids, token_type_ids, position_ids, attention_mask,
        num_heads=num_heads)
    jax.block_until_ready(seq_out)
    assert seq_out.shape == (B, S, H) and extras == {}
    assert bool(jnp.all(jnp.isfinite(seq_out)))
    print("KERNEL_OK")
</pallas_src>

<mosaic_0001>
module attributes {stable_mosaic.version = 11 : i64} {
  func.func @encoder_layer_kernel(%arg0: i32, %arg1: i32, %arg2: memref<1x8x32xf32, #tpu.memory_space<vmem>>, %arg3: memref<1x1x8xf32, #tpu.memory_space<vmem>>, %arg4: memref<1x32xf32, #tpu.memory_space<vmem>>, %arg5: memref<1x32xf32, #tpu.memory_space<vmem>>, %arg6: memref<1x32xf32, #tpu.memory_space<vmem>>, %arg7: memref<1x32xf32, #tpu.memory_space<vmem>>, %arg8: memref<32x32xbf16, #tpu.memory_space<vmem>>, %arg9: memref<1x32xf32, #tpu.memory_space<vmem>>, %arg10: memref<32x32xbf16, #tpu.memory_space<vmem>>, %arg11: memref<1x32xf32, #tpu.memory_space<vmem>>, %arg12: memref<32x32xbf16, #tpu.memory_space<vmem>>, %arg13: memref<1x32xf32, #tpu.memory_space<vmem>>, %arg14: memref<32x32xbf16, #tpu.memory_space<vmem>>, %arg15: memref<1x32xf32, #tpu.memory_space<vmem>>, %arg16: memref<1x32xf32, #tpu.memory_space<vmem>>, %arg17: memref<1x32xf32, #tpu.memory_space<vmem>>, %arg18: memref<32x64xbf16, #tpu.memory_space<vmem>>, %arg19: memref<1x64xf32, #tpu.memory_space<vmem>>, %arg20: memref<64x32xbf16, #tpu.memory_space<vmem>>, %arg21: memref<1x32xf32, #tpu.memory_space<vmem>>, %arg22: memref<1x32xf32, #tpu.memory_space<vmem>>, %arg23: memref<1x32xf32, #tpu.memory_space<vmem>>, %arg24: memref<1x8x32xf32, #tpu.memory_space<vmem>>, %arg25: memref<2x8x16xbf16, #tpu.memory_space<vmem>>, %arg26: memref<2x8x16xbf16, #tpu.memory_space<vmem>>) attributes {dimension_semantics = [#tpu.dimension_semantics<parallel>, #tpu.dimension_semantics<arbitrary>], iteration_bounds = array<i64: 2, 1>, scalar_prefetch = 0 : i64, scratch_operands = 2 : i64, tpu.core_type = #tpu.core_type<tc>, window_params = [{transform_indices = @transform_0, window_bounds = array<i64: 1, 8, 32>}, {transform_indices = @transform_1, window_bounds = array<i64: 1, 1, 8>}, {pipeline_mode = #tpu.pipeline_mode<synchronous>, transform_indices = @transform_2, window_bounds = array<i64: 1, 32>}, {pipeline_mode = #tpu.pipeline_mode<synchronous>, transform_indices = @transform_3, window_bounds = array<i64: 1, 32>}, {pipeline_mode = #tpu.pipeline_mode<synchronous>, transform_indices = @transform_4, window_bounds = array<i64: 1, 32>}, {pipeline_mode = #tpu.pipeline_mode<synchronous>, transform_indices = @transform_5, window_bounds = array<i64: 1, 32>}, {pipeline_mode = #tpu.pipeline_mode<synchronous>, transform_indices = @transform_6, window_bounds = array<i64: 32, 32>}, {pipeline_mode = #tpu.pipeline_mode<synchronous>, transform_indices = @transform_7, window_bounds = array<i64: 1, 32>}, {pipeline_mode = #tpu.pipeline_mode<synchronous>, transform_indices = @transform_8, window_bounds = array<i64: 32, 32>}, {pipeline_mode = #tpu.pipeline_mode<synchronous>, transform_indices = @transform_9, window_bounds = array<i64: 1, 32>}, {pipeline_mode = #tpu.pipeline_mode<synchronous>, transform_indices = @transform_10, window_bounds = array<i64: 32, 32>}, {pipeline_mode = #tpu.pipeline_mode<synchronous>, transform_indices = @transform_11, window_bounds = array<i64: 1, 32>}, {pipeline_mode = #tpu.pipeline_mode<synchronous>, transform_indices = @transform_12, window_bounds = array<i64: 32, 32>}, {pipeline_mode = #tpu.pipeline_mode<synchronous>, transform_indices = @transform_13, window_bounds = array<i64: 1, 32>}, {pipeline_mode = #tpu.pipeline_mode<synchronous>, transform_indices = @transform_14, window_bounds = array<i64: 1, 32>}, {pipeline_mode = #tpu.pipeline_mode<synchronous>, transform_indices = @transform_15, window_bounds = array<i64: 1, 32>}, {pipeline_mode = #tpu.pipeline_mode<synchronous>, transform_indices = @transform_16, window_bounds = array<i64: 32, 64>}, {pipeline_mode = #tpu.pipeline_mode<synchronous>, transform_indices = @transform_17, window_bounds = array<i64: 1, 64>}, {pipeline_mode = #tpu.pipeline_mode<synchronous>, transform_indices = @transform_18, window_bounds = array<i64: 64, 32>}, {pipeline_mode = #tpu.pipeline_mode<synchronous>, transform_indices = @transform_19, window_bounds = array<i64: 1, 32>}, {pipeline_mode = #tpu.pipeline_mode<synchronous>, transform_indices = @transform_20, window_bounds = array<i64: 1, 32>}, {pipeline_mode = #tpu.pipeline_mode<synchronous>, transform_indices = @transform_21, window_bounds = array<i64: 1, 32>}, {transform_indices = @transform_22, window_bounds = array<i64: 1, 8, 32>}]} {
    %c0_i32 = arith.constant 0 : i32
    %0 = arith.cmpi eq, %arg1, %c0_i32 : i32
    %1 = arith.extui %0 : i1 to i32
    %c0_i32_0 = arith.constant 0 : i32
    %2 = arith.cmpi ne, %1, %c0_i32_0 : i32
    scf.if %2 {
      %c0_68 = arith.constant 0 : index
      %c0_69 = arith.constant 0 : index
      %c0_70 = arith.constant 0 : index
      %147 = vector.load %arg2[%c0_68, %c0_69, %c0_70] : memref<1x8x32xf32, #tpu.memory_space<vmem>>, vector<1x8x32xf32>
      %148 = vector.shape_cast %147 : vector<1x8x32xf32> to vector<8x32xf32>
      %c0_71 = arith.constant 0 : index
      %c0_72 = arith.constant 0 : index
      %149 = vector.load %arg4[%c0_71, %c0_72] : memref<1x32xf32, #tpu.memory_space<vmem>>, vector<1x32xf32>
      %c0_73 = arith.constant 0 : index
      %c0_74 = arith.constant 0 : index
      %150 = vector.load %arg5[%c0_73, %c0_74] : memref<1x32xf32, #tpu.memory_space<vmem>>, vector<1x32xf32>
      %cst_75 = arith.constant dense<0.000000e+00> : vector<8xf32>
      %151 = vector.multi_reduction <add>, %148, %cst_75 [1] : vector<8x32xf32> to vector<8xf32>
      %152 = vector.shape_cast %151 : vector<8xf32> to vector<8x1xf32>
      %cst_76 = arith.constant 3.200000e+01 : f32
      %153 = vector.broadcast %cst_76 : f32 to vector<8x1xf32>
      %154 = arith.divf %152, %153 : vector<8x1xf32>
      %155 = vector.broadcast %154 : vector<8x1xf32> to vector<8x32xf32>
      %156 = arith.subf %148, %155 : vector<8x32xf32>
      %157 = arith.mulf %156, %156 : vector<8x32xf32>
      %cst_77 = arith.constant dense<0.000000e+00> : vector<8xf32>
      %158 = vector.multi_reduction <add>, %157, %cst_77 [1] : vector<8x32xf32> to vector<8xf32>
      %159 = vector.shape_cast %158 : vector<8xf32> to vector<8x1xf32>
      %cst_78 = arith.constant 3.200000e+01 : f32
      %160 = vector.broadcast %cst_78 : f32 to vector<8x1xf32>
      %161 = arith.divf %159, %160 : vector<8x1xf32>
      %cst_79 = arith.constant 9.99999974E-6 : f32
      %162 = vector.broadcast %cst_79 : f32 to vector<8x1xf32>
      %163 = arith.addf %161, %162 : vector<8x1xf32>
      %164 = math.rsqrt %163 : vector<8x1xf32>
      %165 = vector.broadcast %164 : vector<8x1xf32> to vector<8x32xf32>
      %166 = arith.mulf %156, %165 : vector<8x32xf32>
      %167 = vector.broadcast %149 : vector<1x32xf32> to vector<8x32xf32>
      %168 = arith.mulf %166, %167 : vector<8x32xf32>
      %169 = vector.broadcast %150 : vector<1x32xf32> to vector<8x32xf32>
      %170 = arith.addf %168, %169 : vector<8x32xf32>
      %c0_80 = arith.constant 0 : index
      %c0_81 = arith.constant 0 : index
      %171 = vector.load %arg6[%c0_80, %c0_81] : memref<1x32xf32, #tpu.memory_space<vmem>>, vector<1x32xf32>
      %c0_82 = arith.constant 0 : index
      %c0_83 = arith.constant 0 : index
      %172 = vector.load %arg7[%c0_82, %c0_83] : memref<1x32xf32, #tpu.memory_space<vmem>>, vector<1x32xf32>
      %cst_84 = arith.constant dense<0.000000e+00> : vector<8xf32>
      %173 = vector.multi_reduction <add>, %170, %cst_84 [1] : vector<8x32xf32> to vector<8xf32>
      %174 = vector.shape_cast %173 : vector<8xf32> to vector<8x1xf32>
      %cst_85 = arith.constant 3.200000e+01 : f32
      %175 = vector.broadcast %cst_85 : f32 to vector<8x1xf32>
      %176 = arith.divf %174, %175 : vector<8x1xf32>
      %177 = vector.broadcast %176 : vector<8x1xf32> to vector<8x32xf32>
      %178 = arith.subf %170, %177 : vector<8x32xf32>
      %179 = arith.mulf %178, %178 : vector<8x32xf32>
      %cst_86 = arith.constant dense<0.000000e+00> : vector<8xf32>
      %180 = vector.multi_reduction <add>, %179, %cst_86 [1] : vector<8x32xf32> to vector<8xf32>
      %181 = vector.shape_cast %180 : vector<8xf32> to vector<8x1xf32>
      %cst_87 = arith.constant 3.200000e+01 : f32
      %182 = vector.broadcast %cst_87 : f32 to vector<8x1xf32>
      %183 = arith.divf %181, %182 : vector<8x1xf32>
      %cst_88 = arith.constant 9.99999974E-6 : f32
      %184 = vector.broadcast %cst_88 : f32 to vector<8x1xf32>
      %185 = arith.addf %183, %184 : vector<8x1xf32>
      %186 = math.rsqrt %185 : vector<8x1xf32>
      %187 = vector.broadcast %186 : vector<8x1xf32> to vector<8x32xf32>
      %188 = arith.mulf %178, %187 : vector<8x32xf32>
      %189 = vector.broadcast %171 : vector<1x32xf32> to vector<8x32xf32>
      %190 = arith.mulf %188, %189 : vector<8x32xf32>
      %191 = vector.broadcast %172 : vector<1x32xf32> to vector<8x32xf32>
      %192 = arith.addf %190, %191 : vector<8x32xf32>
      %193 = arith.truncf %192 : vector<8x32xf32> to vector<8x32xbf16>
      %c0_89 = arith.constant 0 : index
      %c0_90 = arith.constant 0 : index
      %194 = vector.load %arg10[%c0_89, %c0_90] : memref<32x32xbf16, #tpu.memory_space<vmem>>, vector<32x32xbf16>
      %cst_91 = arith.constant dense<0.000000e+00> : vector<8x32xf32>
      %195 = tpu.matmul %193, %194, %cst_91 {dimension_numbers = #tpu.dot_dimension_numbers<[1], [0], [0], [1], [0, 0, 1, 1], [], []>} : vector<8x32xbf16>, vector<32x32xbf16>, vector<8x32xf32> -> vector<8x32xf32>
      %c0_92 = arith.constant 0 : index
      %c0_93 = arith.constant 0 : index
      %196 = vector.load %arg11[%c0_92, %c0_93] : memref<1x32xf32, #tpu.memory_space<vmem>>, vector<1x32xf32>
      %197 = vector.broadcast %196 : vector<1x32xf32> to vector<8x32xf32>
      %198 = arith.addf %195, %197 : vector<8x32xf32>
      %c0_94 = arith.constant 0 : index
      %c0_95 = arith.constant 0 : index
      %199 = vector.load %arg12[%c0_94, %c0_95] : memref<32x32xbf16, #tpu.memory_space<vmem>>, vector<32x32xbf16>
      %cst_96 = arith.constant dense<0.000000e+00> : vector<8x32xf32>
      %200 = tpu.matmul %193, %199, %cst_96 {dimension_numbers = #tpu.dot_dimension_numbers<[1], [0], [0], [1], [0, 0, 1, 1], [], []>} : vector<8x32xbf16>, vector<32x32xbf16>, vector<8x32xf32> -> vector<8x32xf32>
      %c0_97 = arith.constant 0 : index
      %c0_98 = arith.constant 0 : index
      %201 = vector.load %arg13[%c0_97, %c0_98] : memref<1x32xf32, #tpu.memory_space<vmem>>, vector<1x32xf32>
      %202 = vector.broadcast %201 : vector<1x32xf32> to vector<8x32xf32>
      %203 = arith.addf %200, %202 : vector<8x32xf32>
      %204 = vector.extract_strided_slice %198 {offsets = [0, 0], sizes = [8, 16], strides = [1, 1]} : vector<8x32xf32> to vector<8x16xf32>
      %205 = arith.truncf %204 : vector<8x16xf32> to vector<8x16xbf16>
      %c0_99 = arith.constant 0 : index
      %c0_100 = arith.constant 0 : index
      %c0_101 = arith.constant 0 : index
      %206 = vector.load %arg25[%c0_99, %c0_100, %c0_101] : memref<2x8x16xbf16, #tpu.memory_space<vmem>>, vector<1x8x16xbf16>
      %207 = vector.shape_cast %206 : vector<1x8x16xbf16> to vector<8x16xbf16>
      %208 = vector.shape_cast %205 : vector<8x16xbf16> to vector<1x8x16xbf16>
      tpu.vector_store %arg25[%c0_99, %c0_100, %c0_101], %208 {strides = array<i32>} : memref<2x8x16xbf16, #tpu.memory_space<vmem>>, vector<1x8x16xbf16>,
      %209 = vector.extract_strided_slice %203 {offsets = [0, 0], sizes = [8, 16], strides = [1, 1]} : vector<8x32xf32> to vector<8x16xf32>
      %210 = arith.truncf %209 : vector<8x16xf32> to vector<8x16xbf16>
      %c0_102 = arith.constant 0 : index
      %c0_103 = arith.constant 0 : index
      %c0_104 = arith.constant 0 : index
      %211 = vector.load %arg26[%c0_102, %c0_103, %c0_104] : memref<2x8x16xbf16, #tpu.memory_space<vmem>>, vector<1x8x16xbf16>
      %212 = vector.shape_cast %211 : vector<1x8x16xbf16> to vector<8x16xbf16>
      %213 = vector.shape_cast %210 : vector<8x16xbf16> to vector<1x8x16xbf16>
      tpu.vector_store %arg26[%c0_102, %c0_103, %c0_104], %213 {strides = array<i32>} : memref<2x8x16xbf16, #tpu.memory_space<vmem>>, vector<1x8x16xbf16>,
      %214 = vector.extract_strided_slice %198 {offsets = [0, 16], sizes = [8, 16], strides = [1, 1]} : vector<8x32xf32> to vector<8x16xf32>
      %215 = arith.truncf %214 : vector<8x16xf32> to vector<8x16xbf16>
      %c1 = arith.constant 1 : index
      %c0_105 = arith.constant 0 : index
      %c0_106 = arith.constant 0 : index
      %216 = vector.load %arg25[%c1, %c0_105, %c0_106] : memref<2x8x16xbf16, #tpu.memory_space<vmem>>, vector<1x8x16xbf16>
      %217 = vector.shape_cast %216 : vector<1x8x16xbf16> to vector<8x16xbf16>
      %218 = vector.shape_cast %215 : vector<8x16xbf16> to vector<1x8x16xbf16>
      tpu.vector_store %arg25[%c1, %c0_105, %c0_106], %218 {strides = array<i32>} : memref<2x8x16xbf16, #tpu.memory_space<vmem>>, vector<1x8x16xbf16>,
      %219 = vector.extract_strided_slice %203 {offsets = [0, 16], sizes = [8, 16], strides = [1, 1]} : vector<8x32xf32> to vector<8x16xf32>
      %220 = arith.truncf %219 : vector<8x16xf32> to vector<8x16xbf16>
      %c1_107 = arith.constant 1 : index
      %c0_108 = arith.constant 0 : index
      %c0_109 = arith.constant 0 : index
      %221 = vector.load %arg26[%c1_107, %c0_108, %c0_109] : memref<2x8x16xbf16, #tpu.memory_space<vmem>>, vector<1x8x16xbf16>
      %222 = vector.shape_cast %221 : vector<1x8x16xbf16> to vector<8x16xbf16>
      %223 = vector.shape_cast %220 : vector<8x16xbf16> to vector<1x8x16xbf16>
      tpu.vector_store %arg26[%c1_107, %c0_108, %c0_109], %223 {strides = array<i32>} : memref<2x8x16xbf16, #tpu.memory_space<vmem>>, vector<1x8x16xbf16>,
    } else {
    }
    %c8_i32 = arith.constant 8 : i32
    %3 = arith.muli %arg1, %c8_i32 : i32
    %4 = tpu.assume_multiple %3, 8 : i32
    %c0 = arith.constant 0 : index
    %5 = arith.index_cast %4 : i32 to index
    %c0_1 = arith.constant 0 : index
    %6 = vector.load %arg2[%c0, %5, %c0_1] : memref<1x8x32xf32, #tpu.memory_space<vmem>>, vector<1x8x32xf32>
    %7 = vector.shape_cast %6 : vector<1x8x32xf32> to vector<8x32xf32>
    %c0_2 = arith.constant 0 : index
    %c0_3 = arith.constant 0 : index
    %8 = vector.load %arg4[%c0_2, %c0_3] : memref<1x32xf32, #tpu.memory_space<vmem>>, vector<1x32xf32>
    %c0_4 = arith.constant 0 : index
    %c0_5 = arith.constant 0 : index
    %9 = vector.load %arg5[%c0_4, %c0_5] : memref<1x32xf32, #tpu.memory_space<vmem>>, vector<1x32xf32>
    %cst = arith.constant dense<0.000000e+00> : vector<8xf32>
    %10 = vector.multi_reduction <add>, %7, %cst [1] : vector<8x32xf32> to vector<8xf32>
    %11 = vector.shape_cast %10 : vector<8xf32> to vector<8x1xf32>
    %cst_6 = arith.constant 3.200000e+01 : f32
    %12 = vector.broadcast %cst_6 : f32 to vector<8x1xf32>
    %13 = arith.divf %11, %12 : vector<8x1xf32>
    %14 = vector.broadcast %13 : vector<8x1xf32> to vector<8x32xf32>
    %15 = arith.subf %7, %14 : vector<8x32xf32>
    %16 = arith.mulf %15, %15 : vector<8x32xf32>
    %cst_7 = arith.constant dense<0.000000e+00> : vector<8xf32>
    %17 = vector.multi_reduction <add>, %16, %cst_7 [1] : vector<8x32xf32> to vector<8xf32>
    %18 = vector.shape_cast %17 : vector<8xf32> to vector<8x1xf32>
    %cst_8 = arith.constant 3.200000e+01 : f32
    %19 = vector.broadcast %cst_8 : f32 to vector<8x1xf32>
    %20 = arith.divf %18, %19 : vector<8x1xf32>
    %cst_9 = arith.constant 9.99999974E-6 : f32
    %21 = vector.broadcast %cst_9 : f32 to vector<8x1xf32>
    %22 = arith.addf %20, %21 : vector<8x1xf32>
    %23 = math.rsqrt %22 : vector<8x1xf32>
    %24 = vector.broadcast %23 : vector<8x1xf32> to vector<8x32xf32>
    %25 = arith.mulf %15, %24 : vector<8x32xf32>
    %26 = vector.broadcast %8 : vector<1x32xf32> to vector<8x32xf32>
    %27 = arith.mulf %25, %26 : vector<8x32xf32>
    %28 = vector.broadcast %9 : vector<1x32xf32> to vector<8x32xf32>
    %29 = arith.addf %27, %28 : vector<8x32xf32>
    %c0_10 = arith.constant 0 : index
    %c0_11 = arith.constant 0 : index
    %30 = vector.load %arg6[%c0_10, %c0_11] : memref<1x32xf32, #tpu.memory_space<vmem>>, vector<1x32xf32>
    %c0_12 = arith.constant 0 : index
    %c0_13 = arith.constant 0 : index
    %31 = vector.load %arg7[%c0_12, %c0_13] : memref<1x32xf32, #tpu.memory_space<vmem>>, vector<1x32xf32>
    %cst_14 = arith.constant dense<0.000000e+00> : vector<8xf32>
    %32 = vector.multi_reduction <add>, %29, %cst_14 [1] : vector<8x32xf32> to vector<8xf32>
    %33 = vector.shape_cast %32 : vector<8xf32> to vector<8x1xf32>
    %cst_15 = arith.constant 3.200000e+01 : f32
    %34 = vector.broadcast %cst_15 : f32 to vector<8x1xf32>
    %35 = arith.divf %33, %34 : vector<8x1xf32>
    %36 = vector.broadcast %35 : vector<8x1xf32> to vector<8x32xf32>
    %37 = arith.subf %29, %36 : vector<8x32xf32>
    %38 = arith.mulf %37, %37 : vector<8x32xf32>
    %cst_16 = arith.constant dense<0.000000e+00> : vector<8xf32>
    %39 = vector.multi_reduction <add>, %38, %cst_16 [1] : vector<8x32xf32> to vector<8xf32>
    %40 = vector.shape_cast %39 : vector<8xf32> to vector<8x1xf32>
    %cst_17 = arith.constant 3.200000e+01 : f32
    %41 = vector.broadcast %cst_17 : f32 to vector<8x1xf32>
    %42 = arith.divf %40, %41 : vector<8x1xf32>
    %cst_18 = arith.constant 9.99999974E-6 : f32
    %43 = vector.broadcast %cst_18 : f32 to vector<8x1xf32>
    %44 = arith.addf %42, %43 : vector<8x1xf32>
    %45 = math.rsqrt %44 : vector<8x1xf32>
    %46 = vector.broadcast %45 : vector<8x1xf32> to vector<8x32xf32>
    %47 = arith.mulf %37, %46 : vector<8x32xf32>
    %48 = vector.broadcast %30 : vector<1x32xf32> to vector<8x32xf32>
    %49 = arith.mulf %47, %48 : vector<8x32xf32>
    %50 = vector.broadcast %31 : vector<1x32xf32> to vector<8x32xf32>
    %51 = arith.addf %49, %50 : vector<8x32xf32>
    %52 = arith.truncf %51 : vector<8x32xf32> to vector<8x32xbf16>
    %c0_19 = arith.constant 0 : index
    %c0_20 = arith.constant 0 : index
    %53 = vector.load %arg8[%c0_19, %c0_20] : memref<32x32xbf16, #tpu.memory_space<vmem>>, vector<32x32xbf16>
    %cst_21 = arith.constant dense<0.000000e+00> : vector<8x32xf32>
    %54 = tpu.matmul %52, %53, %cst_21 {dimension_numbers = #tpu.dot_dimension_numbers<[1], [0], [0], [1], [0, 0, 1, 1], [], []>} : vector<8x32xbf16>, vector<32x32xbf16>, vector<8x32xf32> -> vector<8x32xf32>
    %c0_22 = arith.constant 0 : index
    %c0_23 = arith.constant 0 : index
    %55 = vector.load %arg9[%c0_22, %c0_23] : memref<1x32xf32, #tpu.memory_space<vmem>>, vector<1x32xf32>
    %56 = vector.broadcast %55 : vector<1x32xf32> to vector<8x32xf32>
    %57 = arith.addf %54, %56 : vector<8x32xf32>
    %58 = vector.extract_strided_slice %57 {offsets = [0, 0], sizes = [8, 16], strides = [1, 1]} : vector<8x32xf32> to vector<8x16xf32>
    %59 = vector.extract_strided_slice %57 {offsets = [0, 16], sizes = [8, 16], strides = [1, 1]} : vector<8x32xf32> to vector<8x16xf32>
    %60 = vector.shape_cast %58 : vector<8x16xf32> to vector<1x8x16xf32>
    %61 = vector.shape_cast %59 : vector<8x16xf32> to vector<1x8x16xf32>
    %62 = tpu.concatenate %60, %61 in 0 : vector<1x8x16xf32>, vector<1x8x16xf32> -> vector<2x8x16xf32>
    %63 = arith.truncf %62 : vector<2x8x16xf32> to vector<2x8x16xbf16>
    %c0_24 = arith.constant 0 : index
    %c0_25 = arith.constant 0 : index
    %c0_26 = arith.constant 0 : index
    %64 = vector.load %arg3[%c0_24, %c0_25, %c0_26] : memref<1x1x8xf32, #tpu.memory_space<vmem>>, vector<1x1x8xf32>
    %65 = vector.shape_cast %64 : vector<1x1x8xf32> to vector<1x8xf32>
    %c0_27 = arith.constant 0 : index
    %c0_28 = arith.constant 0 : index
    %c0_29 = arith.constant 0 : index
    %66 = vector.load %arg25[%c0_27, %c0_28, %c0_29] : memref<2x8x16xbf16, #tpu.memory_space<vmem>>, vector<2x8x16xbf16>
    "tpu.trace_start"() <{level = 10 : i32, message = "hqd,hkd->hqk"}> : () -> ()
    %cst_30 = arith.constant dense<0.000000e+00> : vector<2x8x8xf32>
    %67 = tpu.matmul %63, %66, %cst_30 {dimension_numbers = #tpu.dot_dimension_numbers<[2], [2], [1], [1], [0, 0, 0, 1, 1, 1], [0], [0]>} : vector<2x8x16xbf16>, vector<2x8x16xbf16>, vector<2x8x8xf32> -> vector<2x8x8xf32>
    "tpu.trace_stop"() : () -> ()
    %68 = vector.shape_cast %65 : vector<1x8xf32> to vector<1x1x8xf32>
    %69 = vector.broadcast %68 : vector<1x1x8xf32> to vector<2x8x8xf32>
    %70 = arith.addf %67, %69 : vector<2x8x8xf32>
    %cst_31 = arith.constant dense<0xFF800000> : vector<2x8xf32>
    %71 = vector.multi_reduction <maximumf>, %70, %cst_31 [2] : vector<2x8x8xf32> to vector<2x8xf32>
    %72 = vector.shape_cast %71 : vector<2x8xf32> to vector<2x8x1xf32>
    %73 = vector.broadcast %72 : vector<2x8x1xf32> to vector<2x8x8xf32>
    %74 = arith.subf %70, %73 : vector<2x8x8xf32>
    %75 = math.exp %74 : vector<2x8x8xf32>
    %cst_32 = arith.constant dense<0.000000e+00> : vector<2x8xf32>
    %76 = vector.multi_reduction <add>, %75, %cst_32 [2] : vector<2x8x8xf32> to vector<2x8xf32>
    %77 = vector.shape_cast %76 : vector<2x8xf32> to vector<2x8x1xf32>
    %78 = tpu.reciprocal %77 {approx = true} : vector<2x8x1xf32> -> vector<2x8x1xf32>
    %79 = vector.broadcast %78 : vector<2x8x1xf32> to vector<2x8x8xf32>
    %80 = arith.mulf %75, %79 : vector<2x8x8xf32>
    %81 = arith.truncf %80 : vector<2x8x8xf32> to vector<2x8x8xbf16>
    %c0_33 = arith.constant 0 : index
    %c0_34 = arith.constant 0 : index
    %c0_35 = arith.constant 0 : index
    %82 = vector.load %arg26[%c0_33, %c0_34, %c0_35] : memref<2x8x16xbf16, #tpu.memory_space<vmem>>, vector<2x8x16xbf16>
    "tpu.trace_start"() <{level = 10 : i32, message = "hqk,hkd->hqd"}> : () -> ()
    %cst_36 = arith.constant dense<0.000000e+00> : vector<2x8x16xf32>
    %83 = tpu.matmul %81, %82, %cst_36 {dimension_numbers = #tpu.dot_dimension_numbers<[2], [1], [1], [2], [0, 0, 0, 1, 1, 2], [0], [0]>} : vector<2x8x8xbf16>, vector<2x8x16xbf16>, vector<2x8x16xf32> -> vector<2x8x16xf32>
    "tpu.trace_stop"() : () -> ()
    %84 = vector.extract_strided_slice %83 {offsets = [0, 0, 0], sizes = [1, 8, 16], strides = [1, 1, 1]} : vector<2x8x16xf32> to vector<1x8x16xf32>
    %85 = vector.shape_cast %84 : vector<1x8x16xf32> to vector<8x16xf32>
    %86 = vector.extract_strided_slice %83 {offsets = [1, 0, 0], sizes = [1, 8, 16], strides = [1, 1, 1]} : vector<2x8x16xf32> to vector<1x8x16xf32>
    %87 = vector.shape_cast %86 : vector<1x8x16xf32> to vector<8x16xf32>
    %88 = tpu.concatenate %85, %87 in 1 : vector<8x16xf32>, vector<8x16xf32> -> vector<8x32xf32>
    %89 = arith.truncf %88 : vector<8x32xf32> to vector<8x32xbf16>
    %c0_37 = arith.constant 0 : index
    %c0_38 = arith.constant 0 : index
    %90 = vector.load %arg14[%c0_37, %c0_38] : memref<32x32xbf16, #tpu.memory_space<vmem>>, vector<32x32xbf16>
    %cst_39 = arith.constant dense<0.000000e+00> : vector<8x32xf32>
    %91 = tpu.matmul %89, %90, %cst_39 {dimension_numbers = #tpu.dot_dimension_numbers<[1], [0], [0], [1], [0, 0, 1, 1], [], []>} : vector<8x32xbf16>, vector<32x32xbf16>, vector<8x32xf32> -> vector<8x32xf32>
    %c0_40 = arith.constant 0 : index
    %c0_41 = arith.constant 0 : index
    %92 = vector.load %arg15[%c0_40, %c0_41] : memref<1x32xf32, #tpu.memory_space<vmem>>, vector<1x32xf32>
    %93 = vector.broadcast %92 : vector<1x32xf32> to vector<8x32xf32>
    %94 = arith.addf %91, %93 : vector<8x32xf32>
    %95 = arith.addf %29, %94 : vector<8x32xf32>
    %c0_42 = arith.constant 0 : index
    %c0_43 = arith.constant 0 : index
    %96 = vector.load %arg16[%c0_42, %c0_43] : memref<1x32xf32, #tpu.memory_space<vmem>>, vector<1x32xf32>
    %c0_44 = arith.constant 0 : index
    %c0_45 = arith.constant 0 : index
    %97 = vector.load %arg17[%c0_44, %c0_45] : memref<1x32xf32, #tpu.memory_space<vmem>>, vector<1x32xf32>
    %cst_46 = arith.constant dense<0.000000e+00> : vector<8xf32>
    %98 = vector.multi_reduction <add>, %95, %cst_46 [1] : vector<8x32xf32> to vector<8xf32>
    %99 = vector.shape_cast %98 : vector<8xf32> to vector<8x1xf32>
    %cst_47 = arith.constant 3.200000e+01 : f32
    %100 = vector.broadcast %cst_47 : f32 to vector<8x1xf32>
    %101 = arith.divf %99, %100 : vector<8x1xf32>
    %102 = vector.broadcast %101 : vector<8x1xf32> to vector<8x32xf32>
    %103 = arith.subf %95, %102 : vector<8x32xf32>
    %104 = arith.mulf %103, %103 : vector<8x32xf32>
    %cst_48 = arith.constant dense<0.000000e+00> : vector<8xf32>
    %105 = vector.multi_reduction <add>, %104, %cst_48 [1] : vector<8x32xf32> to vector<8xf32>
    %106 = vector.shape_cast %105 : vector<8xf32> to vector<8x1xf32>
    %cst_49 = arith.constant 3.200000e+01 : f32
    %107 = vector.broadcast %cst_49 : f32 to vector<8x1xf32>
    %108 = arith.divf %106, %107 : vector<8x1xf32>
    %cst_50 = arith.constant 9.99999974E-6 : f32
    %109 = vector.broadcast %cst_50 : f32 to vector<8x1xf32>
    %110 = arith.addf %108, %109 : vector<8x1xf32>
    %111 = math.rsqrt %110 : vector<8x1xf32>
    %112 = vector.broadcast %111 : vector<8x1xf32> to vector<8x32xf32>
    %113 = arith.mulf %103, %112 : vector<8x32xf32>
    %114 = vector.broadcast %96 : vector<1x32xf32> to vector<8x32xf32>
    %115 = arith.mulf %113, %114 : vector<8x32xf32>
    %116 = vector.broadcast %97 : vector<1x32xf32> to vector<8x32xf32>
    %117 = arith.addf %115, %116 : vector<8x32xf32>
    %118 = arith.truncf %117 : vector<8x32xf32> to vector<8x32xbf16>
    %c0_51 = arith.constant 0 : index
    %c0_52 = arith.constant 0 : index
    %119 = vector.load %arg18[%c0_51, %c0_52] : memref<32x64xbf16, #tpu.memory_space<vmem>>, vector<32x64xbf16>
    %cst_53 = arith.constant dense<0.000000e+00> : vector<8x64xf32>
    %120 = tpu.matmul %118, %119, %cst_53 {dimension_numbers = #tpu.dot_dimension_numbers<[1], [0], [0], [1], [0, 0, 1, 1], [], []>} : vector<8x32xbf16>, vector<32x64xbf16>, vector<8x64xf32> -> vector<8x64xf32>
    %c0_54 = arith.constant 0 : index
    %c0_55 = arith.constant 0 : index
    %121 = vector.load %arg19[%c0_54, %c0_55] : memref<1x64xf32, #tpu.memory_space<vmem>>, vector<1x64xf32>
    %122 = vector.broadcast %121 : vector<1x64xf32> to vector<8x64xf32>
    %123 = arith.addf %120, %122 : vector<8x64xf32>
    %cst_56 = arith.constant 5.000000e-01 : f32
    %124 = vector.broadcast %cst_56 : f32 to vector<8x64xf32>
    %125 = arith.mulf %124, %123 : vector<8x64xf32>
    %cst_57 = arith.constant 4.471500e-02 : f32
    %126 = vector.broadcast %cst_57 : f32 to vector<8x64xf32>
    %127 = arith.mulf %126, %123 : vector<8x64xf32>
    %128 = arith.mulf %127, %123 : vector<8x64xf32>
    %129 = arith.mulf %128, %123 : vector<8x64xf32>
    %130 = arith.addf %123, %129 : vector<8x64xf32>
    %cst_58 = arith.constant 0.797884583 : f32
    %131 = vector.broadcast %cst_58 : f32 to vector<8x64xf32>
    %132 = arith.mulf %131, %130 : vector<8x64xf32>
    %133 = math.tanh %132 : vector<8x64xf32>
    %cst_59 = arith.constant 1.000000e+00 : f32
    %134 = vector.broadcast %cst_59 : f32 to vector<8x64xf32>
    %135 = arith.addf %134, %133 : vector<8x64xf32>
    %136 = arith.mulf %125, %135 : vector<8x64xf32>
    %137 = arith.truncf %136 : vector<8x64xf32> to vector<8x64xbf16>
    %c0_60 = arith.constant 0 : index
    %c0_61 = arith.constant 0 : index
    %138 = vector.load %arg20[%c0_60, %c0_61] : memref<64x32xbf16, #tpu.memory_space<vmem>>, vector<64x32xbf16>
    %cst_62 = arith.constant dense<0.000000e+00> : vector<8x32xf32>
    %139 = tpu.matmul %137, %138, %cst_62 {dimension_numbers = #tpu.dot_dimension_numbers<[1], [0], [0], [1], [0, 0, 1, 1], [], []>} : vector<8x64xbf16>, vector<64x32xbf16>, vector<8x32xf32> -> vector<8x32xf32>
    %c0_63 = arith.constant 0 : index
    %c0_64 = arith.constant 0 : index
    %140 = vector.load %arg21[%c0_63, %c0_64] : memref<1x32xf32, #tpu.memory_space<vmem>>, vector<1x32xf32>
    %141 = vector.broadcast %140 : vector<1x32xf32> to vector<8x32xf32>
    %142 = arith.addf %139, %141 : vector<8x32xf32>
    %143 = arith.addf %95, %142 : vector<8x32xf32>
    %c0_65 = arith.constant 0 : index
    %c0_66 = arith.constant 0 : index
    %c0_67 = arith.constant 0 : index
    %144 = vector.load %arg24[%c0_65, %c0_66, %c0_67] : memref<1x8x32xf32, #tpu.memory_space<vmem>>, vector<1x8x32xf32>
    %145 = vector.shape_cast %144 : vector<1x8x32xf32> to vector<8x32xf32>
    %146 = vector.shape_cast %143 : vector<8x32xf32> to vector<1x8x32xf32>
    tpu.vector_store %arg24[%c0_65, %c0_66, %c0_67], %146 {strides = array<i32>} : memref<1x8x32xf32, #tpu.memory_space<vmem>>, vector<1x8x32xf32>,
    return
  }
  func.func @transform_0(%arg0: i32, %arg1: i32) -> (i32, i32, i32) {
    %c0_i32 = arith.constant 0 : i32
    %c0_i32_0 = arith.constant 0 : i32
    %c0_i32_1 = arith.constant 0 : i32
    return %arg0, %c0_i32, %c0_i32_0 : i32, i32, i32
  }
  func.func @transform_1(%arg0: i32, %arg1: i32) -> (i32, i32, i32) {
    %c0_i32 = arith.constant 0 : i32
    %c0_i32_0 = arith.constant 0 : i32
    %c0_i32_1 = arith.constant 0 : i32
    return %arg0, %c0_i32, %c0_i32_0 : i32, i32, i32
  }
  func.func @transform_2(%arg0: i32, %arg1: i32) -> (i32, i32) {
    %c0_i32 = arith.constant 0 : i32
    %c0_i32_0 = arith.constant 0 : i32
    %c0_i32_1 = arith.constant 0 : i32
    return %c0_i32, %c0_i32_0 : i32, i32
  }
  func.func @transform_3(%arg0: i32, %arg1: i32) -> (i32, i32) {
    %c0_i32 = arith.constant 0 : i32
    %c0_i32_0 = arith.constant 0 : i32
    %c0_i32_1 = arith.constant 0 : i32
    return %c0_i32, %c0_i32_0 : i32, i32
  }
  func.func @transform_4(%arg0: i32, %arg1: i32) -> (i32, i32) {
    %c0_i32 = arith.constant 0 : i32
    %c0_i32_0 = arith.constant 0 : i32
    %c0_i32_1 = arith.constant 0 : i32
    return %c0_i32, %c0_i32_0 : i32, i32
  }
  func.func @transform_5(%arg0: i32, %arg1: i32) -> (i32, i32) {
    %c0_i32 = arith.constant 0 : i32
    %c0_i32_0 = arith.constant 0 : i32
    %c0_i32_1 = arith.constant 0 : i32
    return %c0_i32, %c0_i32_0 : i32, i32
  }
  func.func @transform_6(%arg0: i32, %arg1: i32) -> (i32, i32) {
    %c0_i32 = arith.constant 0 : i32
    %c0_i32_0 = arith.constant 0 : i32
    %c0_i32_1 = arith.constant 0 : i32
    return %c0_i32, %c0_i32_0 : i32, i32
  }
  func.func @transform_7(%arg0: i32, %arg1: i32) -> (i32, i32) {
    %c0_i32 = arith.constant 0 : i32
    %c0_i32_0 = arith.constant 0 : i32
    %c0_i32_1 = arith.constant 0 : i32
    return %c0_i32, %c0_i32_0 : i32, i32
  }
  func.func @transform_8(%arg0: i32, %arg1: i32) -> (i32, i32) {
    %c0_i32 = arith.constant 0 : i32
    %c0_i32_0 = arith.constant 0 : i32
    %c0_i32_1 = arith.constant 0 : i32
    return %c0_i32, %c0_i32_0 : i32, i32
  }
  func.func @transform_9(%arg0: i32, %arg1: i32) -> (i32, i32) {
    %c0_i32 = arith.constant 0 : i32
    %c0_i32_0 = arith.constant 0 : i32
    %c0_i32_1 = arith.constant 0 : i32
    return %c0_i32, %c0_i32_0 : i32, i32
  }
  func.func @transform_10(%arg0: i32, %arg1: i32) -> (i32, i32) {
    %c0_i32 = arith.constant 0 : i32
    %c0_i32_0 = arith.constant 0 : i32
    %c0_i32_1 = arith.constant 0 : i32
    return %c0_i32, %c0_i32_0 : i32, i32
  }
  func.func @transform_11(%arg0: i32, %arg1: i32) -> (i32, i32) {
    %c0_i32 = arith.constant 0 : i32
    %c0_i32_0 = arith.constant 0 : i32
    %c0_i32_1 = arith.constant 0 : i32
    return %c0_i32, %c0_i32_0 : i32, i32
  }
  func.func @transform_12(%arg0: i32, %arg1: i32) -> (i32, i32) {
    %c0_i32 = arith.constant 0 : i32
    %c0_i32_0 = arith.constant 0 : i32
    %c0_i32_1 = arith.constant 0 : i32
    return %c0_i32, %c0_i32_0 : i32, i32
  }
  func.func @transform_13(%arg0: i32, %arg1: i32) -> (i32, i32) {
    %c0_i32 = arith.constant 0 : i32
    %c0_i32_0 = arith.constant 0 : i32
    %c0_i32_1 = arith.constant 0 : i32
    return %c0_i32, %c0_i32_0 : i32, i32
  }
  func.func @transform_14(%arg0: i32, %arg1: i32) -> (i32, i32) {
    %c0_i32 = arith.constant 0 : i32
    %c0_i32_0 = arith.constant 0 : i32
    %c0_i32_1 = arith.constant 0 : i32
    return %c0_i32, %c0_i32_0 : i32, i32
  }
  func.func @transform_15(%arg0: i32, %arg1: i32) -> (i32, i32) {
    %c0_i32 = arith.constant 0 : i32
    %c0_i32_0 = arith.constant 0 : i32
    %c0_i32_1 = arith.constant 0 : i32
    return %c0_i32, %c0_i32_0 : i32, i32
  }
  func.func @transform_16(%arg0: i32, %arg1: i32) -> (i32, i32) {
    %c0_i32 = arith.constant 0 : i32
    %c0_i32_0 = arith.constant 0 : i32
    %c0_i32_1 = arith.constant 0 : i32
    return %c0_i32, %c0_i32_0 : i32, i32
  }
  func.func @transform_17(%arg0: i32, %arg1: i32) -> (i32, i32) {
    %c0_i32 = arith.constant 0 : i32
    %c0_i32_0 = arith.constant 0 : i32
    %c0_i32_1 = arith.constant 0 : i32
    return %c0_i32, %c0_i32_0 : i32, i32
  }
  func.func @transform_18(%arg0: i32, %arg1: i32) -> (i32, i32) {
    %c0_i32 = arith.constant 0 : i32
    %c0_i32_0 = arith.constant 0 : i32
    %c0_i32_1 = arith.constant 0 : i32
    return %c0_i32, %c0_i32_0 : i32, i32
  }
  func.func @transform_19(%arg0: i32, %arg1: i32) -> (i32, i32) {
    %c0_i32 = arith.constant 0 : i32
    %c0_i32_0 = arith.constant 0 : i32
    %c0_i32_1 = arith.constant 0 : i32
    return %c0_i32, %c0_i32_0 : i32, i32
  }
  func.func @transform_20(%arg0: i32, %arg1: i32) -> (i32, i32) {
    %c0_i32 = arith.constant 0 : i32
    %c0_i32_0 = arith.constant 0 : i32
    %c0_i32_1 = arith.constant 0 : i32
    return %c0_i32, %c0_i32_0 : i32, i32
  }
  func.func @transform_21(%arg0: i32, %arg1: i32) -> (i32, i32) {
    %c0_i32 = arith.constant 0 : i32
    %c0_i32_0 = arith.constant 0 : i32
    %c0_i32_1 = arith.constant 0 : i32
    return %c0_i32, %c0_i32_0 : i32, i32
  }
  func.func @transform_22(%arg0: i32, %arg1: i32) -> (i32, i32, i32) {
    %c0_i32 = arith.constant 0 : i32
    %c0_i32_0 = arith.constant 0 : i32
    return %arg0, %arg1, %c0_i32 : i32, i32, i32
  }
}

module attributes {stable_mosaic.version = 11 : i64} {
  func.func @encoder_layer_kernel(%arg0: i32, %arg1: i32, %arg2: memref<1x8x32xf32, #tpu.memory_space<vmem>>, %arg3: memref<1x1x8xf32, #tpu.memory_space<vmem>>, %arg4: memref<1x32xf32, #tpu.memory_space<vmem>>, %arg5: memref<1x32xf32, #tpu.memory_space<vmem>>, %arg6: memref<1x32xf32, #tpu.memory_space<vmem>>, %arg7: memref<1x32xf32, #tpu.memory_space<vmem>>, %arg8: memref<32x32xbf16, #tpu.memory_space<vmem>>, %arg9: memref<1x32xf32, #tpu.memory_space<vmem>>, %arg10: memref<32x32xbf16, #tpu.memory_space<vmem>>, %arg11: memref<1x32xf32, #tpu.memory_space<vmem>>, %arg12: memref<32x32xbf16, #tpu.memory_space<vmem>>, %arg13: memref<1x32xf32, #tpu.memory_space<vmem>>, %arg14: memref<32x32xbf16, #tpu.memory_space<vmem>>, %arg15: memref<1x32xf32, #tpu.memory_space<vmem>>, %arg16: memref<1x32xf32, #tpu.memory_space<vmem>>, %arg17: memref<1x32xf32, #tpu.memory_space<vmem>>, %arg18: memref<32x64xbf16, #tpu.memory_space<vmem>>, %arg19: memref<1x64xf32, #tpu.memory_space<vmem>>, %arg20: memref<64x32xbf16, #tpu.memory_space<vmem>>, %arg21: memref<1x32xf32, #tpu.memory_space<vmem>>, %arg22: memref<1x32xf32, #tpu.memory_space<vmem>>, %arg23: memref<1x32xf32, #tpu.memory_space<vmem>>, %arg24: memref<1x8x32xf32, #tpu.memory_space<vmem>>, %arg25: memref<2x8x16xbf16, #tpu.memory_space<vmem>>, %arg26: memref<2x8x16xbf16, #tpu.memory_space<vmem>>) attributes {dimension_semantics = [#tpu.dimension_semantics<parallel>, #tpu.dimension_semantics<arbitrary>], iteration_bounds = array<i64: 2, 1>, scalar_prefetch = 0 : i64, scratch_operands = 2 : i64, tpu.core_type = #tpu.core_type<tc>, window_params = [{transform_indices = @transform_0, window_bounds = array<i64: 1, 8, 32>}, {transform_indices = @transform_1, window_bounds = array<i64: 1, 1, 8>}, {pipeline_mode = #tpu.pipeline_mode<synchronous>, transform_indices = @transform_2, window_bounds = array<i64: 1, 32>}, {pipeline_mode = #tpu.pipeline_mode<synchronous>, transform_indices = @transform_3, window_bounds = array<i64: 1, 32>}, {pipeline_mode = #tpu.pipeline_mode<synchronous>, transform_indices = @transform_4, window_bounds = array<i64: 1, 32>}, {pipeline_mode = #tpu.pipeline_mode<synchronous>, transform_indices = @transform_5, window_bounds = array<i64: 1, 32>}, {pipeline_mode = #tpu.pipeline_mode<synchronous>, transform_indices = @transform_6, window_bounds = array<i64: 32, 32>}, {pipeline_mode = #tpu.pipeline_mode<synchronous>, transform_indices = @transform_7, window_bounds = array<i64: 1, 32>}, {pipeline_mode = #tpu.pipeline_mode<synchronous>, transform_indices = @transform_8, window_bounds = array<i64: 32, 32>}, {pipeline_mode = #tpu.pipeline_mode<synchronous>, transform_indices = @transform_9, window_bounds = array<i64: 1, 32>}, {pipeline_mode = #tpu.pipeline_mode<synchronous>, transform_indices = @transform_10, window_bounds = array<i64: 32, 32>}, {pipeline_mode = #tpu.pipeline_mode<synchronous>, transform_indices = @transform_11, window_bounds = array<i64: 1, 32>}, {pipeline_mode = #tpu.pipeline_mode<synchronous>, transform_indices = @transform_12, window_bounds = array<i64: 32, 32>}, {pipeline_mode = #tpu.pipeline_mode<synchronous>, transform_indices = @transform_13, window_bounds = array<i64: 1, 32>}, {pipeline_mode = #tpu.pipeline_mode<synchronous>, transform_indices = @transform_14, window_bounds = array<i64: 1, 32>}, {pipeline_mode = #tpu.pipeline_mode<synchronous>, transform_indices = @transform_15, window_bounds = array<i64: 1, 32>}, {pipeline_mode = #tpu.pipeline_mode<synchronous>, transform_indices = @transform_16, window_bounds = array<i64: 32, 64>}, {pipeline_mode = #tpu.pipeline_mode<synchronous>, transform_indices = @transform_17, window_bounds = array<i64: 1, 64>}, {pipeline_mode = #tpu.pipeline_mode<synchronous>, transform_indices = @transform_18, window_bounds = array<i64: 64, 32>}, {pipeline_mode = #tpu.pipeline_mode<synchronous>, transform_indices = @transform_19, window_bounds = array<i64: 1, 32>}, {pipeline_mode = #tpu.pipeline_mode<synchronous>, transform_indices = @transform_20, window_bounds = array<i64: 1, 32>}, {pipeline_mode = #tpu.pipeline_mode<synchronous>, transform_indices = @transform_21, window_bounds = array<i64: 1, 32>}, {transform_indices = @transform_22, window_bounds = array<i64: 1, 8, 32>}]} {
    %c0_i32 = arith.constant 0 : i32
    %0 = arith.cmpi eq, %arg1, %c0_i32 : i32
    %1 = arith.extui %0 : i1 to i32
    %c0_i32_0 = arith.constant 0 : i32
    %2 = arith.cmpi ne, %1, %c0_i32_0 : i32
    scf.if %2 {
      %c0_68 = arith.constant 0 : index
      %c0_69 = arith.constant 0 : index
      %c0_70 = arith.constant 0 : index
      %147 = vector.load %arg2[%c0_68, %c0_69, %c0_70] : memref<1x8x32xf32, #tpu.memory_space<vmem>>, vector<1x8x32xf32>
      %148 = vector.shape_cast %147 : vector<1x8x32xf32> to vector<8x32xf32>
      %c0_71 = arith.constant 0 : index
      %c0_72 = arith.constant 0 : index
      %149 = vector.load %arg4[%c0_71, %c0_72] : memref<1x32xf32, #tpu.memory_space<vmem>>, vector<1x32xf32>
      %c0_73 = arith.constant 0 : index
      %c0_74 = arith.constant 0 : index
      %150 = vector.load %arg5[%c0_73, %c0_74] : memref<1x32xf32, #tpu.memory_space<vmem>>, vector<1x32xf32>
      %cst_75 = arith.constant dense<0.000000e+00> : vector<8xf32>
      %151 = vector.multi_reduction <add>, %148, %cst_75 [1] : vector<8x32xf32> to vector<8xf32>
      %152 = vector.shape_cast %151 : vector<8xf32> to vector<8x1xf32>
      %cst_76 = arith.constant 3.200000e+01 : f32
      %153 = vector.broadcast %cst_76 : f32 to vector<8x1xf32>
      %154 = arith.divf %152, %153 : vector<8x1xf32>
      %155 = vector.broadcast %154 : vector<8x1xf32> to vector<8x32xf32>
      %156 = arith.subf %148, %155 : vector<8x32xf32>
      %157 = arith.mulf %156, %156 : vector<8x32xf32>
      %cst_77 = arith.constant dense<0.000000e+00> : vector<8xf32>
      %158 = vector.multi_reduction <add>, %157, %cst_77 [1] : vector<8x32xf32> to vector<8xf32>
      %159 = vector.shape_cast %158 : vector<8xf32> to vector<8x1xf32>
      %cst_78 = arith.constant 3.200000e+01 : f32
      %160 = vector.broadcast %cst_78 : f32 to vector<8x1xf32>
      %161 = arith.divf %159, %160 : vector<8x1xf32>
      %cst_79 = arith.constant 9.99999974E-6 : f32
      %162 = vector.broadcast %cst_79 : f32 to vector<8x1xf32>
      %163 = arith.addf %161, %162 : vector<8x1xf32>
      %164 = math.rsqrt %163 : vector<8x1xf32>
      %165 = vector.broadcast %164 : vector<8x1xf32> to vector<8x32xf32>
      %166 = arith.mulf %156, %165 : vector<8x32xf32>
      %167 = vector.broadcast %149 : vector<1x32xf32> to vector<8x32xf32>
      %168 = arith.mulf %166, %167 : vector<8x32xf32>
      %169 = vector.broadcast %150 : vector<1x32xf32> to vector<8x32xf32>
      %170 = arith.addf %168, %169 : vector<8x32xf32>
      %c0_80 = arith.constant 0 : index
      %c0_81 = arith.constant 0 : index
      %171 = vector.load %arg6[%c0_80, %c0_81] : memref<1x32xf32, #tpu.memory_space<vmem>>, vector<1x32xf32>
      %c0_82 = arith.constant 0 : index
      %c0_83 = arith.constant 0 : index
      %172 = vector.load %arg7[%c0_82, %c0_83] : memref<1x32xf32, #tpu.memory_space<vmem>>, vector<1x32xf32>
      %cst_84 = arith.constant dense<0.000000e+00> : vector<8xf32>
      %173 = vector.multi_reduction <add>, %170, %cst_84 [1] : vector<8x32xf32> to vector<8xf32>
      %174 = vector.shape_cast %173 : vector<8xf32> to vector<8x1xf32>
      %cst_85 = arith.constant 3.200000e+01 : f32
      %175 = vector.broadcast %cst_85 : f32 to vector<8x1xf32>
      %176 = arith.divf %174, %175 : vector<8x1xf32>
      %177 = vector.broadcast %176 : vector<8x1xf32> to vector<8x32xf32>
      %178 = arith.subf %170, %177 : vector<8x32xf32>
      %179 = arith.mulf %178, %178 : vector<8x32xf32>
      %cst_86 = arith.constant dense<0.000000e+00> : vector<8xf32>
      %180 = vector.multi_reduction <add>, %179, %cst_86 [1] : vector<8x32xf32> to vector<8xf32>
      %181 = vector.shape_cast %180 : vector<8xf32> to vector<8x1xf32>
      %cst_87 = arith.constant 3.200000e+01 : f32
      %182 = vector.broadcast %cst_87 : f32 to vector<8x1xf32>
      %183 = arith.divf %181, %182 : vector<8x1xf32>
      %cst_88 = arith.constant 9.99999974E-6 : f32
      %184 = vector.broadcast %cst_88 : f32 to vector<8x1xf32>
      %185 = arith.addf %183, %184 : vector<8x1xf32>
      %186 = math.rsqrt %185 : vector<8x1xf32>
      %187 = vector.broadcast %186 : vector<8x1xf32> to vector<8x32xf32>
      %188 = arith.mulf %178, %187 : vector<8x32xf32>
      %189 = vector.broadcast %171 : vector<1x32xf32> to vector<8x32xf32>
      %190 = arith.mulf %188, %189 : vector<8x32xf32>
      %191 = vector.broadcast %172 : vector<1x32xf32> to vector<8x32xf32>
      %192 = arith.addf %190, %191 : vector<8x32xf32>
      %193 = arith.truncf %192 : vector<8x32xf32> to vector<8x32xbf16>
      %c0_89 = arith.constant 0 : index
      %c0_90 = arith.constant 0 : index
      %194 = vector.load %arg10[%c0_89, %c0_90] : memref<32x32xbf16, #tpu.memory_space<vmem>>, vector<32x32xbf16>
      %cst_91 = arith.constant dense<0.000000e+00> : vector<8x32xf32>
      %195 = tpu.matmul %193, %194, %cst_91 {dimension_numbers = #tpu.dot_dimension_numbers<[1], [0], [0], [1], [0, 0, 1, 1], [], []>} : vector<8x32xbf16>, vector<32x32xbf16>, vector<8x32xf32> -> vector<8x32xf32>
      %c0_92 = arith.constant 0 : index
      %c0_93 = arith.constant 0 : index
      %196 = vector.load %arg11[%c0_92, %c0_93] : memref<1x32xf32, #tpu.memory_space<vmem>>, vector<1x32xf32>
      %197 = vector.broadcast %196 : vector<1x32xf32> to vector<8x32xf32>
      %198 = arith.addf %195, %197 : vector<8x32xf32>
      %c0_94 = arith.constant 0 : index
      %c0_95 = arith.constant 0 : index
      %199 = vector.load %arg12[%c0_94, %c0_95] : memref<32x32xbf16, #tpu.memory_space<vmem>>, vector<32x32xbf16>
      %cst_96 = arith.constant dense<0.000000e+00> : vector<8x32xf32>
      %200 = tpu.matmul %193, %199, %cst_96 {dimension_numbers = #tpu.dot_dimension_numbers<[1], [0], [0], [1], [0, 0, 1, 1], [], []>} : vector<8x32xbf16>, vector<32x32xbf16>, vector<8x32xf32> -> vector<8x32xf32>
      %c0_97 = arith.constant 0 : index
      %c0_98 = arith.constant 0 : index
      %201 = vector.load %arg13[%c0_97, %c0_98] : memref<1x32xf32, #tpu.memory_space<vmem>>, vector<1x32xf32>
      %202 = vector.broadcast %201 : vector<1x32xf32> to vector<8x32xf32>
      %203 = arith.addf %200, %202 : vector<8x32xf32>
      %204 = vector.extract_strided_slice %198 {offsets = [0, 0], sizes = [8, 16], strides = [1, 1]} : vector<8x32xf32> to vector<8x16xf32>
      %205 = arith.truncf %204 : vector<8x16xf32> to vector<8x16xbf16>
      %c0_99 = arith.constant 0 : index
      %c0_100 = arith.constant 0 : index
      %c0_101 = arith.constant 0 : index
      %206 = vector.load %arg25[%c0_99, %c0_100, %c0_101] : memref<2x8x16xbf16, #tpu.memory_space<vmem>>, vector<1x8x16xbf16>
      %207 = vector.shape_cast %206 : vector<1x8x16xbf16> to vector<8x16xbf16>
      %208 = vector.shape_cast %205 : vector<8x16xbf16> to vector<1x8x16xbf16>
      tpu.vector_store %arg25[%c0_99, %c0_100, %c0_101], %208 {strides = array<i32>} : memref<2x8x16xbf16, #tpu.memory_space<vmem>>, vector<1x8x16xbf16>,
      %209 = vector.extract_strided_slice %203 {offsets = [0, 0], sizes = [8, 16], strides = [1, 1]} : vector<8x32xf32> to vector<8x16xf32>
      %210 = arith.truncf %209 : vector<8x16xf32> to vector<8x16xbf16>
      %c0_102 = arith.constant 0 : index
      %c0_103 = arith.constant 0 : index
      %c0_104 = arith.constant 0 : index
      %211 = vector.load %arg26[%c0_102, %c0_103, %c0_104] : memref<2x8x16xbf16, #tpu.memory_space<vmem>>, vector<1x8x16xbf16>
      %212 = vector.shape_cast %211 : vector<1x8x16xbf16> to vector<8x16xbf16>
      %213 = vector.shape_cast %210 : vector<8x16xbf16> to vector<1x8x16xbf16>
      tpu.vector_store %arg26[%c0_102, %c0_103, %c0_104], %213 {strides = array<i32>} : memref<2x8x16xbf16, #tpu.memory_space<vmem>>, vector<1x8x16xbf16>,
      %214 = vector.extract_strided_slice %198 {offsets = [0, 16], sizes = [8, 16], strides = [1, 1]} : vector<8x32xf32> to vector<8x16xf32>
      %215 = arith.truncf %214 : vector<8x16xf32> to vector<8x16xbf16>
      %c1 = arith.constant 1 : index
      %c0_105 = arith.constant 0 : index
      %c0_106 = arith.constant 0 : index
      %216 = vector.load %arg25[%c1, %c0_105, %c0_106] : memref<2x8x16xbf16, #tpu.memory_space<vmem>>, vector<1x8x16xbf16>
      %217 = vector.shape_cast %216 : vector<1x8x16xbf16> to vector<8x16xbf16>
      %218 = vector.shape_cast %215 : vector<8x16xbf16> to vector<1x8x16xbf16>
      tpu.vector_store %arg25[%c1, %c0_105, %c0_106], %218 {strides = array<i32>} : memref<2x8x16xbf16, #tpu.memory_space<vmem>>, vector<1x8x16xbf16>,
      %219 = vector.extract_strided_slice %203 {offsets = [0, 16], sizes = [8, 16], strides = [1, 1]} : vector<8x32xf32> to vector<8x16xf32>
      %220 = arith.truncf %219 : vector<8x16xf32> to vector<8x16xbf16>
      %c1_107 = arith.constant 1 : index
      %c0_108 = arith.constant 0 : index
      %c0_109 = arith.constant 0 : index
      %221 = vector.load %arg26[%c1_107, %c0_108, %c0_109] : memref<2x8x16xbf16, #tpu.memory_space<vmem>>, vector<1x8x16xbf16>
      %222 = vector.shape_cast %221 : vector<1x8x16xbf16> to vector<8x16xbf16>
      %223 = vector.shape_cast %220 : vector<8x16xbf16> to vector<1x8x16xbf16>
      tpu.vector_store %arg26[%c1_107, %c0_108, %c0_109], %223 {strides = array<i32>} : memref<2x8x16xbf16, #tpu.memory_space<vmem>>, vector<1x8x16xbf16>,
    } else {
    }
    %c8_i32 = arith.constant 8 : i32
    %3 = arith.muli %arg1, %c8_i32 : i32
    %4 = tpu.assume_multiple %3, 8 : i32
    %c0 = arith.constant 0 : index
    %5 = arith.index_cast %4 : i32 to index
    %c0_1 = arith.constant 0 : index
    %6 = vector.load %arg2[%c0, %5, %c0_1] : memref<1x8x32xf32, #tpu.memory_space<vmem>>, vector<1x8x32xf32>
    %7 = vector.shape_cast %6 : vector<1x8x32xf32> to vector<8x32xf32>
    %c0_2 = arith.constant 0 : index
    %c0_3 = arith.constant 0 : index
    %8 = vector.load %arg4[%c0_2, %c0_3] : memref<1x32xf32, #tpu.memory_space<vmem>>, vector<1x32xf32>
    %c0_4 = arith.constant 0 : index
    %c0_5 = arith.constant 0 : index
    %9 = vector.load %arg5[%c0_4, %c0_5] : memref<1x32xf32, #tpu.memory_space<vmem>>, vector<1x32xf32>
    %cst = arith.constant dense<0.000000e+00> : vector<8xf32>
    %10 = vector.multi_reduction <add>, %7, %cst [1] : vector<8x32xf32> to vector<8xf32>
    %11 = vector.shape_cast %10 : vector<8xf32> to vector<8x1xf32>
    %cst_6 = arith.constant 3.200000e+01 : f32
    %12 = vector.broadcast %cst_6 : f32 to vector<8x1xf32>
    %13 = arith.divf %11, %12 : vector<8x1xf32>
    %14 = vector.broadcast %13 : vector<8x1xf32> to vector<8x32xf32>
    %15 = arith.subf %7, %14 : vector<8x32xf32>
    %16 = arith.mulf %15, %15 : vector<8x32xf32>
    %cst_7 = arith.constant dense<0.000000e+00> : vector<8xf32>
    %17 = vector.multi_reduction <add>, %16, %cst_7 [1] : vector<8x32xf32> to vector<8xf32>
    %18 = vector.shape_cast %17 : vector<8xf32> to vector<8x1xf32>
    %cst_8 = arith.constant 3.200000e+01 : f32
    %19 = vector.broadcast %cst_8 : f32 to vector<8x1xf32>
    %20 = arith.divf %18, %19 : vector<8x1xf32>
    %cst_9 = arith.constant 9.99999974E-6 : f32
    %21 = vector.broadcast %cst_9 : f32 to vector<8x1xf32>
    %22 = arith.addf %20, %21 : vector<8x1xf32>
    %23 = math.rsqrt %22 : vector<8x1xf32>
    %24 = vector.broadcast %23 : vector<8x1xf32> to vector<8x32xf32>
    %25 = arith.mulf %15, %24 : vector<8x32xf32>
    %26 = vector.broadcast %8 : vector<1x32xf32> to vector<8x32xf32>
    %27 = arith.mulf %25, %26 : vector<8x32xf32>
    %28 = vector.broadcast %9 : vector<1x32xf32> to vector<8x32xf32>
    %29 = arith.addf %27, %28 : vector<8x32xf32>
    %c0_10 = arith.constant 0 : index
    %c0_11 = arith.constant 0 : index
    %30 = vector.load %arg6[%c0_10, %c0_11] : memref<1x32xf32, #tpu.memory_space<vmem>>, vector<1x32xf32>
    %c0_12 = arith.constant 0 : index
    %c0_13 = arith.constant 0 : index
    %31 = vector.load %arg7[%c0_12, %c0_13] : memref<1x32xf32, #tpu.memory_space<vmem>>, vector<1x32xf32>
    %cst_14 = arith.constant dense<0.000000e+00> : vector<8xf32>
    %32 = vector.multi_reduction <add>, %29, %cst_14 [1] : vector<8x32xf32> to vector<8xf32>
    %33 = vector.shape_cast %32 : vector<8xf32> to vector<8x1xf32>
    %cst_15 = arith.constant 3.200000e+01 : f32
    %34 = vector.broadcast %cst_15 : f32 to vector<8x1xf32>
    %35 = arith.divf %33, %34 : vector<8x1xf32>
    %36 = vector.broadcast %35 : vector<8x1xf32> to vector<8x32xf32>
    %37 = arith.subf %29, %36 : vector<8x32xf32>
    %38 = arith.mulf %37, %37 : vector<8x32xf32>
    %cst_16 = arith.constant dense<0.000000e+00> : vector<8xf32>
    %39 = vector.multi_reduction <add>, %38, %cst_16 [1] : vector<8x32xf32> to vector<8xf32>
    %40 = vector.shape_cast %39 : vector<8xf32> to vector<8x1xf32>
    %cst_17 = arith.constant 3.200000e+01 : f32
    %41 = vector.broadcast %cst_17 : f32 to vector<8x1xf32>
    %42 = arith.divf %40, %41 : vector<8x1xf32>
    %cst_18 = arith.constant 9.99999974E-6 : f32
    %43 = vector.broadcast %cst_18 : f32 to vector<8x1xf32>
    %44 = arith.addf %42, %43 : vector<8x1xf32>
    %45 = math.rsqrt %44 : vector<8x1xf32>
    %46 = vector.broadcast %45 : vector<8x1xf32> to vector<8x32xf32>
    %47 = arith.mulf %37, %46 : vector<8x32xf32>
    %48 = vector.broadcast %30 : vector<1x32xf32> to vector<8x32xf32>
    %49 = arith.mulf %47, %48 : vector<8x32xf32>
    %50 = vector.broadcast %31 : vector<1x32xf32> to vector<8x32xf32>
    %51 = arith.addf %49, %50 : vector<8x32xf32>
    %52 = arith.truncf %51 : vector<8x32xf32> to vector<8x32xbf16>
    %c0_19 = arith.constant 0 : index
    %c0_20 = arith.constant 0 : index
    %53 = vector.load %arg8[%c0_19, %c0_20] : memref<32x32xbf16, #tpu.memory_space<vmem>>, vector<32x32xbf16>
    %cst_21 = arith.constant dense<0.000000e+00> : vector<8x32xf32>
    %54 = tpu.matmul %52, %53, %cst_21 {dimension_numbers = #tpu.dot_dimension_numbers<[1], [0], [0], [1], [0, 0, 1, 1], [], []>} : vector<8x32xbf16>, vector<32x32xbf16>, vector<8x32xf32> -> vector<8x32xf32>
    %c0_22 = arith.constant 0 : index
    %c0_23 = arith.constant 0 : index
    %55 = vector.load %arg9[%c0_22, %c0_23] : memref<1x32xf32, #tpu.memory_space<vmem>>, vector<1x32xf32>
    %56 = vector.broadcast %55 : vector<1x32xf32> to vector<8x32xf32>
    %57 = arith.addf %54, %56 : vector<8x32xf32>
    %58 = vector.extract_strided_slice %57 {offsets = [0, 0], sizes = [8, 16], strides = [1, 1]} : vector<8x32xf32> to vector<8x16xf32>
    %59 = vector.extract_strided_slice %57 {offsets = [0, 16], sizes = [8, 16], strides = [1, 1]} : vector<8x32xf32> to vector<8x16xf32>
    %60 = vector.shape_cast %58 : vector<8x16xf32> to vector<1x8x16xf32>
    %61 = vector.shape_cast %59 : vector<8x16xf32> to vector<1x8x16xf32>
    %62 = tpu.concatenate %60, %61 in 0 : vector<1x8x16xf32>, vector<1x8x16xf32> -> vector<2x8x16xf32>
    %63 = arith.truncf %62 : vector<2x8x16xf32> to vector<2x8x16xbf16>
    %c0_24 = arith.constant 0 : index
    %c0_25 = arith.constant 0 : index
    %c0_26 = arith.constant 0 : index
    %64 = vector.load %arg3[%c0_24, %c0_25, %c0_26] : memref<1x1x8xf32, #tpu.memory_space<vmem>>, vector<1x1x8xf32>
    %65 = vector.shape_cast %64 : vector<1x1x8xf32> to vector<1x8xf32>
    %c0_27 = arith.constant 0 : index
    %c0_28 = arith.constant 0 : index
    %c0_29 = arith.constant 0 : index
    %66 = vector.load %arg25[%c0_27, %c0_28, %c0_29] : memref<2x8x16xbf16, #tpu.memory_space<vmem>>, vector<2x8x16xbf16>
    "tpu.trace_start"() <{level = 10 : i32, message = "hqd,hkd->hqk"}> : () -> ()
    %cst_30 = arith.constant dense<0.000000e+00> : vector<2x8x8xf32>
    %67 = tpu.matmul %63, %66, %cst_30 {dimension_numbers = #tpu.dot_dimension_numbers<[2], [2], [1], [1], [0, 0, 0, 1, 1, 1], [0], [0]>} : vector<2x8x16xbf16>, vector<2x8x16xbf16>, vector<2x8x8xf32> -> vector<2x8x8xf32>
    "tpu.trace_stop"() : () -> ()
    %68 = vector.shape_cast %65 : vector<1x8xf32> to vector<1x1x8xf32>
    %69 = vector.broadcast %68 : vector<1x1x8xf32> to vector<2x8x8xf32>
    %70 = arith.addf %67, %69 : vector<2x8x8xf32>
    %cst_31 = arith.constant dense<0xFF800000> : vector<2x8xf32>
    %71 = vector.multi_reduction <maximumf>, %70, %cst_31 [2] : vector<2x8x8xf32> to vector<2x8xf32>
    %72 = vector.shape_cast %71 : vector<2x8xf32> to vector<2x8x1xf32>
    %73 = vector.broadcast %72 : vector<2x8x1xf32> to vector<2x8x8xf32>
    %74 = arith.subf %70, %73 : vector<2x8x8xf32>
    %75 = math.exp %74 : vector<2x8x8xf32>
    %cst_32 = arith.constant dense<0.000000e+00> : vector<2x8xf32>
    %76 = vector.multi_reduction <add>, %75, %cst_32 [2] : vector<2x8x8xf32> to vector<2x8xf32>
    %77 = vector.shape_cast %76 : vector<2x8xf32> to vector<2x8x1xf32>
    %78 = tpu.reciprocal %77 {approx = true} : vector<2x8x1xf32> -> vector<2x8x1xf32>
    %79 = vector.broadcast %78 : vector<2x8x1xf32> to vector<2x8x8xf32>
    %80 = arith.mulf %75, %79 : vector<2x8x8xf32>
    %81 = arith.truncf %80 : vector<2x8x8xf32> to vector<2x8x8xbf16>
    %c0_33 = arith.constant 0 : index
    %c0_34 = arith.constant 0 : index
    %c0_35 = arith.constant 0 : index
    %82 = vector.load %arg26[%c0_33, %c0_34, %c0_35] : memref<2x8x16xbf16, #tpu.memory_space<vmem>>, vector<2x8x16xbf16>
    "tpu.trace_start"() <{level = 10 : i32, message = "hqk,hkd->hqd"}> : () -> ()
    %cst_36 = arith.constant dense<0.000000e+00> : vector<2x8x16xf32>
    %83 = tpu.matmul %81, %82, %cst_36 {dimension_numbers = #tpu.dot_dimension_numbers<[2], [1], [1], [2], [0, 0, 0, 1, 1, 2], [0], [0]>} : vector<2x8x8xbf16>, vector<2x8x16xbf16>, vector<2x8x16xf32> -> vector<2x8x16xf32>
    "tpu.trace_stop"() : () -> ()
    %84 = vector.extract_strided_slice %83 {offsets = [0, 0, 0], sizes = [1, 8, 16], strides = [1, 1, 1]} : vector<2x8x16xf32> to vector<1x8x16xf32>
    %85 = vector.shape_cast %84 : vector<1x8x16xf32> to vector<8x16xf32>
    %86 = vector.extract_strided_slice %83 {offsets = [1, 0, 0], sizes = [1, 8, 16], strides = [1, 1, 1]} : vector<2x8x16xf32> to vector<1x8x16xf32>
    %87 = vector.shape_cast %86 : vector<1x8x16xf32> to vector<8x16xf32>
    %88 = tpu.concatenate %85, %87 in 1 : vector<8x16xf32>, vector<8x16xf32> -> vector<8x32xf32>
    %89 = arith.truncf %88 : vector<8x32xf32> to vector<8x32xbf16>
    %c0_37 = arith.constant 0 : index
    %c0_38 = arith.constant 0 : index
    %90 = vector.load %arg14[%c0_37, %c0_38] : memref<32x32xbf16, #tpu.memory_space<vmem>>, vector<32x32xbf16>
    %cst_39 = arith.constant dense<0.000000e+00> : vector<8x32xf32>
    %91 = tpu.matmul %89, %90, %cst_39 {dimension_numbers = #tpu.dot_dimension_numbers<[1], [0], [0], [1], [0, 0, 1, 1], [], []>} : vector<8x32xbf16>, vector<32x32xbf16>, vector<8x32xf32> -> vector<8x32xf32>
    %c0_40 = arith.constant 0 : index
    %c0_41 = arith.constant 0 : index
    %92 = vector.load %arg15[%c0_40, %c0_41] : memref<1x32xf32, #tpu.memory_space<vmem>>, vector<1x32xf32>
    %93 = vector.broadcast %92 : vector<1x32xf32> to vector<8x32xf32>
    %94 = arith.addf %91, %93 : vector<8x32xf32>
    %95 = arith.addf %29, %94 : vector<8x32xf32>
    %c0_42 = arith.constant 0 : index
    %c0_43 = arith.constant 0 : index
    %96 = vector.load %arg16[%c0_42, %c0_43] : memref<1x32xf32, #tpu.memory_space<vmem>>, vector<1x32xf32>
    %c0_44 = arith.constant 0 : index
    %c0_45 = arith.constant 0 : index
    %97 = vector.load %arg17[%c0_44, %c0_45] : memref<1x32xf32, #tpu.memory_space<vmem>>, vector<1x32xf32>
    %cst_46 = arith.constant dense<0.000000e+00> : vector<8xf32>
    %98 = vector.multi_reduction <add>, %95, %cst_46 [1] : vector<8x32xf32> to vector<8xf32>
    %99 = vector.shape_cast %98 : vector<8xf32> to vector<8x1xf32>
    %cst_47 = arith.constant 3.200000e+01 : f32
    %100 = vector.broadcast %cst_47 : f32 to vector<8x1xf32>
    %101 = arith.divf %99, %100 : vector<8x1xf32>
    %102 = vector.broadcast %101 : vector<8x1xf32> to vector<8x32xf32>
    %103 = arith.subf %95, %102 : vector<8x32xf32>
    %104 = arith.mulf %103, %103 : vector<8x32xf32>
    %cst_48 = arith.constant dense<0.000000e+00> : vector<8xf32>
    %105 = vector.multi_reduction <add>, %104, %cst_48 [1] : vector<8x32xf32> to vector<8xf32>
    %106 = vector.shape_cast %105 : vector<8xf32> to vector<8x1xf32>
    %cst_49 = arith.constant 3.200000e+01 : f32
    %107 = vector.broadcast %cst_49 : f32 to vector<8x1xf32>
    %108 = arith.divf %106, %107 : vector<8x1xf32>
    %cst_50 = arith.constant 9.99999974E-6 : f32
    %109 = vector.broadcast %cst_50 : f32 to vector<8x1xf32>
    %110 = arith.addf %108, %109 : vector<8x1xf32>
    %111 = math.rsqrt %110 : vector<8x1xf32>
    %112 = vector.broadcast %111 : vector<8x1xf32> to vector<8x32xf32>
    %113 = arith.mulf %103, %112 : vector<8x32xf32>
    %114 = vector.broadcast %96 : vector<1x32xf32> to vector<8x32xf32>
    %115 = arith.mulf %113, %114 : vector<8x32xf32>
    %116 = vector.broadcast %97 : vector<1x32xf32> to vector<8x32xf32>
    %117 = arith.addf %115, %116 : vector<8x32xf32>
    %118 = arith.truncf %117 : vector<8x32xf32> to vector<8x32xbf16>
    %c0_51 = arith.constant 0 : index
    %c0_52 = arith.constant 0 : index
    %119 = vector.load %arg18[%c0_51, %c0_52] : memref<32x64xbf16, #tpu.memory_space<vmem>>, vector<32x64xbf16>
    %cst_53 = arith.constant dense<0.000000e+00> : vector<8x64xf32>
    %120 = tpu.matmul %118, %119, %cst_53 {dimension_numbers = #tpu.dot_dimension_numbers<[1], [0], [0], [1], [0, 0, 1, 1], [], []>} : vector<8x32xbf16>, vector<32x64xbf16>, vector<8x64xf32> -> vector<8x64xf32>
    %c0_54 = arith.constant 0 : index
    %c0_55 = arith.constant 0 : index
    %121 = vector.load %arg19[%c0_54, %c0_55] : memref<1x64xf32, #tpu.memory_space<vmem>>, vector<1x64xf32>
    %122 = vector.broadcast %121 : vector<1x64xf32> to vector<8x64xf32>
    %123 = arith.addf %120, %122 : vector<8x64xf32>
    %cst_56 = arith.constant 5.000000e-01 : f32
    %124 = vector.broadcast %cst_56 : f32 to vector<8x64xf32>
    %125 = arith.mulf %124, %123 : vector<8x64xf32>
    %cst_57 = arith.constant 4.471500e-02 : f32
    %126 = vector.broadcast %cst_57 : f32 to vector<8x64xf32>
    %127 = arith.mulf %126, %123 : vector<8x64xf32>
    %128 = arith.mulf %127, %123 : vector<8x64xf32>
    %129 = arith.mulf %128, %123 : vector<8x64xf32>
    %130 = arith.addf %123, %129 : vector<8x64xf32>
    %cst_58 = arith.constant 0.797884583 : f32
    %131 = vector.broadcast %cst_58 : f32 to vector<8x64xf32>
    %132 = arith.mulf %131, %130 : vector<8x64xf32>
    %133 = math.tanh %132 : vector<8x64xf32>
    %cst_59 = arith.constant 1.000000e+00 : f32
    %134 = vector.broadcast %cst_59 : f32 to vector<8x64xf32>
    %135 = arith.addf %134, %133 : vector<8x64xf32>
    %136 = arith.mulf %125, %135 : vector<8x64xf32>
    %137 = arith.truncf %136 : vector<8x64xf32> to vector<8x64xbf16>
    %c0_60 = arith.constant 0 : index
    %c0_61 = arith.constant 0 : index
    %138 = vector.load %arg20[%c0_60, %c0_61] : memref<64x32xbf16, #tpu.memory_space<vmem>>, vector<64x32xbf16>
    %cst_62 = arith.constant dense<0.000000e+00> : vector<8x32xf32>
    %139 = tpu.matmul %137, %138, %cst_62 {dimension_numbers = #tpu.dot_dimension_numbers<[1], [0], [0], [1], [0, 0, 1, 1], [], []>} : vector<8x64xbf16>, vector<64x32xbf16>, vector<8x32xf32> -> vector<8x32xf32>
    %c0_63 = arith.constant 0 : index
    %c0_64 = arith.constant 0 : index
    %140 = vector.load %arg21[%c0_63, %c0_64] : memref<1x32xf32, #tpu.memory_space<vmem>>, vector<1x32xf32>
    %141 = vector.broadcast %140 : vector<1x32xf32> to vector<8x32xf32>
    %142 = arith.addf %139, %141 : vector<8x32xf32>
    %143 = arith.addf %95, %142 : vector<8x32xf32>
    %c0_65 = arith.constant 0 : index
    %c0_66 = arith.constant 0 : index
    %c0_67 = arith.constant 0 : index
    %144 = vector.load %arg24[%c0_65, %c0_66, %c0_67] : memref<1x8x32xf32, #tpu.memory_space<vmem>>, vector<1x8x32xf32>
    %145 = vector.shape_cast %144 : vector<1x8x32xf32> to vector<8x32xf32>
    %146 = vector.shape_cast %143 : vector<8x32xf32> to vector<1x8x32xf32>
    tpu.vector_store %arg24[%c0_65, %c0_66, %c0_67], %146 {strides = array<i32>} : memref<1x8x32xf32, #tpu.memory_space<vmem>>, vector<1x8x32xf32>,
    return
  }
  func.func @transform_0(%arg0: i32, %arg1: i32) -> (i32, i32, i32) {
    %c0_i32 = arith.constant 0 : i32
    %c0_i32_0 = arith.constant 0 : i32
    %c0_i32_1 = arith.constant 0 : i32
    return %arg0, %c0_i32, %c0_i32_0 : i32, i32, i32
  }
  func.func @transform_1(%arg0: i32, %arg1: i32) -> (i32, i32, i32) {
    %c0_i32 = arith.constant 0 : i32
    %c0_i32_0 = arith.constant 0 : i32
    %c0_i32_1 = arith.constant 0 : i32
    return %arg0, %c0_i32, %c0_i32_0 : i32, i32, i32
  }
  func.func @transform_2(%arg0: i32, %arg1: i32) -> (i32, i32) {
    %c0_i32 = arith.constant 0 : i32
    %c0_i32_0 = arith.constant 0 : i32
    %c0_i32_1 = arith.constant 0 : i32
    return %c0_i32, %c0_i32_0 : i32, i32
  }
  func.func @transform_3(%arg0: i32, %arg1: i32) -> (i32, i32) {
    %c0_i32 = arith.constant 0 : i32
    %c0_i32_0 = arith.constant 0 : i32
    %c0_i32_1 = arith.constant 0 : i32
    return %c0_i32, %c0_i32_0 : i32, i32
  }
  func.func @transform_4(%arg0: i32, %arg1: i32) -> (i32, i32) {
    %c0_i32 = arith.constant 0 : i32
    %c0_i32_0 = arith.constant 0 : i32
    %c0_i32_1 = arith.constant 0 : i32
    return %c0_i32, %c0_i32_0 : i32, i32
  }
  func.func @transform_5(%arg0: i32, %arg1: i32) -> (i32, i32) {
    %c0_i32 = arith.constant 0 : i32
    %c0_i32_0 = arith.constant 0 : i32
    %c0_i32_1 = arith.constant 0 : i32
    return %c0_i32, %c0_i32_0 : i32, i32
  }
  func.func @transform_6(%arg0: i32, %arg1: i32) -> (i32, i32) {
    %c0_i32 = arith.constant 0 : i32
    %c0_i32_0 = arith.constant 0 : i32
    %c0_i32_1 = arith.constant 0 : i32
    return %c0_i32, %c0_i32_0 : i32, i32
  }
  func.func @transform_7(%arg0: i32, %arg1: i32) -> (i32, i32) {
    %c0_i32 = arith.constant 0 : i32
    %c0_i32_0 = arith.constant 0 : i32
    %c0_i32_1 = arith.constant 0 : i32
    return %c0_i32, %c0_i32_0 : i32, i32
  }
  func.func @transform_8(%arg0: i32, %arg1: i32) -> (i32, i32) {
    %c0_i32 = arith.constant 0 : i32
    %c0_i32_0 = arith.constant 0 : i32
    %c0_i32_1 = arith.constant 0 : i32
    return %c0_i32, %c0_i32_0 : i32, i32
  }
  func.func @transform_9(%arg0: i32, %arg1: i32) -> (i32, i32) {
    %c0_i32 = arith.constant 0 : i32
    %c0_i32_0 = arith.constant 0 : i32
    %c0_i32_1 = arith.constant 0 : i32
    return %c0_i32, %c0_i32_0 : i32, i32
  }
  func.func @transform_10(%arg0: i32, %arg1: i32) -> (i32, i32) {
    %c0_i32 = arith.constant 0 : i32
    %c0_i32_0 = arith.constant 0 : i32
    %c0_i32_1 = arith.constant 0 : i32
    return %c0_i32, %c0_i32_0 : i32, i32
  }
  func.func @transform_11(%arg0: i32, %arg1: i32) -> (i32, i32) {
    %c0_i32 = arith.constant 0 : i32
    %c0_i32_0 = arith.constant 0 : i32
    %c0_i32_1 = arith.constant 0 : i32
    return %c0_i32, %c0_i32_0 : i32, i32
  }
  func.func @transform_12(%arg0: i32, %arg1: i32) -> (i32, i32) {
    %c0_i32 = arith.constant 0 : i32
    %c0_i32_0 = arith.constant 0 : i32
    %c0_i32_1 = arith.constant 0 : i32
    return %c0_i32, %c0_i32_0 : i32, i32
  }
  func.func @transform_13(%arg0: i32, %arg1: i32) -> (i32, i32) {
    %c0_i32 = arith.constant 0 : i32
    %c0_i32_0 = arith.constant 0 : i32
    %c0_i32_1 = arith.constant 0 : i32
    return %c0_i32, %c0_i32_0 : i32, i32
  }
  func.func @transform_14(%arg0: i32, %arg1: i32) -> (i32, i32) {
    %c0_i32 = arith.constant 0 : i32
    %c0_i32_0 = arith.constant 0 : i32
    %c0_i32_1 = arith.constant 0 : i32
    return %c0_i32, %c0_i32_0 : i32, i32
  }
  func.func @transform_15(%arg0: i32, %arg1: i32) -> (i32, i32) {
    %c0_i32 = arith.constant 0 : i32
    %c0_i32_0 = arith.constant 0 : i32
    %c0_i32_1 = arith.constant 0 : i32
    return %c0_i32, %c0_i32_0 : i32, i32
  }
  func.func @transform_16(%arg0: i32, %arg1: i32) -> (i32, i32) {
    %c0_i32 = arith.constant 0 : i32
    %c0_i32_0 = arith.constant 0 : i32
    %c0_i32_1 = arith.constant 0 : i32
    return %c0_i32, %c0_i32_0 : i32, i32
  }
  func.func @transform_17(%arg0: i32, %arg1: i32) -> (i32, i32) {
    %c0_i32 = arith.constant 0 : i32
    %c0_i32_0 = arith.constant 0 : i32
    %c0_i32_1 = arith.constant 0 : i32
    return %c0_i32, %c0_i32_0 : i32, i32
  }
  func.func @transform_18(%arg0: i32, %arg1: i32) -> (i32, i32) {
    %c0_i32 = arith.constant 0 : i32
    %c0_i32_0 = arith.constant 0 : i32
    %c0_i32_1 = arith.constant 0 : i32
    return %c0_i32, %c0_i32_0 : i32, i32
  }
  func.func @transform_19(%arg0: i32, %arg1: i32) -> (i32, i32) {
    %c0_i32 = arith.constant 0 : i32
    %c0_i32_0 = arith.constant 0 : i32
    %c0_i32_1 = arith.constant 0 : i32
    return %c0_i32, %c0_i32_0 : i32, i32
  }
  func.func @transform_20(%arg0: i32, %arg1: i32) -> (i32, i32) {
    %c0_i32 = arith.constant 0 : i32
    %c0_i32_0 = arith.constant 0 : i32
    %c0_i32_1 = arith.constant 0 : i32
    return %c0_i32, %c0_i32_0 : i32, i32
  }
  func.func @transform_21(%arg0: i32, %arg1: i32) -> (i32, i32) {
    %c0_i32 = arith.constant 0 : i32
    %c0_i32_0 = arith.constant 0 : i32
    %c0_i32_1 = arith.constant 0 : i32
    return %c0_i32, %c0_i32_0 : i32, i32
  }
  func.func @transform_22(%arg0: i32, %arg1: i32) -> (i32, i32, i32) {
    %c0_i32 = arith.constant 0 : i32
    %c0_i32_0 = arith.constant 0 : i32
    return %arg0, %arg1, %c0_i32 : i32, i32, i32
  }
}

</mosaic_0001>

<llo_original>
// kernel: tpu_custom_call.1
$region0: #{tpu_custom_call.1}
  #allocation0 [shape = 'u32[]', space=smem, size = 0x4, offset = 0x4, fixed_abs, tag = 'smem constant byte address 0x4 - core index']
  #allocation1 [shape = 'u32[72,128]{1,0:T(1,128)}', space=vmem, size = 0x9000, scoped, tag = 'internal scratch']
  #allocation2 [shape = 'bf16[2,8,16]{2,1,0:T(8,128)(2,1)}', space=vmem, size = 0x1000, scoped, tag = 'scratch operand']
  #allocation3 [shape = 'bf16[2,8,16]{2,1,0:T(8,128)(2,1)}', space=vmem, size = 0x1000, scoped, tag = 'scratch operand']
  %s0 = inlined_call_operand.vmem [shape: f32[2,8,32], index: 0, kind: input, shape index: {}]
  %s1 = inlined_call_operand.hbm [shape: f32[2,1,8], index: 1, kind: input, shape index: {}]
  %s2 = inlined_call_operand.vmem [shape: f32[1,32], index: 2, kind: input, shape index: {}]
  %s3 = inlined_call_operand.hbm [shape: f32[1,32], index: 3, kind: input, shape index: {}]
  %s4 = inlined_call_operand.hbm [shape: f32[1,32], index: 4, kind: input, shape index: {}]
  %s5 = inlined_call_operand.hbm [shape: f32[1,32], index: 5, kind: input, shape index: {}]
  %s6 = inlined_call_operand.vmem [shape: bf16[32,32], index: 6, kind: input, shape index: {}]
  %s7 = inlined_call_operand.hbm [shape: f32[1,32], index: 7, kind: input, shape index: {}]
  %s8 = inlined_call_operand.vmem [shape: bf16[32,32], index: 8, kind: input, shape index: {}]
  %s9 = inlined_call_operand.hbm [shape: f32[1,32], index: 9, kind: input, shape index: {}]
  %s10 = inlined_call_operand.hbm [shape: bf16[32,32], index: 10, kind: input, shape index: {}]
  %s11 = inlined_call_operand.hbm [shape: f32[1,32], index: 11, kind: input, shape index: {}]
  %s12 = inlined_call_operand.hbm [shape: bf16[32,32], index: 12, kind: input, shape index: {}]
  %s13 = inlined_call_operand.hbm [shape: f32[1,32], index: 13, kind: input, shape index: {}]
  %s14 = inlined_call_operand.hbm [shape: f32[1,32], index: 14, kind: input, shape index: {}]
  %s15 = inlined_call_operand.hbm [shape: f32[1,32], index: 15, kind: input, shape index: {}]
  %s16 = inlined_call_operand.hbm [shape: bf16[32,64], index: 16, kind: input, shape index: {}]
  %s17 = inlined_call_operand.hbm [shape: f32[1,64], index: 17, kind: input, shape index: {}]
  %s18 = inlined_call_operand.vmem [shape: bf16[64,32], index: 18, kind: input, shape index: {}]
  %s19 = inlined_call_operand.vmem [shape: f32[1,32], index: 19, kind: input, shape index: {}]
  %s20 = inlined_call_operand.vmem [shape: f32[1,32], index: 20, kind: input, shape index: {}]
  %s21 = inlined_call_operand.vmem [shape: f32[1,32], index: 21, kind: input, shape index: {}]
  %s22 = inlined_call_operand.hbm [shape: f32[2,8,32], index: 22, kind: output, shape index: {}]
  %s23 = sld [smem:[#allocation0]]
  $region181: #{tpu_custom_call.1} parent=0
    _
  %s25 = ssub.s32 1, %s23
  %s26 = scalar_select 0, %s25, %s23
  $region1: #{tpu_custom_call.1} parent=0
    #allocation4 [shape = 'u8[1024]{0}', space=vmem, size = 0x400, scoped, tag = 'input window, operand 1']
    #allocation5 [shape = 's32[2]{0}', space=sflag, size = 0x8, scoped, tag = 'scoped memory for tpu_custom_call.1']
    #allocation6 [shape = 's32[2]{0}', space=sflag, size = 0x8, scoped, tag = 'scoped memory for tpu_custom_call.1']
    #allocation7 [shape = 'u8[512]{0}', space=vmem, size = 0x400, scoped, tag = 'input window, operand 3, single buffered']
    #allocation8 [shape = 's32[1]{0}', space=sflag, size = 0x4, scoped, tag = 'scoped memory for tpu_custom_call.1']
    #allocation9 [shape = 'u8[512]{0}', space=vmem, size = 0x400, scoped, tag = 'input window, operand 4, single buffered']
    #allocation10 [shape = 'u8[512]{0}', space=vmem, size = 0x400, scoped, tag = 'input window, operand 5, single buffered']
    #allocation11 [shape = 's32[1]{0}', space=sflag, size = 0x4, scoped, tag = 'scoped memory for tpu_custom_call.1']
    #allocation12 [shape = 'u8[512]{0}', space=vmem, size = 0x400, scoped, tag = 'input window, operand 7, single buffered']
    #allocation13 [shape = 'u8[512]{0}', space=vmem, size = 0x400, scoped, tag = 'input window, operand 9, single buffered']
    #allocation14 [shape = 's32[1]{0}', space=sflag, size = 0x4, scoped, tag = 'scoped memory for tpu_custom_call.1']
    #allocation15 [shape = 'u8[8192]{0}', space=vmem, size = 0x2000, scoped, tag = 'input window, operand 10, single buffered']
    #allocation16 [shape = 'u8[512]{0}', space=vmem, size = 0x400, scoped, tag = 'input window, operand 11, single buffered']
    #allocation17 [shape = 's32[1]{0}', space=sflag, size = 0x4, scoped, tag = 'scoped memory for tpu_custom_call.1']
    #allocation18 [shape = 'u8[8192]{0}', space=vmem, size = 0x2000, scoped, tag = 'input window, operand 12, single buffered']
    #allocation19 [shape = 'u8[512]{0}', space=vmem, size = 0x400, scoped, tag = 'input window, operand 13, single buffered']
    #allocation20 [shape = 's32[1]{0}', space=sflag, size = 0x4, scoped, tag = 'scoped memory for tpu_custom_call.1']
    #allocation21 [shape = 'u8[512]{0}', space=vmem, size = 0x400, scoped, tag = 'input window, operand 14, single buffered']
    #allocation22 [shape = 'u8[512]{0}', space=vmem, size = 0x400, scoped, tag = 'input window, operand 15, single buffered']
    #allocation23 [shape = 's32[1]{0}', space=sflag, size = 0x4, scoped, tag = 'scoped memory for tpu_custom_call.1']
    #allocation24 [shape = 'u8[8192]{0}', space=vmem, size = 0x2000, scoped, tag = 'input window, operand 16, single buffered']
    #allocation25 [shape = 'u8[512]{0}', space=vmem, size = 0x400, scoped, tag = 'input window, operand 17, single buffered']
    #allocation26 [shape = 's32[1]{0}', space=sflag, size = 0x4, scoped, tag = 'scoped memory for tpu_custom_call.1']
    #allocation27 [shape = 'u8[8192]{0}', space=vmem, size = 0x2000, scoped, tag = 'output window, operand 0']
    %27 = vsyncpa [#allocation5], 0
    %s28 = scalar_lea.sflag [#allocation5], 1
    %29 = vsyncpa %s28, 0
    %30 = vsyncpa [#allocation8], 0
    %31 = vsyncpa [#allocation11], 0
    %32 = vsyncpa [#allocation14], 0
    %33 = vsyncpa [#allocation17], 0
    %34 = vsyncpa [#allocation20], 0
    %35 = vsyncpa [#allocation23], 0
    %36 = vsyncpa [#allocation26], 0
    %37 = vsyncpa [#allocation6], 0
    %s38 = scalar_lea.sflag [#allocation6], 1
    %39 = vsyncpa %s38, 0
    loop: start=0, step=1, limit=4
    $region2: #{tpu_custom_call.1} parent=1 // loop_pre_header
      _
    $region3: #{tpu_custom_call.1} parent=1 // loop_header
      %s41 = sphi 0, %s45
      %p42 = scmp.ge.s32.totalorder %s41, 4
      %s48 = sphi 0, %s60
      %s49 = sphi 0, %s56
      %s50 = sphi 0, %s48
      %s51 = sphi 0, %s49
      %s52 = sphi 0, %s50
      %s53 = sphi 0, %s51
      %s63 = sphi 0, %s65
      %s66 = sphi 0, %s63
      %s67 = sphi 0, %s66
      %s83 = sphi 0, %s67
      %s89 = sphi 0, %s91
      %s92 = sphi 0, %s89
      %s93 = sphi 0, %s92
      %s109 = sphi 0, %s93
      %s113 = sphi 0, %s113
      %s115 = sphi 0, %s113
      %s116 = sphi 0, %s115
      %s130 = sphi 0, %s116
      %s134 = sphi 0, %s134
      %s136 = sphi 0, %s134
      %s137 = sphi 0, %s136
      %s151 = sphi 0, %s137
      %s155 = sphi 0, %s155
      %s157 = sphi 0, %s155
      %s158 = sphi 0, %s157
      %s172 = sphi 0, %s158
      %s176 = sphi 0, %s176
      %s178 = sphi 0, %s176
      %s179 = sphi 0, %s178
      %s193 = sphi 0, %s179
      %s197 = sphi 0, %s197
      %s199 = sphi 0, %s197
      %s200 = sphi 0, %s199
      %s214 = sphi 0, %s200
      %s218 = sphi 0, %s218
      %s220 = sphi 0, %s218
      %s221 = sphi 0, %s220
      %s235 = sphi 0, %s221
      %s239 = sphi 0, %s239
      %s241 = sphi 0, %s239
      %s242 = sphi 0, %s241
      %s256 = sphi 0, %s242
      %s260 = sphi 0, %s260
      %s262 = sphi 0, %s260
      %s263 = sphi 0, %s262
      %s277 = sphi 0, %s263
      %s281 = sphi 0, %s281
      %s283 = sphi 0, %s281
      %s284 = sphi 0, %s283
      %s298 = sphi 0, %s284
      %s302 = sphi 0, %s302
      %s304 = sphi 0, %s302
      %s305 = sphi 0, %s304
      %s319 = sphi 0, %s305
      %s323 = sphi 0, %s323
      %s325 = sphi 0, %s323
      %s326 = sphi 0, %s325
      %s340 = sphi 0, %s326
      %s344 = sphi 0, %s344
      %s346 = sphi 0, %s344
      %s347 = sphi 0, %s346
      %s361 = sphi 0, %s347
      %s365 = sphi 0, %s365
      %s367 = sphi 0, %s365
      %s368 = sphi 0, %s367
      %s382 = sphi 0, %s368
      %s386 = sphi 0, %s386
      %s388 = sphi 0, %s386
      %s389 = sphi 0, %s388
      %s403 = sphi 0, %s389
      %s407 = sphi 0, %s407
      %s409 = sphi 0, %s407
      %s410 = sphi 0, %s409
      %s424 = sphi 0, %s410
      %s428 = sphi 0, %s428
      %s430 = sphi 0, %s428
      %s431 = sphi 0, %s430
      %s445 = sphi 0, %s431
      %s449 = sphi 0, %s449
      %s451 = sphi 0, %s449
      %s452 = sphi 0, %s451
      %s466 = sphi 0, %s452
      %s470 = sphi 0, %s470
      %s472 = sphi 0, %s470
      %s473 = sphi 0, %s472
      %s487 = sphi 0, %s473
      %s491 = sphi 0, %s491
      %s493 = sphi 0, %s491
      %s494 = sphi 0, %s493
      %s508 = sphi 0, %s494
      %s512 = sphi 0, %s512
      %s514 = sphi 0, %s512
      %s515 = sphi 0, %s514
      %s529 = sphi 0, %s515
      %s537 = sphi 0, %s539
      %s540 = sphi 0, %s537
      %s541 = sphi 0, %s540
      %s557 = sphi 0, %s541
    $region4: #{tpu_custom_call.1} parent=1 // loop_header_branch
      %44 = sbr.rel (%p42) target = $region8
    $region5: #{tpu_custom_call.1} parent=1 // loop_body
      %s46 = ssub.s32 %s41, 1
      %s47 = ssub.s32 %s41, 2
      %s54 = sadd.s32 1, %s49
      %p55 = scmp.ge.s32.totalorder %s54, 1
      %s56 = scalar_select %p55, 0, %s54
      %s57 = sadd.s32 1, %s48
      %s58 = scalar_select %p55, %s57, %s48
      %p59 = scmp.ge.s32.totalorder %s58, 2
      %s60 = scalar_select %p59, 0, %s58
      %s61 = ssub.s32 %s48, %s60
      %p62 = scmp.eq.s32.totalorder %s61, 0
      %s64 = sadd.s32 %s63, 1
      %s65 = scalar_select %p62, %s63, %s64
      %p68 = pneg %p62
      %p69 = scmp.eq.s32.totalorder %s41, 1
      %p70 = por %p68, %p69
      %p71 = scmp.ne.s32.totalorder %s63, %s66
      %p72 = scmp.eq.s32.totalorder %s41, 0
      %p73 = por %p71, %p72
      %p74 = scmp.ne.s32.totalorder %s63, %s66
      %p75 = scmp.eq.s32.totalorder %s46, 1
      %p76 = por %p74, %p75
      %p77 = scmp.ne.s32.totalorder %s66, %s67
      %p78 = scmp.eq.s32.totalorder %s46, 0
      %p79 = por %p77, %p78
      %p80 = scmp.ne.s32.totalorder %s66, %s67
      %p81 = scmp.eq.s32.totalorder %s47, 1
      %p82 = por %p80, %p81
      %p84 = scmp.ne.s32.totalorder %s67, %s83
      %p85 = scmp.eq.s32.totalorder %s47, 0
      %p86 = por %p84, %p85
      %s87 = ssub.s32 %s48, %s60
      %p88 = scmp.eq.s32.totalorder %s87, 0
      %s90 = sadd.s32 %s89, 1
      %s91 = scalar_select %p88, %s89, %s90
      %p94 = pneg %p88
      %p95 = scmp.eq.s32.totalorder %s41, 1
      %p96 = por %p94, %p95
      %p97 = scmp.ne.s32.totalorder %s89, %s92
      %p98 = scmp.eq.s32.totalorder %s41, 0
      %p99 = por %p97, %p98
      %p100 = scmp.ne.s32.totalorder %s89, %s92
      %p101 = scmp.eq.s32.totalorder %s46, 1
      %p102 = por %p100, %p101
      %p103 = scmp.ne.s32.totalorder %s92, %s93
      %p104 = scmp.eq.s32.totalorder %s46, 0
      %p105 = por %p103, %p104
      %p106 = scmp.ne.s32.totalorder %s92, %s93
      %p107 = scmp.eq.s32.totalorder %s47, 1
      %p108 = por %p106, %p107
      %p110 = scmp.ne.s32.totalorder %s93, %s109
      %p111 = scmp.eq.s32.totalorder %s47, 0
      %p112 = por %p110, %p111
      %s114 = sadd.s32 %s113, 1
      %p117 = scmp.eq.s32.totalorder %s41, 1
      %p118 = scmp.ne.s32.totalorder %s113, %s115
      %p119 = scmp.eq.s32.totalorder %s41, 0
      %p120 = por %p118, %p119
      %p121 = scmp.ne.s32.totalorder %s113, %s115
      %p122 = scmp.eq.s32.totalorder %s46, 1
      %p123 = por %p121, %p122
      %p124 = scmp.ne.s32.totalorder %s115, %s116
      %p125 = scmp.eq.s32.totalorder %s46, 0
      %p126 = por %p124, %p125
      %p127 = scmp.ne.s32.totalorder %s115, %s116
      %p128 = scmp.eq.s32.totalorder %s47, 1
      %p129 = por %p127, %p128
      %p131 = scmp.ne.s32.totalorder %s116, %s130
      %p132 = scmp.eq.s32.totalorder %s47, 0
      %p133 = por %p131, %p132
      %s135 = sadd.s32 %s134, 1
      %p138 = scmp.eq.s32.totalorder %s41, 1
      %p139 = scmp.ne.s32.totalorder %s134, %s136
      %p140 = scmp.eq.s32.totalorder %s41, 0
      %p141 = por %p139, %p140
      %p142 = scmp.ne.s32.totalorder %s134, %s136
      %p143 = scmp.eq.s32.totalorder %s46, 1
      %p144 = por %p142, %p143
      %p145 = scmp.ne.s32.totalorder %s136, %s137
      %p146 = scmp.eq.s32.totalorder %s46, 0
      %p147 = por %p145, %p146
      %p148 = scmp.ne.s32.totalorder %s136, %s137
      %p149 = scmp.eq.s32.totalorder %s47, 1
      %p150 = por %p148, %p149
      %p152 = scmp.ne.s32.totalorder %s137, %s151
      %p153 = scmp.eq.s32.totalorder %s47, 0
      %p154 = por %p152, %p153
      %s156 = sadd.s32 %s155, 1
      %p159 = scmp.eq.s32.totalorder %s41, 1
      %p160 = scmp.ne.s32.totalorder %s155, %s157
      %p161 = scmp.eq.s32.totalorder %s41, 0
      %p162 = por %p160, %p161
      %p163 = scmp.ne.s32.totalorder %s155, %s157
      %p164 = scmp.eq.s32.totalorder %s46, 1
      %p165 = por %p163, %p164
      %p166 = scmp.ne.s32.totalorder %s157, %s158
      %p167 = scmp.eq.s32.totalorder %s46, 0
      %p168 = por %p166, %p167
      %p169 = scmp.ne.s32.totalorder %s157, %s158
      %p170 = scmp.eq.s32.totalorder %s47, 1
      %p171 = por %p169, %p170
      %p173 = scmp.ne.s32.totalorder %s158, %s172
      %p174 = scmp.eq.s32.totalorder %s47, 0
      %p175 = por %p173, %p174
      %s177 = sadd.s32 %s176, 1
      %p180 = scmp.eq.s32.totalorder %s41, 1
      %p181 = scmp.ne.s32.totalorder %s176, %s178
      %p182 = scmp.eq.s32.totalorder %s41, 0
      %p183 = por %p181, %p182
      %p184 = scmp.ne.s32.totalorder %s176, %s178
      %p185 = scmp.eq.s32.totalorder %s46, 1
      %p186 = por %p184, %p185
      %p187 = scmp.ne.s32.totalorder %s178, %s179
      %p188 = scmp.eq.s32.totalorder %s46, 0
      %p189 = por %p187, %p188
      %p190 = scmp.ne.s32.totalorder %s178, %s179
      %p191 = scmp.eq.s32.totalorder %s47, 1
      %p192 = por %p190, %p191
      %p194 = scmp.ne.s32.totalorder %s179, %s193
      %p195 = scmp.eq.s32.totalorder %s47, 0
      %p196 = por %p194, %p195
      %s198 = sadd.s32 %s197, 1
      %p201 = scmp.eq.s32.totalorder %s41, 1
      %p202 = scmp.ne.s32.totalorder %s197, %s199
      %p203 = scmp.eq.s32.totalorder %s41, 0
      %p204 = por %p202, %p203
      %p205 = scmp.ne.s32.totalorder %s197, %s199
      %p206 = scmp.eq.s32.totalorder %s46, 1
      %p207 = por %p205, %p206
      %p208 = scmp.ne.s32.totalorder %s199, %s200
      %p209 = scmp.eq.s32.totalorder %s46, 0
      %p210 = por %p208, %p209
      %p211 = scmp.ne.s32.totalorder %s199, %s200
      %p212 = scmp.eq.s32.totalorder %s47, 1
      %p213 = por %p211, %p212
      %p215 = scmp.ne.s32.totalorder %s200, %s214
      %p216 = scmp.eq.s32.totalorder %s47, 0
      %p217 = por %p215, %p216
      %s219 = sadd.s32 %s218, 1
      %p222 = scmp.eq.s32.totalorder %s41, 1
      %p223 = scmp.ne.s32.totalorder %s218, %s220
      %p224 = scmp.eq.s32.totalorder %s41, 0
      %p225 = por %p223, %p224
      %p226 = scmp.ne.s32.totalorder %s218, %s220
      %p227 = scmp.eq.s32.totalorder %s46, 1
      %p228 = por %p226, %p227
      %p229 = scmp.ne.s32.totalorder %s220, %s221
      %p230 = scmp.eq.s32.totalorder %s46, 0
      %p231 = por %p229, %p230
      %p232 = scmp.ne.s32.totalorder %s220, %s221
      %p233 = scmp.eq.s32.totalorder %s47, 1
      %p234 = por %p232, %p233
      %p236 = scmp.ne.s32.totalorder %s221, %s235
      %p237 = scmp.eq.s32.totalorder %s47, 0
      %p238 = por %p236, %p237
      %s240 = sadd.s32 %s239, 1
      %p243 = scmp.eq.s32.totalorder %s41, 1
      %p244 = scmp.ne.s32.totalorder %s239, %s241
      %p245 = scmp.eq.s32.totalorder %s41, 0
      %p246 = por %p244, %p245
      %p247 = scmp.ne.s32.totalorder %s239, %s241
      %p248 = scmp.eq.s32.totalorder %s46, 1
      %p249 = por %p247, %p248
      %p250 = scmp.ne.s32.totalorder %s241, %s242
      %p251 = scmp.eq.s32.totalorder %s46, 0
      %p252 = por %p250, %p251
      %p253 = scmp.ne.s32.totalorder %s241, %s242
      %p254 = scmp.eq.s32.totalorder %s47, 1
      %p255 = por %p253, %p254
      %p257 = scmp.ne.s32.totalorder %s242, %s256
      %p258 = scmp.eq.s32.totalorder %s47, 0
      %p259 = por %p257, %p258
      %s261 = sadd.s32 %s260, 1
      %p264 = scmp.eq.s32.totalorder %s41, 1
      %p265 = scmp.ne.s32.totalorder %s260, %s262
      %p266 = scmp.eq.s32.totalorder %s41, 0
      %p267 = por %p265, %p266
      %p268 = scmp.ne.s32.totalorder %s260, %s262
      %p269 = scmp.eq.s32.totalorder %s46, 1
      %p270 = por %p268, %p269
      %p271 = scmp.ne.s32.totalorder %s262, %s263
      %p272 = scmp.eq.s32.totalorder %s46, 0
      %p273 = por %p271, %p272
      %p274 = scmp.ne.s32.totalorder %s262, %s263
      %p275 = scmp.eq.s32.totalorder %s47, 1
      %p276 = por %p274, %p275
      %p278 = scmp.ne.s32.totalorder %s263, %s277
      %p279 = scmp.eq.s32.totalorder %s47, 0
      %p280 = por %p278, %p279
      %s282 = sadd.s32 %s281, 1
      %p285 = scmp.eq.s32.totalorder %s41, 1
      %p286 = scmp.ne.s32.totalorder %s281, %s283
      %p287 = scmp.eq.s32.totalorder %s41, 0
      %p288 = por %p286, %p287
      %p289 = scmp.ne.s32.totalorder %s281, %s283
      %p290 = scmp.eq.s32.totalorder %s46, 1
      %p291 = por %p289, %p290
      %p292 = scmp.ne.s32.totalorder %s283, %s284
      %p293 = scmp.eq.s32.totalorder %s46, 0
      %p294 = por %p292, %p293
      %p295 = scmp.ne.s32.totalorder %s283, %s284
      %p296 = scmp.eq.s32.totalorder %s47, 1
      %p297 = por %p295, %p296
      %p299 = scmp.ne.s32.totalorder %s284, %s298
      %p300 = scmp.eq.s32.totalorder %s47, 0
      %p301 = por %p299, %p300
      %s303 = sadd.s32 %s302, 1
      %p306 = scmp.eq.s32.totalorder %s41, 1
      %p307 = scmp.ne.s32.totalorder %s302, %s304
      %p308 = scmp.eq.s32.totalorder %s41, 0
      %p309 = por %p307, %p308
      %p310 = scmp.ne.s32.totalorder %s302, %s304
      %p311 = scmp.eq.s32.totalorder %s46, 1
      %p312 = por %p310, %p311
      %p313 = scmp.ne.s32.totalorder %s304, %s305
      %p314 = scmp.eq.s32.totalorder %s46, 0
      %p315 = por %p313, %p314
      %p316 = scmp.ne.s32.totalorder %s304, %s305
      %p317 = scmp.eq.s32.totalorder %s47, 1
      %p318 = por %p316, %p317
      %p320 = scmp.ne.s32.totalorder %s305, %s319
      %p321 = scmp.eq.s32.totalorder %s47, 0
      %p322 = por %p320, %p321
      %s324 = sadd.s32 %s323, 1
      %p327 = scmp.eq.s32.totalorder %s41, 1
      %p328 = scmp.ne.s32.totalorder %s323, %s325
      %p329 = scmp.eq.s32.totalorder %s41, 0
      %p330 = por %p328, %p329
      %p331 = scmp.ne.s32.totalorder %s323, %s325
      %p332 = scmp.eq.s32.totalorder %s46, 1
      %p333 = por %p331, %p332
      %p334 = scmp.ne.s32.totalorder %s325, %s326
      %p335 = scmp.eq.s32.totalorder %s46, 0
      %p336 = por %p334, %p335
      %p337 = scmp.ne.s32.totalorder %s325, %s326
      %p338 = scmp.eq.s32.totalorder %s47, 1
      %p339 = por %p337, %p338
      %p341 = scmp.ne.s32.totalorder %s326, %s340
      %p342 = scmp.eq.s32.totalorder %s47, 0
      %p343 = por %p341, %p342
      %s345 = sadd.s32 %s344, 1
      %p348 = scmp.eq.s32.totalorder %s41, 1
      %p349 = scmp.ne.s32.totalorder %s344, %s346
      %p350 = scmp.eq.s32.totalorder %s41, 0
      %p351 = por %p349, %p350
      %p352 = scmp.ne.s32.totalorder %s344, %s346
      %p353 = scmp.eq.s32.totalorder %s46, 1
      %p354 = por %p352, %p353
      %p355 = scmp.ne.s32.totalorder %s346, %s347
      %p356 = scmp.eq.s32.totalorder %s46, 0
      %p357 = por %p355, %p356
      %p358 = scmp.ne.s32.totalorder %s346, %s347
      %p359 = scmp.eq.s32.totalorder %s47, 1
      %p360 = por %p358, %p359
      %p362 = scmp.ne.s32.totalorder %s347, %s361
      %p363 = scmp.eq.s32.totalorder %s47, 0
      %p364 = por %p362, %p363
      %s366 = sadd.s32 %s365, 1
      %p369 = scmp.eq.s32.totalorder %s41, 1
      %p370 = scmp.ne.s32.totalorder %s365, %s367
      %p371 = scmp.eq.s32.totalorder %s41, 0
      %p372 = por %p370, %p371
      %p373 = scmp.ne.s32.totalorder %s365, %s367
      %p374 = scmp.eq.s32.totalorder %s46, 1
      %p375 = por %p373, %p374
      %p376 = scmp.ne.s32.totalorder %s367, %s368
      %p377 = scmp.eq.s32.totalorder %s46, 0
      %p378 = por %p376, %p377
      %p379 = scmp.ne.s32.totalorder %s367, %s368
      %p380 = scmp.eq.s32.totalorder %s47, 1
      %p381 = por %p379, %p380
      %p383 = scmp.ne.s32.totalorder %s368, %s382
      %p384 = scmp.eq.s32.totalorder %s47, 0
      %p385 = por %p383, %p384
      %s387 = sadd.s32 %s386, 1
      %p390 = scmp.eq.s32.totalorder %s41, 1
      %p391 = scmp.ne.s32.totalorder %s386, %s388
      %p392 = scmp.eq.s32.totalorder %s41, 0
      %p393 = por %p391, %p392
      %p394 = scmp.ne.s32.totalorder %s386, %s388
      %p395 = scmp.eq.s32.totalorder %s46, 1
      %p396 = por %p394, %p395
      %p397 = scmp.ne.s32.totalorder %s388, %s389
      %p398 = scmp.eq.s32.totalorder %s46, 0
      %p399 = por %p397, %p398
      %p400 = scmp.ne.s32.totalorder %s388, %s389
      %p401 = scmp.eq.s32.totalorder %s47, 1
      %p402 = por %p400, %p401
      %p404 = scmp.ne.s32.totalorder %s389, %s403
      %p405 = scmp.eq.s32.totalorder %s47, 0
      %p406 = por %p404, %p405
      %s408 = sadd.s32 %s407, 1
      %p411 = scmp.eq.s32.totalorder %s41, 1
      %p412 = scmp.ne.s32.totalorder %s407, %s409
      %p413 = scmp.eq.s32.totalorder %s41, 0
      %p414 = por %p412, %p413
      %p415 = scmp.ne.s32.totalorder %s407, %s409
      %p416 = scmp.eq.s32.totalorder %s46, 1
      %p417 = por %p415, %p416
      %p418 = scmp.ne.s32.totalorder %s409, %s410
      %p419 = scmp.eq.s32.totalorder %s46, 0
      %p420 = por %p418, %p419
      %p421 = scmp.ne.s32.totalorder %s409, %s410
      %p422 = scmp.eq.s32.totalorder %s47, 1
      %p423 = por %p421, %p422
      %p425 = scmp.ne.s32.totalorder %s410, %s424
      %p426 = scmp.eq.s32.totalorder %s47, 0
      %p427 = por %p425, %p426
      %s429 = sadd.s32 %s428, 1
      %p432 = scmp.eq.s32.totalorder %s41, 1
      %p433 = scmp.ne.s32.totalorder %s428, %s430
      %p434 = scmp.eq.s32.totalorder %s41, 0
      %p435 = por %p433, %p434
      %p436 = scmp.ne.s32.totalorder %s428, %s430
      %p437 = scmp.eq.s32.totalorder %s46, 1
      %p438 = por %p436, %p437
      %p439 = scmp.ne.s32.totalorder %s430, %s431
      %p440 = scmp.eq.s32.totalorder %s46, 0
      %p441 = por %p439, %p440
      %p442 = scmp.ne.s32.totalorder %s430, %s431
      %p443 = scmp.eq.s32.totalorder %s47, 1
      %p444 = por %p442, %p443
      %p446 = scmp.ne.s32.totalorder %s431, %s445
      %p447 = scmp.eq.s32.totalorder %s47, 0
      %p448 = por %p446, %p447
      %s450 = sadd.s32 %s449, 1
      %p453 = scmp.eq.s32.totalorder %s41, 1
      %p454 = scmp.ne.s32.totalorder %s449, %s451
      %p455 = scmp.eq.s32.totalorder %s41, 0
      %p456 = por %p454, %p455
      %p457 = scmp.ne.s32.totalorder %s449, %s451
      %p458 = scmp.eq.s32.totalorder %s46, 1
      %p459 = por %p457, %p458
      %p460 = scmp.ne.s32.totalorder %s451, %s452
      %p461 = scmp.eq.s32.totalorder %s46, 0
      %p462 = por %p460, %p461
      %p463 = scmp.ne.s32.totalorder %s451, %s452
      %p464 = scmp.eq.s32.totalorder %s47, 1
      %p465 = por %p463, %p464
      %p467 = scmp.ne.s32.totalorder %s452, %s466
      %p468 = scmp.eq.s32.totalorder %s47, 0
      %p469 = por %p467, %p468
      %s471 = sadd.s32 %s470, 1
      %p474 = scmp.eq.s32.totalorder %s41, 1
      %p475 = scmp.ne.s32.totalorder %s470, %s472
      %p476 = scmp.eq.s32.totalorder %s41, 0
      %p477 = por %p475, %p476
      %p478 = scmp.ne.s32.totalorder %s470, %s472
      %p479 = scmp.eq.s32.totalorder %s46, 1
      %p480 = por %p478, %p479
      %p481 = scmp.ne.s32.totalorder %s472, %s473
      %p482 = scmp.eq.s32.totalorder %s46, 0
      %p483 = por %p481, %p482
      %p484 = scmp.ne.s32.totalorder %s472, %s473
      %p485 = scmp.eq.s32.totalorder %s47, 1
      %p486 = por %p484, %p485
      %p488 = scmp.ne.s32.totalorder %s473, %s487
      %p489 = scmp.eq.s32.totalorder %s47, 0
      %p490 = por %p488, %p489
      %s492 = sadd.s32 %s491, 1
      %p495 = scmp.eq.s32.totalorder %s41, 1
      %p496 = scmp.ne.s32.totalorder %s491, %s493
      %p497 = scmp.eq.s32.totalorder %s41, 0
      %p498 = por %p496, %p497
      %p499 = scmp.ne.s32.totalorder %s491, %s493
      %p500 = scmp.eq.s32.totalorder %s46, 1
      %p501 = por %p499, %p500
      %p502 = scmp.ne.s32.totalorder %s493, %s494
      %p503 = scmp.eq.s32.totalorder %s46, 0
      %p504 = por %p502, %p503
      %p505 = scmp.ne.s32.totalorder %s493, %s494
      %p506 = scmp.eq.s32.totalorder %s47, 1
      %p507 = por %p505, %p506
      %p509 = scmp.ne.s32.totalorder %s494, %s508
      %p510 = scmp.eq.s32.totalorder %s47, 0
      %p511 = por %p509, %p510
      %s513 = sadd.s32 %s512, 1
      %p516 = scmp.eq.s32.totalorder %s41, 1
      %p517 = scmp.ne.s32.totalorder %s512, %s514
      %p518 = scmp.eq.s32.totalorder %s41, 0
      %p519 = por %p517, %p518
      %p520 = scmp.ne.s32.totalorder %s512, %s514
      %p521 = scmp.eq.s32.totalorder %s46, 1
      %p522 = por %p520, %p521
      %p523 = scmp.ne.s32.totalorder %s514, %s515
      %p524 = scmp.eq.s32.totalorder %s46, 0
      %p525 = por %p523, %p524
      %p526 = scmp.ne.s32.totalorder %s514, %s515
      %p527 = scmp.eq.s32.totalorder %s47, 1
      %p528 = por %p526, %p527
      %p530 = scmp.ne.s32.totalorder %s515, %s529
      %p531 = scmp.eq.s32.totalorder %s47, 0
      %p532 = por %p530, %p531
      %s533 = ssub.s32 %s48, %s60
      %s534 = ssub.s32 %s49, %s56
      %s535 = sor.u32 %s533, %s534
      %p536 = scmp.eq.s32.totalorder %s535, 0
      %s538 = sadd.s32 %s537, 1
      %s539 = scalar_select %p536, %s537, %s538
      %p542 = pneg %p536
      %p543 = scmp.eq.s32.totalorder %s41, 1
      %p544 = por %p542, %p543
      %p545 = scmp.ne.s32.totalorder %s537, %s540
      %p546 = scmp.eq.s32.totalorder %s41, 0
      %p547 = por %p545, %p546
      %p548 = scmp.ne.s32.totalorder %s537, %s540
      %p549 = scmp.eq.s32.totalorder %s46, 1
      %p550 = por %p548, %p549
      %p551 = scmp.ne.s32.totalorder %s540, %s541
      %p552 = scmp.eq.s32.totalorder %s46, 0
      %p553 = por %p551, %p552
      %p554 = scmp.ne.s32.totalorder %s540, %s541
      %p555 = scmp.eq.s32.totalorder %s47, 1
      %p556 = por %p554, %p555
      %p558 = scmp.ne.s32.totalorder %s541, %s557
      %p559 = scmp.eq.s32.totalorder %s47, 0
      %p560 = por %p558, %p559
      %p561 = scmp.le.s32.totalorder 1, %s41
      %p562 = scmp.lt.s32.totalorder %s41, 3
      %p563 = pnand %p561, %p562
      %p564 = pneg %p563
      // Predicated region
      $region9: #{tpu_custom_call.1} parent=5 // pred_check
        _
      $region10: #{tpu_custom_call.1} parent=5 // pred_check_branch
        %566 = sbr.rel (%p563) target = $region12
      $region11: #{tpu_custom_call.1} parent=5 // pred_region
        %s567 = ssub.s32 %s41, 1
        // Predicated region
        $region13: #{tpu_custom_call.1} parent=11 // pred_check
          %p568 = pneg %p126
        $region14: #{tpu_custom_call.1} parent=11 // pred_check_branch
          %570 = sbr.rel (%p568) target = $region16
        $region15: #{tpu_custom_call.1} parent=11 // pred_region
          _
        $region16: #{tpu_custom_call.1} parent=11 // pred_fallthru
          _
        // Predicated region
        $region17: #{tpu_custom_call.1} parent=11 // pred_check
          %p571 = pneg %p147
        $region18: #{tpu_custom_call.1} parent=11 // pred_check_branch
          %573 = sbr.rel (%p571) target = $region20
        $region19: #{tpu_custom_call.1} parent=11 // pred_region
          %575 = vsyncadd [#allocation8], 0
          %s577 = sshll.u32 %s3, 4
          %s578 = int_to_ptr.hbm [resolvable:$true] %s577
          %s579 = sshll.u32 [#allocation7], 4
          %s580 = int_to_ptr.vmem [resolvable:$true] %s579
          %582 = dma.hbm_to_vmem [thread:$0]  %s578, 16, %s580, [#allocation8]
        $region20: #{tpu_custom_call.1} parent=11 // pred_fallthru
          _
        // Predicated region
        $region21: #{tpu_custom_call.1} parent=11 // pred_check
          %p583 = pneg %p168
        $region22: #{tpu_custom_call.1} parent=11 // pred_check_branch
          %585 = sbr.rel (%p583) target = $region24
        $region23: #{tpu_custom_call.1} parent=11 // pred_region
          %587 = vsyncadd [#allocation8], 0
          %s589 = sshll.u32 %s4, 4
          %s590 = int_to_ptr.hbm [resolvable:$true] %s589
          %s591 = sshll.u32 [#allocation9], 4
          %s592 = int_to_ptr.vmem [resolvable:$true] %s591
          %594 = dma.hbm_to_vmem [thread:$0]  %s590, 16, %s592, [#allocation8]
        $region24: #{tpu_custom_call.1} parent=11 // pred_fallthru
          _
        // Predicated region
        $region25: #{tpu_custom_call.1} parent=11 // pred_check
          %p595 = pneg %p189
        $region26: #{tpu_custom_call.1} parent=11 // pred_check_branch
          %597 = sbr.rel (%p595) target = $region28
        $region27: #{tpu_custom_call.1} parent=11 // pred_region
          %599 = vsyncadd [#allocation11], 0
          %s601 = sshll.u32 %s5, 4
          %s602 = int_to_ptr.hbm [resolvable:$true] %s601
          %s603 = sshll.u32 [#allocation10], 4
          %s604 = int_to_ptr.vmem [resolvable:$true] %s603
          %606 = dma.hbm_to_vmem [thread:$0]  %s602, 16, %s604, [#allocation11]
        $region28: #{tpu_custom_call.1} parent=11 // pred_fallthru
          _
        // Predicated region
        $region29: #{tpu_custom_call.1} parent=11 // pred_check
          %p607 = pneg %p210
        $region30: #{tpu_custom_call.1} parent=11 // pred_check_branch
          %609 = sbr.rel (%p607) target = $region32
        $region31: #{tpu_custom_call.1} parent=11 // pred_region
          _
        $region32: #{tpu_custom_call.1} parent=11 // pred_fallthru
          _
        // Predicated region
        $region33: #{tpu_custom_call.1} parent=11 // pred_check
          %p610 = pneg %p231
        $region34: #{tpu_custom_call.1} parent=11 // pred_check_branch
          %612 = sbr.rel (%p610) target = $region36
        $region35: #{tpu_custom_call.1} parent=11 // pred_region
          %614 = vsyncadd [#allocation11], 0
          %s616 = sshll.u32 %s7, 4
          %s617 = int_to_ptr.hbm [resolvable:$true] %s616
          %s618 = sshll.u32 [#allocation12], 4
          %s619 = int_to_ptr.vmem [resolvable:$true] %s618
          %621 = dma.hbm_to_vmem [thread:$0]  %s617, 16, %s619, [#allocation11]
        $region36: #{tpu_custom_call.1} parent=11 // pred_fallthru
          _
        // Predicated region
        $region37: #{tpu_custom_call.1} parent=11 // pred_check
          %p622 = pneg %p252
        $region38: #{tpu_custom_call.1} parent=11 // pred_check_branch
          %624 = sbr.rel (%p622) target = $region40
        $region39: #{tpu_custom_call.1} parent=11 // pred_region
          _
        $region40: #{tpu_custom_call.1} parent=11 // pred_fallthru
          _
        // Predicated region
        $region41: #{tpu_custom_call.1} parent=11 // pred_check
          %p625 = pneg %p273
        $region42: #{tpu_custom_call.1} parent=11 // pred_check_branch
          %627 = sbr.rel (%p625) target = $region44
        $region43: #{tpu_custom_call.1} parent=11 // pred_region
          %629 = vsyncadd [#allocation14], 0
          %s631 = sshll.u32 %s9, 4
          %s632 = int_to_ptr.hbm [resolvable:$true] %s631
          %s633 = sshll.u32 [#allocation13], 4
          %s634 = int_to_ptr.vmem [resolvable:$true] %s633
          %636 = dma.hbm_to_vmem [thread:$0]  %s632, 16, %s634, [#allocation14]
        $region44: #{tpu_custom_call.1} parent=11 // pred_fallthru
          _
        // Predicated region
        $region45: #{tpu_custom_call.1} parent=11 // pred_check
          %p637 = pneg %p294
        $region46: #{tpu_custom_call.1} parent=11 // pred_check_branch
          %639 = sbr.rel (%p637) target = $region48
        $region47: #{tpu_custom_call.1} parent=11 // pred_region
          %641 = vsyncadd [#allocation14], 0
          %s642 = sshll.u32 %s10, 4
          %s643 = int_to_ptr.hbm [resolvable:$true] %s642
          %s644 = sshll.u32 [#allocation15], 4
          %s645 = int_to_ptr.vmem [resolvable:$true] %s644
          %650 = dma.hbm_to_vmem [thread:$0]  %s643, 256, %s645, [#allocation14], 64, 64, 4
        $region48: #{tpu_custom_call.1} parent=11 // pred_fallthru
          _
        // Predicated region
        $region49: #{tpu_custom_call.1} parent=11 // pred_check
          %p651 = pneg %p315
        $region50: #{tpu_custom_call.1} parent=11 // pred_check_branch
          %653 = sbr.rel (%p651) target = $region52
        $region51: #{tpu_custom_call.1} parent=11 // pred_region
          %655 = vsyncadd [#allocation17], 0
          %s657 = sshll.u32 %s11, 4
          %s658 = int_to_ptr.hbm [resolvable:$true] %s657
          %s659 = sshll.u32 [#allocation16], 4
          %s660 = int_to_ptr.vmem [resolvable:$true] %s659
          %662 = dma.hbm_to_vmem [thread:$0]  %s658, 16, %s660, [#allocation17]
        $region52: #{tpu_custom_call.1} parent=11 // pred_fallthru
          _
        // Predicated region
        $region53: #{tpu_custom_call.1} parent=11 // pred_check
          %p663 = pneg %p336
        $region54: #{tpu_custom_call.1} parent=11 // pred_check_branch
          %665 = sbr.rel (%p663) target = $region56
        $region55: #{tpu_custom_call.1} parent=11 // pred_region
          %667 = vsyncadd [#allocation17], 0
          %s668 = sshll.u32 %s12, 4
          %s669 = int_to_ptr.hbm [resolvable:$true] %s668
          %s670 = sshll.u32 [#allocation18], 4
          %s671 = int_to_ptr.vmem [resolvable:$true] %s670
          %676 = dma.hbm_to_vmem [thread:$0]  %s669, 256, %s671, [#allocation17], 64, 64, 4
        $region56: #{tpu_custom_call.1} parent=11 // pred_fallthru
          _
        // Predicated region
        $region57: #{tpu_custom_call.1} parent=11 // pred_check
          %p677 = pneg %p357
        $region58: #{tpu_custom_call.1} parent=11 // pred_check_branch
          %679 = sbr.rel (%p677) target = $region60
        $region59: #{tpu_custom_call.1} parent=11 // pred_region
          %681 = vsyncadd [#allocation20], 0
          %s683 = sshll.u32 %s13, 4
          %s684 = int_to_ptr.hbm [resolvable:$true] %s683
          %s685 = sshll.u32 [#allocation19], 4
          %s686 = int_to_ptr.vmem [resolvable:$true] %s685
          %688 = dma.hbm_to_vmem [thread:$0]  %s684, 16, %s686, [#allocation20]
        $region60: #{tpu_custom_call.1} parent=11 // pred_fallthru
          _
        // Predicated region
        $region61: #{tpu_custom_call.1} parent=11 // pred_check
          %p689 = pneg %p378
        $region62: #{tpu_custom_call.1} parent=11 // pred_check_branch
          %691 = sbr.rel (%p689) target = $region64
        $region63: #{tpu_custom_call.1} parent=11 // pred_region
          %693 = vsyncadd [#allocation20], 0
          %s695 = sshll.u32 %s14, 4
          %s696 = int_to_ptr.hbm [resolvable:$true] %s695
          %s697 = sshll.u32 [#allocation21], 4
          %s698 = int_to_ptr.vmem [resolvable:$true] %s697
          %700 = dma.hbm_to_vmem [thread:$0]  %s696, 16, %s698, [#allocation20]
        $region64: #{tpu_custom_call.1} parent=11 // pred_fallthru
          _
        // Predicated region
        $region65: #{tpu_custom_call.1} parent=11 // pred_check
          %p701 = pneg %p399
        $region66: #{tpu_custom_call.1} parent=11 // pred_check_branch
          %703 = sbr.rel (%p701) target = $region68
        $region67: #{tpu_custom_call.1} parent=11 // pred_region
          %705 = vsyncadd [#allocation23], 0
          %s707 = sshll.u32 %s15, 4
          %s708 = int_to_ptr.hbm [resolvable:$true] %s707
          %s709 = sshll.u32 [#allocation22], 4
          %s710 = int_to_ptr.vmem [resolvable:$true] %s709
          %712 = dma.hbm_to_vmem [thread:$0]  %s708, 16, %s710, [#allocation23]
        $region68: #{tpu_custom_call.1} parent=11 // pred_fallthru
          _
        // Predicated region
        $region69: #{tpu_custom_call.1} parent=11 // pred_check
          %p713 = pneg %p420
        $region70: #{tpu_custom_call.1} parent=11 // pred_check_branch
          %715 = sbr.rel (%p713) target = $region72
        $region71: #{tpu_custom_call.1} parent=11 // pred_region
          %717 = vsyncadd [#allocation23], 0
          %s718 = sshll.u32 %s16, 4
          %s719 = int_to_ptr.hbm [resolvable:$true] %s718
          %s720 = sshll.u32 [#allocation24], 4
          %s721 = int_to_ptr.vmem [resolvable:$true] %s720
          %726 = dma.hbm_to_vmem [thread:$0]  %s719, 256, %s721, [#allocation23], 64, 64, 4
        $region72: #{tpu_custom_call.1} parent=11 // pred_fallthru
          _
        // Predicated region
        $region73: #{tpu_custom_call.1} parent=11 // pred_check
          %p727 = pneg %p441
        $region74: #{tpu_custom_call.1} parent=11 // pred_check_branch
          %729 = sbr.rel (%p727) target = $region76
        $region75: #{tpu_custom_call.1} parent=11 // pred_region
          %731 = vsyncadd [#allocation26], 0
          %s733 = sshll.u32 %s17, 4
          %s734 = int_to_ptr.hbm [resolvable:$true] %s733
          %s735 = sshll.u32 [#allocation25], 4
          %s736 = int_to_ptr.vmem [resolvable:$true] %s735
          %738 = dma.hbm_to_vmem [thread:$0]  %s734, 16, %s736, [#allocation26]
        $region76: #{tpu_custom_call.1} parent=11 // pred_fallthru
          _
        // Predicated region
        $region77: #{tpu_custom_call.1} parent=11 // pred_check
          %p739 = pneg %p462
        $region78: #{tpu_custom_call.1} parent=11 // pred_check_branch
          %741 = sbr.rel (%p739) target = $region80
        $region79: #{tpu_custom_call.1} parent=11 // pred_region
          _
        $region80: #{tpu_custom_call.1} parent=11 // pred_fallthru
          _
        // Predicated region
        $region81: #{tpu_custom_call.1} parent=11 // pred_check
          %p742 = pneg %p483
        $region82: #{tpu_custom_call.1} parent=11 // pred_check_branch
          %744 = sbr.rel (%p742) target = $region84
        $region83: #{tpu_custom_call.1} parent=11 // pred_region
          _
        $region84: #{tpu_custom_call.1} parent=11 // pred_fallthru
          _
        // Predicated region
        $region85: #{tpu_custom_call.1} parent=11 // pred_check
          %p745 = pneg %p504
        $region86: #{tpu_custom_call.1} parent=11 // pred_check_branch
          %747 = sbr.rel (%p745) target = $region88
        $region87: #{tpu_custom_call.1} parent=11 // pred_region
          _
        $region88: #{tpu_custom_call.1} parent=11 // pred_fallthru
          _
        // Predicated region
        $region89: #{tpu_custom_call.1} parent=11 // pred_check
          %p748 = pneg %p525
        $region90: #{tpu_custom_call.1} parent=11 // pred_check_branch
          %750 = sbr.rel (%p748) target = $region92
        $region91: #{tpu_custom_call.1} parent=11 // pred_region
          _
        $region92: #{tpu_custom_call.1} parent=11 // pred_fallthru
          _
      $region12: #{tpu_custom_call.1} parent=5 // pred_fallthru
        _
      %p751 = scmp.lt.s32.totalorder %s41, 2
      // Predicated region
      $region93: #{tpu_custom_call.1} parent=5 // pred_check
        %p752 = pneg %p751
      $region94: #{tpu_custom_call.1} parent=5 // pred_check_branch
        %754 = sbr.rel (%p752) target = $region96
      $region95: #{tpu_custom_call.1} parent=5 // pred_region
        // Predicated region
        $region97: #{tpu_custom_call.1} parent=95 // pred_check
          %p755 = pneg %p73
        $region98: #{tpu_custom_call.1} parent=95 // pred_check_branch
          %757 = sbr.rel (%p755) target = $region100
        $region99: #{tpu_custom_call.1} parent=95 // pred_region
          %p758 = scmp.lt.s32.totalorder %s48, 1
          %s759 = scalar_select %p758, %s48, 1
          %s760 = smul.addr %s759, 8
          %s761 = scalar_lea.vmem %s0, %s760
        $region100: #{tpu_custom_call.1} parent=95 // pred_fallthru
          _
        // Predicated region
        $region101: #{tpu_custom_call.1} parent=95 // pred_check
          %p762 = pneg %p99
        $region102: #{tpu_custom_call.1} parent=95 // pred_check_branch
          %764 = sbr.rel (%p762) target = $region104
        $region103: #{tpu_custom_call.1} parent=95 // pred_region
          %s765 = sand.u32 %s89, 1
          %s766 = scalar_lea.sflag [#allocation5], %s765
          %s767 = sand.u32 %s89, 1
          %s768 = scalar_lea.vmem [#allocation4], %s767
          %770 = vsyncadd %s766, 0
          %s771 = scalar_lea.hbm %s1, %s48
          %s773 = sshll.u32 %s771, 4
          %s774 = int_to_ptr.hbm [resolvable:$true] %s773
          %s775 = sshll.u32 %s768, 4
          %s776 = int_to_ptr.vmem [resolvable:$true] %s775
          %778 = dma.hbm_to_vmem [thread:$0]  %s774, 16, %s776, %s766
        $region104: #{tpu_custom_call.1} parent=95 // pred_fallthru
          _
      $region96: #{tpu_custom_call.1} parent=5 // pred_fallthru
        _
      %p779 = scmp.le.s32.totalorder 1, %s41
      %p780 = scmp.lt.s32.totalorder %s41, 3
      %p781 = pnand %p779, %p780
      %p782 = pneg %p781
      // Predicated region
      $region105: #{tpu_custom_call.1} parent=5 // pred_check
        _
      $region106: #{tpu_custom_call.1} parent=5 // pred_check_branch
        %784 = sbr.rel (%p781) target = $region108
      $region107: #{tpu_custom_call.1} parent=5 // pred_region
        %s785 = ssub.s32 %s41, 1
        %s786 = sand.u32 %s92, 1
        %s787 = scalar_lea.sflag [#allocation5], %s786
        %s788 = sand.u32 %s92, 1
        %s789 = scalar_lea.vmem [#allocation4], %s788
        // Predicated region
        $region109: #{tpu_custom_call.1} parent=107 // pred_check
          %p790 = pneg %p105
        $region110: #{tpu_custom_call.1} parent=107 // pred_check_branch
          %792 = sbr.rel (%p790) target = $region112
        $region111: #{tpu_custom_call.1} parent=107 // pred_region
          %794 = dma.done %s787, 16
        $region112: #{tpu_custom_call.1} parent=107 // pred_fallthru
          _
        // Predicated region
        $region113: #{tpu_custom_call.1} parent=107 // pred_check
          %p795 = pneg %p147
        $region114: #{tpu_custom_call.1} parent=107 // pred_check_branch
          %797 = sbr.rel (%p795) target = $region116
        $region115: #{tpu_custom_call.1} parent=107 // pred_region
          %799 = dma.done [#allocation8], 16
        $region116: #{tpu_custom_call.1} parent=107 // pred_fallthru
          _
        // Predicated region
        $region117: #{tpu_custom_call.1} parent=107 // pred_check
          %p800 = pneg %p168
        $region118: #{tpu_custom_call.1} parent=107 // pred_check_branch
          %802 = sbr.rel (%p800) target = $region120
        $region119: #{tpu_custom_call.1} parent=107 // pred_region
          %804 = dma.done [#allocation8], 16
        $region120: #{tpu_custom_call.1} parent=107 // pred_fallthru
          _
        // Predicated region
        $region121: #{tpu_custom_call.1} parent=107 // pred_check
          %p805 = pneg %p189
        $region122: #{tpu_custom_call.1} parent=107 // pred_check_branch
          %807 = sbr.rel (%p805) target = $region124
        $region123: #{tpu_custom_call.1} parent=107 // pred_region
          %809 = dma.done [#allocation11], 16
        $region124: #{tpu_custom_call.1} parent=107 // pred_fallthru
          _
        // Predicated region
        $region125: #{tpu_custom_call.1} parent=107 // pred_check
          %p810 = pneg %p231
        $region126: #{tpu_custom_call.1} parent=107 // pred_check_branch
          %812 = sbr.rel (%p810) target = $region128
        $region127: #{tpu_custom_call.1} parent=107 // pred_region
          %814 = dma.done [#allocation11], 16
        $region128: #{tpu_custom_call.1} parent=107 // pred_fallthru
          _
        // Predicated region
        $region129: #{tpu_custom_call.1} parent=107 // pred_check
          %p815 = pneg %p273
        $region130: #{tpu_custom_call.1} parent=107 // pred_check_branch
          %817 = sbr.rel (%p815) target = $region132
        $region131: #{tpu_custom_call.1} parent=107 // pred_region
          %819 = dma.done [#allocation14], 16
        $region132: #{tpu_custom_call.1} parent=107 // pred_fallthru
          _
        // Predicated region
        $region133: #{tpu_custom_call.1} parent=107 // pred_check
          %p820 = pneg %p294
        $region134: #{tpu_custom_call.1} parent=107 // pred_check_branch
          %822 = sbr.rel (%p820) target = $region136
        $region135: #{tpu_custom_call.1} parent=107 // pred_region
          %824 = dma.done [#allocation14], 256
        $region136: #{tpu_custom_call.1} parent=107 // pred_fallthru
          _
        // Predicated region
        $region137: #{tpu_custom_call.1} parent=107 // pred_check
          %p825 = pneg %p315
        $region138: #{tpu_custom_call.1} parent=107 // pred_check_branch
          %827 = sbr.rel (%p825) target = $region140
        $region139: #{tpu_custom_call.1} parent=107 // pred_region
          %829 = dma.done [#allocation17], 16
        $region140: #{tpu_custom_call.1} parent=107 // pred_fallthru
          _
        // Predicated region
        $region141: #{tpu_custom_call.1} parent=107 // pred_check
          %p830 = pneg %p336
        $region142: #{tpu_custom_call.1} parent=107 // pred_check_branch
          %832 = sbr.rel (%p830) target = $region144
        $region143: #{tpu_custom_call.1} parent=107 // pred_region
          %834 = dma.done [#allocation17], 256
        $region144: #{tpu_custom_call.1} parent=107 // pred_fallthru
          _
        // Predicated region
        $region145: #{tpu_custom_call.1} parent=107 // pred_check
          %p835 = pneg %p357
        $region146: #{tpu_custom_call.1} parent=107 // pred_check_branch
          %837 = sbr.rel (%p835) target = $region148
        $region147: #{tpu_custom_call.1} parent=107 // pred_region
          %839 = dma.done [#allocation20], 16
        $region148: #{tpu_custom_call.1} parent=107 // pred_fallthru
          _
        // Predicated region
        $region149: #{tpu_custom_call.1} parent=107 // pred_check
          %p840 = pneg %p378
        $region150: #{tpu_custom_call.1} parent=107 // pred_check_branch
          %842 = sbr.rel (%p840) target = $region152
        $region151: #{tpu_custom_call.1} parent=107 // pred_region
          %844 = dma.done [#allocation20], 16
        $region152: #{tpu_custom_call.1} parent=107 // pred_fallthru
          _
        // Predicated region
        $region153: #{tpu_custom_call.1} parent=107 // pred_check
          %p845 = pneg %p399
        $region154: #{tpu_custom_call.1} parent=107 // pred_check_branch
          %847 = sbr.rel (%p845) target = $region156
        $region155: #{tpu_custom_call.1} parent=107 // pred_region
          %849 = dma.done [#allocation23], 16
        $region156: #{tpu_custom_call.1} parent=107 // pred_fallthru
          _
        // Predicated region
        $region157: #{tpu_custom_call.1} parent=107 // pred_check
          %p850 = pneg %p420
        $region158: #{tpu_custom_call.1} parent=107 // pred_check_branch
          %852 = sbr.rel (%p850) target = $region160
        $region159: #{tpu_custom_call.1} parent=107 // pred_region
          %854 = dma.done [#allocation23], 256
        $region160: #{tpu_custom_call.1} parent=107 // pred_fallthru
          _
        // Predicated region
        $region161: #{tpu_custom_call.1} parent=107 // pred_check
          %p855 = pneg %p441
        $region162: #{tpu_custom_call.1} parent=107 // pred_check_branch
          %857 = sbr.rel (%p855) target = $region164
        $region163: #{tpu_custom_call.1} parent=107 // pred_region
          %859 = dma.done [#allocation26], 16
        $region164: #{tpu_custom_call.1} parent=107 // pred_fallthru
          _
        %p860 = scmp.lt.s32.totalorder %s50, 1
        %s861 = scalar_select %p860, %s50, 1
        %s862 = smul.addr %s861, 8
        %s863 = scalar_lea.vmem %s0, %s862
        %p864 = pneg %p79
        %p865 = pneg %p76
        %s866 = sand.u32 %s92, 1
        %s867 = scalar_lea.sflag [#allocation5], %s866
        %s868 = sand.u32 %s92, 1
        %s869 = scalar_lea.vmem [#allocation4], %s868
        %p870 = pneg %p105
        %p871 = pneg %p102
        %p872 = pneg %p126
        %p873 = pneg %p123
        %p874 = pneg %p147
        %p875 = pneg %p144
        %p876 = pneg %p168
        %p877 = pneg %p165
        %p878 = pneg %p189
        %p879 = pneg %p186
        %p880 = pneg %p210
        %p881 = pneg %p207
        %p882 = pneg %p231
        %p883 = pneg %p228
        %p884 = pneg %p252
        %p885 = pneg %p249
        %p886 = pneg %p273
        %p887 = pneg %p270
        %p888 = pneg %p294
        %p889 = pneg %p291
        %p890 = pneg %p315
        %p891 = pneg %p312
        %p892 = pneg %p336
        %p893 = pneg %p333
        %p894 = pneg %p357
        %p895 = pneg %p354
        %p896 = pneg %p378
        %p897 = pneg %p375
        %p898 = pneg %p399
        %p899 = pneg %p396
        %p900 = pneg %p420
        %p901 = pneg %p417
        %p902 = pneg %p441
        %p903 = pneg %p438
        %p904 = pneg %p462
        %p905 = pneg %p459
        %p906 = pneg %p483
        %p907 = pneg %p480
        %p908 = pneg %p504
        %p909 = pneg %p501
        %p910 = pneg %p525
        %p911 = pneg %p522
        %p912 = pneg %p553
        %p913 = pneg %p550
        %s914 = sand.u32 %s540, 1
        %s915 = scalar_lea.sflag [#allocation6], %s914
        %s916 = sand.u32 %s540, 1
        %s917 = smul.addr %s916, 8
        %s918 = scalar_lea.vmem [#allocation27], %s917
        %p919 = scmp.lt.s32.totalorder %s50, 1
        %s920 = scalar_select %p919, %s50, 1
        %s921 = smul.addr %s920, 8
        %s922 = scalar_lea.vmem %s0, %s921
        %p924 = scmp.eq.s32.totalorder %s51, 0
        // Predicated region
        $region165: #{tpu_custom_call.1} parent=107 // pred_check
          %p925 = pneg %p924
        $region166: #{tpu_custom_call.1} parent=107 // pred_check_branch
          %927 = sbr.rel (%p925) target = $region168
        $region167: #{tpu_custom_call.1} parent=107 // pred_region
          %v928 = vld [vmem:[%s922] sm:$0xff]
          %v929 = vld [vmem:[%s2] sm:$0x1]
          %v930 = vld [vmem:[#allocation7] sm:$0x1]
          %vm931 = vcmask 261120
          %v932 = vsel %vm931, %v928, 0.0
          %933 = vadd.xlane.f32.xlu0 %v932
          %v934 = vpop.xlane.xlu0 %933
          %v935 = vrcp.pop 32.0
          %v936 = vmul.f32 32.0, %v935
          %v937 = vsub.f32 1.0, %v936
          %v938 = vmul.f32 %v935, %v937
          %v939 = vadd.f32 %v935, %v938
          %vm940 = vweird.f32 %v935
          %v941 = vsel %vm940, %v935, %v939
          %v942 = vmul.f32 %v934, %v941
          %v943 = vsub.f32 %v928, %v942
          %v944 = vmul.f32 %v943, %v943
          %v945 = vsel %vm931, %v944, 0.0
          %946 = vadd.xlane.f32.xlu0 %v945
          %v947 = vpop.xlane.xlu0 %946
          %v948 = vmul.f32 %v947, %v941
          %v949 = vadd.f32 %v948, 1e-05
          %v950 = vrsqrt.pop %v949
          %v951 = vmul.f32 %v950, %v949
          %v952 = vmul.f32 %v951, %v950
          %v953 = vmul.f32 0.5, %v952
          %v954 = vsub.f32 1.5, %v953
          %v955 = vmul.f32 %v950, %v954
          %vm956 = vweird.f32 %v949
          %vm957 = vweird.f32 %v950
          %vm958 = vmor %vm956, %vm957
          %v959 = vsel %vm958, %v950, %v955
          %v960 = vmul.f32 %v943, %v959
          %v962 = vperm.slane %v929, 0
          %v964 = vmul.f32 %v960, %v962
          %v966 = vperm.slane %v930, 0
          %v968 = vadd.f32 %v964, %v966
          %v969 = vld [vmem:[#allocation9] sm:$0x1]
          %v970 = vld [vmem:[#allocation10] sm:$0x1]
          %v971 = vsel %vm931, %v968, 0.0
          %972 = vadd.xlane.f32.xlu0 %v971
          %v973 = vpop.xlane.xlu0 %972
          %v974 = vmul.f32 %v973, %v941
          %v975 = vsub.f32 %v968, %v974
          %v976 = vmul.f32 %v975, %v975
          %v977 = vsel %vm931, %v976, 0.0
          %978 = vadd.xlane.f32.xlu0 %v977
          %v979 = vpop.xlane.xlu0 %978
          %v980 = vmul.f32 %v979, %v941
          %v981 = vadd.f32 %v980, 1e-05
          %v982 = vrsqrt.pop %v981
          %v983 = vmul.f32 %v982, %v981
          %v984 = vmul.f32 %v983, %v982
          %v985 = vmul.f32 0.5, %v984
          %v986 = vsub.f32 1.5, %v985
          %v987 = vmul.f32 %v982, %v986
          %vm988 = vweird.f32 %v981
          %vm989 = vweird.f32 %v982
          %vm990 = vmor %vm988, %vm989
          %v991 = vsel %vm990, %v982, %v987
          %v992 = vmul.f32 %v975, %v991
          %v994 = vperm.slane %v969, 0
          %v996 = vmul.f32 %v992, %v994
          %v998 = vperm.slane %v970, 0
          %v1000 = vadd.f32 %v996, %v998
          %v1001 = vpack.c.bf16 %v1000, %v1000
          %v1002 = vld [vmem:[%s8] sm:$0xf]
          %v1003 = vld [vmem:[%s8 + $0x4] sm:$0xf]
          %v1004 = vld [vmem:[%s8 + $0x8] sm:$0xf]
          %v1005 = vld [vmem:[%s8 + $0xc] sm:$0xf]
          %v1006 = vld [vmem:[#allocation13] sm:$0x1]
          %v1008 = vperm.slane %v1006, 0
          %v1014 = vunpack.c.l.b16 %v1002
          %v1015 = vunpack.c.l.b16 %v1003
          %v1016 = vunpack.c.l.b16 %v1004
          %v1017 = vunpack.c.l.b16 %v1005
          %v1018 = vpack.c.b16 %v1015, %v1014
          %v1019 = vpack.c.b16 %v1017, %v1016
          %v1023 = vsel %vm931, %v1001, 0
          %1025 = vmatpush.bf16.msra.mxu0 0
          %1026 = vmatpush.bf16.msra.mxu0 0
          %1027 = vmatpush.bf16.msra.mxu0 0
          %1028 = vmatpush.bf16.msra.mxu0 0
          %1029 = vmatpush.bf16.msra.mxu0 0
          %1030 = vmatpush.bf16.msra.mxu0 0
          %1031 = vmatpush.bf16.msra.mxu0 %v1019
          %1032 = vmatpush.bf16.msra.mxu0 %v1018
          %1033 = vmatmul.bf16.gmra.mxu0 %v1023
          %v1034 = vpop.f32.mrf.mxu0
          %v1035 = vadd.f32 %v1008, %v1034
          %v1036 = vpop.f32.mrf.mxu0
          %1037 = vdwg.mxu0
          %v1038 = vld [vmem:[#allocation15] sm:$0xf]
          %v1039 = vld [vmem:[#allocation15 + $0x4] sm:$0xf]
          %v1040 = vld [vmem:[#allocation15 + $0x8] sm:$0xf]
          %v1041 = vld [vmem:[#allocation15 + $0xc] sm:$0xf]
          %v1042 = vld [vmem:[#allocation16] sm:$0x1]
          %v1044 = vperm.slane %v1042, 0
          %v1050 = vunpack.c.l.b16 %v1038
          %v1051 = vunpack.c.l.b16 %v1039
          %v1052 = vunpack.c.l.b16 %v1040
          %v1053 = vunpack.c.l.b16 %v1041
          %v1054 = vpack.c.b16 %v1051, %v1050
          %v1055 = vpack.c.b16 %v1053, %v1052
          %1058 = vmatpush.bf16.msra.mxu0 0
          %1059 = vmatpush.bf16.msra.mxu0 0
          %1060 = vmatpush.bf16.msra.mxu0 0
          %1061 = vmatpush.bf16.msra.mxu0 0
          %1062 = vmatpush.bf16.msra.mxu0 0
          %1063 = vmatpush.bf16.msra.mxu0 0
          %1064 = vmatpush.bf16.msra.mxu0 %v1055
          %1065 = vmatpush.bf16.msra.mxu0 %v1054
          %1066 = vmatmul.bf16.gmra.mxu0 %v1023
          %v1067 = vpop.f32.mrf.mxu0
          %v1068 = vadd.f32 %v1044, %v1067
          %v1069 = vpop.f32.mrf.mxu0
          %1070 = vdwg.mxu0
          %v1071 = vpack.c.bf16 %v1035, %v1035
          %vm1072 = vcmask 125952
          %1073 = vst.msk [vmem:[#allocation2] sm:$0xf] %vm1072, %v1071
          %v1074 = vpack.c.bf16 %v1068, %v1068
          %1075 = vst.msk [vmem:[#allocation3] sm:$0xf] %vm1072, %v1074
          %1077 = vrot.lane.b32.xlu0 %v1071, 112
          %v1078 = vpop.permute.xlu0 %1077
          %s1080 = scalar_lea.vmem [#allocation2], 4
          %1081 = vst.msk [vmem:[%s1080] sm:$0xf] %vm1072, %v1078
          %1083 = vrot.lane.b32.xlu0 %v1074, 112
          %v1084 = vpop.permute.xlu0 %1083
          %s1086 = scalar_lea.vmem [#allocation3], 4
          %1087 = vst.msk [vmem:[%s1086] sm:$0xf] %vm1072, %v1084
        $region168: #{tpu_custom_call.1} parent=107 // pred_fallthru
          _
        %s1088 = smul.u32 %s51, 8
        %s1089 = scalar_lea.vmem %s922, %s1088
        %v1090 = vld [vmem:[%s1089] sm:$0xff]
        %v1091 = vld [vmem:[%s2] sm:$0x1]
        %v1092 = vld [vmem:[#allocation7] sm:$0x1]
        %vm1093 = vcmask 261120
        %v1094 = vsel %vm1093, %v1090, 0.0
        %1095 = vadd.xlane.f32.xlu0 %v1094
        %v1096 = vpop.xlane.xlu0 %1095
        %v1097 = vrcp.pop 32.0
        %v1098 = vmul.f32 32.0, %v1097
        %v1099 = vsub.f32 1.0, %v1098
        %v1100 = vmul.f32 %v1097, %v1099
        %v1101 = vadd.f32 %v1097, %v1100
        %vm1102 = vweird.f32 %v1097
        %v1103 = vsel %vm1102, %v1097, %v1101
        %v1104 = vmul.f32 %v1096, %v1103
        %v1105 = vsub.f32 %v1090, %v1104
        %v1106 = vmul.f32 %v1105, %v1105
        %v1107 = vsel %vm1093, %v1106, 0.0
        %1108 = vadd.xlane.f32.xlu0 %v1107
        %v1109 = vpop.xlane.xlu0 %1108
        %v1110 = vmul.f32 %v1109, %v1103
        %v1111 = vadd.f32 %v1110, 1e-05
        %v1112 = vrsqrt.pop %v1111
        %v1113 = vmul.f32 %v1112, %v1111
        %v1114 = vmul.f32 %v1113, %v1112
        %v1115 = vmul.f32 0.5, %v1114
        %v1116 = vsub.f32 1.5, %v1115
        %v1117 = vmul.f32 %v1112, %v1116
        %vm1118 = vweird.f32 %v1111
        %vm1119 = vweird.f32 %v1112
        %vm1120 = vmor %vm1118, %vm1119
        %v1121 = vsel %vm1120, %v1112, %v1117
        %v1122 = vmul.f32 %v1105, %v1121
        %v1124 = vperm.slane %v1091, 0
        %v1126 = vmul.f32 %v1122, %v1124
        %v1128 = vperm.slane %v1092, 0
        %v1130 = vadd.f32 %v1126, %v1128
        %v1131 = vld [vmem:[#allocation9] sm:$0x1]
        %v1132 = vld [vmem:[#allocation10] sm:$0x1]
        %v1133 = vsel %vm1093, %v1130, 0.0
        %1134 = vadd.xlane.f32.xlu0 %v1133
        %v1135 = vpop.xlane.xlu0 %1134
        %v1136 = vmul.f32 %v1135, %v1103
        %v1137 = vsub.f32 %v1130, %v1136
        %v1138 = vmul.f32 %v1137, %v1137
        %v1139 = vsel %vm1093, %v1138, 0.0
        %1140 = vadd.xlane.f32.xlu0 %v1139
        %v1141 = vpop.xlane.xlu0 %1140
        %v1142 = vmul.f32 %v1141, %v1103
        %v1143 = vadd.f32 %v1142, 1e-05
        %v1144 = vrsqrt.pop %v1143
        %v1145 = vmul.f32 %v1144, %v1143
        %v1146 = vmul.f32 %v1145, %v1144
        %v1147 = vmul.f32 0.5, %v1146
        %v1148 = vsub.f32 1.5, %v1147
        %v1149 = vmul.f32 %v1144, %v1148
        %vm1150 = vweird.f32 %v1143
        %vm1151 = vweird.f32 %v1144
        %vm1152 = vmor %vm1150, %vm1151
        %v1153 = vsel %vm1152, %v1144, %v1149
        %v1154 = vmul.f32 %v1137, %v1153
        %v1156 = vperm.slane %v1131, 0
        %v1158 = vmul.f32 %v1154, %v1156
        %v1160 = vperm.slane %v1132, 0
        %v1162 = vadd.f32 %v1158, %v1160
        %v1163 = vpack.c.bf16 %v1162, %v1162
        %v1164 = vld [vmem:[%s6] sm:$0xf]
        %v1165 = vld [vmem:[%s6 + $0x4] sm:$0xf]
        %v1166 = vld [vmem:[%s6 + $0x8] sm:$0xf]
        %v1167 = vld [vmem:[%s6 + $0xc] sm:$0xf]
        %v1168 = vld [vmem:[#allocation12] sm:$0x1]
        %v1170 = vperm.slane %v1168, 0
        %v1176 = vunpack.c.l.b16 %v1164
        %v1177 = vunpack.c.l.b16 %v1165
        %v1178 = vunpack.c.l.b16 %v1166
        %v1179 = vunpack.c.l.b16 %v1167
        %v1180 = vpack.c.b16 %v1177, %v1176
        %v1181 = vpack.c.b16 %v1179, %v1178
        %v1185 = vsel %vm1093, %v1163, 0
        %1187 = vmatpush.bf16.msra.mxu0 0
        %1188 = vmatpush.bf16.msra.mxu0 0
        %1189 = vmatpush.bf16.msra.mxu0 0
        %1190 = vmatpush.bf16.msra.mxu0 0
        %1191 = vmatpush.bf16.msra.mxu0 0
        %1192 = vmatpush.bf16.msra.mxu0 0
        %1193 = vmatpush.bf16.msra.mxu0 %v1181
        %1194 = vmatpush.bf16.msra.mxu0 %v1180
        %1195 = vmatmul.bf16.gmra.mxu0 %v1185
        %v1196 = vpop.f32.mrf.mxu0
        %v1197 = vadd.f32 %v1170, %v1196
        %v1198 = vpop.f32.mrf.mxu0
        %1199 = vdwg.mxu0
        %1201 = vrot.lane.b32.xlu0 %v1197, 112
        %v1202 = vpop.permute.xlu0 %1201
        %v1204 = vpack.c.bf16 %v1197, %v1197
        %v1205 = vpack.c.bf16 %v1202, %v1202
        %v1206 = vld [vmem:[%s789] sm:$0x1]
        %v1207 = vld [vmem:[#allocation2] sm:$0xf]
        %v1208 = vld [vmem:[#allocation2 + $0x4] sm:$0xf]
        %v1210 = vperm.slane %v1206, 0
        %vm1212 = vcmask 130048
        %v1214 = vsel %vm1212, %v1204, 0
        %v1217 = vsel %vm1212, %v1207, 0
        %1219 = vmatpush.bf16.xpose.msra.mxu0 0
        %1220 = vmatpush.bf16.xpose.msra.mxu0 0
        %1221 = vmatpush.bf16.xpose.msra.mxu0 0
        %1222 = vmatpush.bf16.xpose.msra.mxu0 0
        %1223 = vmatpush.bf16.xpose.msra.mxu0 0
        %1224 = vmatpush.bf16.xpose.msra.mxu0 0
        %1225 = vmatpush.bf16.xpose.msra.mxu0 0
        %1226 = vmatpush.bf16.xpose.msra.mxu0 %v1217
        %1227 = vmatmul.bf16.gmra.mxu0 %v1214
        %v1228 = vpop.f32.mrf.mxu0
        %v1229 = vadd.f32 %v1210, %v1228
        %v1230 = vpop.f32.mrf.mxu0
        %1231 = vdwg.mxu0
        %v1233 = vsel %vm1212, %v1205, 0
        %v1236 = vsel %vm1212, %v1208, 0
        %1238 = vmatpush.bf16.xpose.msra.mxu0 0
        %1239 = vmatpush.bf16.xpose.msra.mxu0 0
        %1240 = vmatpush.bf16.xpose.msra.mxu0 0
        %1241 = vmatpush.bf16.xpose.msra.mxu0 0
        %1242 = vmatpush.bf16.xpose.msra.mxu0 0
        %1243 = vmatpush.bf16.xpose.msra.mxu0 0
        %1244 = vmatpush.bf16.xpose.msra.mxu0 0
        %1245 = vmatpush.bf16.xpose.msra.mxu0 %v1236
        %1246 = vmatmul.bf16.gmra.mxu0 %v1233
        %v1247 = vpop.f32.mrf.mxu0
        %v1248 = vadd.f32 %v1210, %v1247
        %v1249 = vpop.f32.mrf.mxu0
        %1250 = vdwg.mxu0
        %vm1251 = vcmask 64512
        %v1252 = vsel %vm1251, %v1229, -inf
        %1253 = vmax.xlane.f32.xlu0 %v1252
        %v1254 = vpop.xlane.xlu0 %1253
        %v1255 = vsel %vm1251, %v1248, -inf
        %1256 = vmax.xlane.f32.xlu0 %v1255
        %v1257 = vpop.xlane.xlu0 %1256
        %v1258 = vsub.f32 %v1229, %v1254
        %v1259 = vsub.f32 %v1248, %v1257
        %v1260 = vmul.f32 %v1258, 1.442695
        %v1261 = vpow.pop %v1260
        %v1262 = vmul.f32 %v1259, 1.442695
        %v1263 = vpow.pop %v1262
        %v1264 = vsel %vm1251, %v1261, 0.0
        %1265 = vadd.xlane.f32.xlu0 %v1264
        %v1266 = vpop.xlane.xlu0 %1265
        %v1267 = vsel %vm1251, %v1263, 0.0
        %1268 = vadd.xlane.f32.xlu0 %v1267
        %v1269 = vpop.xlane.xlu0 %1268
        %v1270 = vrcp.pop %v1266
        %v1271 = vrcp.pop %v1269
        %v1272 = vmul.f32 %v1261, %v1270
        %v1273 = vmul.f32 %v1263, %v1271
        %v1274 = vpack.c.bf16 %v1272, %v1272
        %v1275 = vpack.c.bf16 %v1273, %v1273
        %v1276 = vld [vmem:[#allocation3] sm:$0xf]
        %v1277 = vld [vmem:[#allocation3 + $0x4] sm:$0xf]
        %v1279 = vsel %vm1251, %v1274, 0
        %vm1281 = vcmask 1043456
        %v1283 = vsel %vm1281, %v1276, 0
        %1285 = vmatpush.bf16.msra.mxu0 0
        %1286 = vmatpush.bf16.msra.mxu0 0
        %1287 = vmatpush.bf16.msra.mxu0 0
        %1288 = vmatpush.bf16.msra.mxu0 0
        %1289 = vmatpush.bf16.msra.mxu0 0
        %1290 = vmatpush.bf16.msra.mxu0 0
        %1291 = vmatpush.bf16.msra.mxu0 0
        %1292 = vmatpush.bf16.msra.mxu0 %v1283
        %1293 = vmatmul.bf16.gmra.mxu0 %v1279
        %v1294 = vpop.f32.mrf.mxu0
        %v1295 = vadd.f32 0.0, %v1294
        %v1296 = vpop.f32.mrf.mxu0
        %1297 = vdwg.mxu0
        %v1299 = vsel %vm1251, %v1275, 0
        %v1302 = vsel %vm1281, %v1277, 0
        %1304 = vmatpush.bf16.msra.mxu0 0
        %1305 = vmatpush.bf16.msra.mxu0 0
        %1306 = vmatpush.bf16.msra.mxu0 0
        %1307 = vmatpush.bf16.msra.mxu0 0
        %1308 = vmatpush.bf16.msra.mxu0 0
        %1309 = vmatpush.bf16.msra.mxu0 0
        %1310 = vmatpush.bf16.msra.mxu0 0
        %1311 = vmatpush.bf16.msra.mxu0 %v1302
        %1312 = vmatmul.bf16.gmra.mxu0 %v1299
        %v1313 = vpop.f32.mrf.mxu0
        %v1314 = vadd.f32 0.0, %v1313
        %v1315 = vpop.f32.mrf.mxu0
        %1316 = vdwg.mxu0
        %1318 = vrot.lane.b32.xlu0 %v1314, 16
        %v1319 = vpop.permute.xlu0 %1318
        %v1321 = vsel %vm1212, %v1295, %v1319
        %v1322 = vpack.c.bf16 %v1321, %v1321
        %v1323 = vld [vmem:[#allocation18] sm:$0xf]
        %v1324 = vld [vmem:[#allocation18 + $0x4] sm:$0xf]
        %v1325 = vld [vmem:[#allocation18 + $0x8] sm:$0xf]
        %v1326 = vld [vmem:[#allocation18 + $0xc] sm:$0xf]
        %v1327 = vld [vmem:[#allocation19] sm:$0x1]
        %v1329 = vperm.slane %v1327, 0
        %v1335 = vunpack.c.l.b16 %v1323
        %v1336 = vunpack.c.l.b16 %v1324
        %v1337 = vunpack.c.l.b16 %v1325
        %v1338 = vunpack.c.l.b16 %v1326
        %v1339 = vpack.c.b16 %v1336, %v1335
        %v1340 = vpack.c.b16 %v1338, %v1337
        %v1344 = vsel %vm1093, %v1322, 0
        %1346 = vmatpush.bf16.msra.mxu0 0
        %1347 = vmatpush.bf16.msra.mxu0 0
        %1348 = vmatpush.bf16.msra.mxu0 0
        %1349 = vmatpush.bf16.msra.mxu0 0
        %1350 = vmatpush.bf16.msra.mxu0 0
        %1351 = vmatpush.bf16.msra.mxu0 0
        %1352 = vmatpush.bf16.msra.mxu0 %v1340
        %1353 = vmatpush.bf16.msra.mxu0 %v1339
        %1354 = vmatmul.bf16.gmra.mxu0 %v1344
        %v1355 = vpop.f32.mrf.mxu0
        %v1356 = vadd.f32 %v1329, %v1355
        %v1357 = vpop.f32.mrf.mxu0
        %1358 = vdwg.mxu0
        %v1359 = vadd.f32 %v1130, %v1356
        %v1360 = vld [vmem:[#allocation21] sm:$0x1]
        %v1361 = vld [vmem:[#allocation22] sm:$0x1]
        %v1362 = vsel %vm1093, %v1359, 0.0
        %1363 = vadd.xlane.f32.xlu0 %v1362
        %v1364 = vpop.xlane.xlu0 %1363
        %v1365 = vmul.f32 %v1364, %v1103
        %v1366 = vsub.f32 %v1359, %v1365
        %v1367 = vmul.f32 %v1366, %v1366
        %v1368 = vsel %vm1093, %v1367, 0.0
        %1369 = vadd.xlane.f32.xlu0 %v1368
        %v1370 = vpop.xlane.xlu0 %1369
        %v1371 = vmul.f32 %v1370, %v1103
        %v1372 = vadd.f32 %v1371, 1e-05
        %v1373 = vrsqrt.pop %v1372
        %v1374 = vmul.f32 %v1373, %v1372
        %v1375 = vmul.f32 %v1374, %v1373
        %v1376 = vmul.f32 0.5, %v1375
        %v1377 = vsub.f32 1.5, %v1376
        %v1378 = vmul.f32 %v1373, %v1377
        %vm1379 = vweird.f32 %v1372
        %vm1380 = vweird.f32 %v1373
        %vm1381 = vmor %vm1379, %vm1380
        %v1382 = vsel %vm1381, %v1373, %v1378
        %v1383 = vmul.f32 %v1366, %v1382
        %v1385 = vperm.slane %v1360, 0
        %v1387 = vmul.f32 %v1383, %v1385
        %v1389 = vperm.slane %v1361, 0
        %v1391 = vadd.f32 %v1387, %v1389
        %v1392 = vpack.c.bf16 %v1391, %v1391
        %v1393 = vld [vmem:[#allocation24] sm:$0xf]
        %v1394 = vld [vmem:[#allocation24 + $0x4] sm:$0xf]
        %v1395 = vld [vmem:[#allocation24 + $0x8] sm:$0xf]
        %v1396 = vld [vmem:[#allocation24 + $0xc] sm:$0xf]
        %v1397 = vld [vmem:[#allocation25] sm:$0x1]
        %v1399 = vperm.slane %v1397, 0
        %v1405 = vunpack.c.l.b16 %v1393
        %v1406 = vunpack.c.l.b16 %v1394
        %v1407 = vunpack.c.l.b16 %v1395
        %v1408 = vunpack.c.l.b16 %v1396
        %v1409 = vpack.c.b16 %v1406, %v1405
        %v1410 = vpack.c.b16 %v1408, %v1407
        %v1414 = vsel %vm1093, %v1392, 0
        %1416 = vmatpush.bf16.msra.mxu0 0
        %1417 = vmatpush.bf16.msra.mxu0 0
        %1418 = vmatpush.bf16.msra.mxu0 0
        %1419 = vmatpush.bf16.msra.mxu0 0
        %1420 = vmatpush.bf16.msra.mxu0 0
        %1421 = vmatpush.bf16.msra.mxu0 0
        %1422 = vmatpush.bf16.msra.mxu0 %v1410
        %1423 = vmatpush.bf16.msra.mxu0 %v1409
        %1424 = vmatmul.bf16.gmra.mxu0 %v1414
        %v1425 = vpop.f32.mrf.mxu0
        %v1426 = vadd.f32 %v1399, %v1425
        %v1427 = vpop.f32.mrf.mxu0
        %1428 = vdwg.mxu0
        %v1429 = vmul.f32 %v1426, 0.5
        %v1430 = vmul.f32 %v1426, 0.044715
        %v1431 = vmul.f32 %v1430, %v1426
        %v1432 = vmul.f32 %v1431, %v1426
        %v1433 = vadd.f32 %v1426, %v1432
        %v1434 = vmul.f32 %v1433, 0.7978846
        %v1435 = vtanh.pop %v1434
        %v1436 = vadd.f32 %v1435, 1.0
        %v1437 = vmul.f32 %v1429, %v1436
        %v1438 = vpack.c.bf16 %v1437, %v1437
        %v1439 = vld [vmem:[%s18] sm:$0xf]
        %v1440 = vld [vmem:[%s18 + $0x4] sm:$0xf]
        %v1441 = vld [vmem:[%s18 + $0x8] sm:$0xf]
        %v1442 = vld [vmem:[%s18 + $0xc] sm:$0xf]
        %v1443 = vld [vmem:[%s18 + $0x10] sm:$0xf]
        %v1444 = vld [vmem:[%s18 + $0x14] sm:$0xf]
        %v1445 = vld [vmem:[%s18 + $0x18] sm:$0xf]
        %v1446 = vld [vmem:[%s18 + $0x1c] sm:$0xf]
        %v1447 = vld [vmem:[%s19] sm:$0x1]
        %v1449 = vperm.slane %v1447, 0
        %v1459 = vunpack.c.l.b16 %v1439
        %v1460 = vunpack.c.l.b16 %v1440
        %v1461 = vunpack.c.l.b16 %v1441
        %v1462 = vunpack.c.l.b16 %v1442
        %v1463 = vunpack.c.l.b16 %v1443
        %v1464 = vunpack.c.l.b16 %v1444
        %v1465 = vunpack.c.l.b16 %v1445
        %v1466 = vunpack.c.l.b16 %v1446
        %v1467 = vpack.c.b16 %v1460, %v1459
        %v1468 = vpack.c.b16 %v1462, %v1461
        %v1469 = vpack.c.b16 %v1464, %v1463
        %v1470 = vpack.c.b16 %v1466, %v1465
        %vm1475 = vcmask 523264
        %v1477 = vsel %vm1475, %v1438, 0
        %1479 = vmatpush.bf16.msra.mxu0 0
        %1480 = vmatpush.bf16.msra.mxu0 0
        %1481 = vmatpush.bf16.msra.mxu0 0
        %1482 = vmatpush.bf16.msra.mxu0 0
        %1483 = vmatpush.bf16.msra.mxu0 %v1470
        %1484 = vmatpush.bf16.msra.mxu0 %v1469
        %1485 = vmatpush.bf16.msra.mxu0 %v1468
        %1486 = vmatpush.bf16.msra.mxu0 %v1467
        %1487 = vmatmul.bf16.gmra.mxu0 %v1477
        %v1488 = vpop.f32.mrf.mxu0
        %v1489 = vadd.f32 %v1449, %v1488
        %v1490 = vpop.f32.mrf.mxu0
        %1491 = vdwg.mxu0
        %v1492 = vadd.f32 %v1359, %v1489
        %1493 = vst.msk [vmem:[%s918] sm:$0xff] %vm1093, %v1492
        %s1494 = sand.u32 %s540, 1
        %s1495 = scalar_lea.sflag [#allocation6], %s1494
        %s1496 = sand.u32 %s540, 1
        %s1497 = smul.addr %s1496, 8
        %s1498 = scalar_lea.vmem [#allocation27], %s1497
        // Predicated region
        $region169: #{tpu_custom_call.1} parent=107 // pred_check
          %p1499 = pneg %p550
        $region170: #{tpu_custom_call.1} parent=107 // pred_check_branch
          %1501 = sbr.rel (%p1499) target = $region172
        $region171: #{tpu_custom_call.1} parent=107 // pred_region
          %1503 = vsyncadd %s1495, 0
          %s1504 = sadd.s32 %s51, %s50
          %s1505 = smul.addr %s1504, 8
          %s1506 = scalar_lea.hbm %s22, %s1505
          %s1508 = sshll.u32 %s1498, 4
          %s1509 = int_to_ptr.vmem [resolvable:$true] %s1508
          %s1510 = sshll.u32 %s1506, 4
          %s1511 = int_to_ptr.hbm [resolvable:$true] %s1510
          %1513 = dma.vmem_to_hbm [thread:$0]  %s1509, 128, %s1511, %s1495
        $region172: #{tpu_custom_call.1} parent=107 // pred_fallthru
          _
      $region108: #{tpu_custom_call.1} parent=5 // pred_fallthru
        _
      %p1514 = scmp.le.s32.totalorder 2, %s41
      // Predicated region
      $region173: #{tpu_custom_call.1} parent=5 // pred_check
        %p1515 = pneg %p1514
      $region174: #{tpu_custom_call.1} parent=5 // pred_check_branch
        %1517 = sbr.rel (%p1515) target = $region176
      $region175: #{tpu_custom_call.1} parent=5 // pred_region
        %s1518 = ssub.s32 %s41, 2
        // Predicated region
        $region177: #{tpu_custom_call.1} parent=175 // pred_check
          %p1519 = pneg %p556
        $region178: #{tpu_custom_call.1} parent=175 // pred_check_branch
          %1521 = sbr.rel (%p1519) target = $region180
        $region179: #{tpu_custom_call.1} parent=175 // pred_region
          %s1522 = sand.u32 %s541, 1
          %s1523 = scalar_lea.sflag [#allocation6], %s1522
          %s1524 = sand.u32 %s541, 1
          %s1525 = smul.addr %s1524, 8
          %s1526 = scalar_lea.vmem [#allocation27], %s1525
          %1528 = dma.done %s1523, 128
        $region180: #{tpu_custom_call.1} parent=175 // pred_fallthru
          _
      $region176: #{tpu_custom_call.1} parent=5 // pred_fallthru
        _
    $region6: #{tpu_custom_call.1} parent=1 // loop_footer
      %s45 = sadd.s32 1, %s41
    $region7: #{tpu_custom_call.1} parent=1 // loop_footer_branch
      %40 = sbr.rel target = $region3
    $region8: #{tpu_custom_call.1} parent=1 // loop_exit
      _
    %1529 = vsyncpa [#allocation5], 1
    %s1530 = scalar_lea.sflag [#allocation5], 1
    %1531 = vsyncpa %s1530, 1
    %1532 = vsyncpa [#allocation8], 1
    %1533 = vsyncpa [#allocation11], 1
    %1534 = vsyncpa [#allocation14], 1
    %1535 = vsyncpa [#allocation17], 1
    %1536 = vsyncpa [#allocation20], 1
    %1537 = vsyncpa [#allocation23], 1
    %1538 = vsyncpa [#allocation26], 1
    %1539 = vsyncpa [#allocation6], 1
    %s1540 = scalar_lea.sflag [#allocation6], 1
    %1541 = vsyncpa %s1540, 1

// kernel: tpu_custom_call.1
$region0: #{tpu_custom_call.1}
  #allocation0 [shape = 'u32[]', space=smem, size = 0x4, offset = 0x4, fixed_abs, tag = 'smem constant byte address 0x4 - core index']
  #allocation1 [shape = 'u32[72,128]{1,0:T(1,128)}', space=vmem, size = 0x9000, scoped, tag = 'internal scratch']
  #allocation2 [shape = 'bf16[2,8,16]{2,1,0:T(8,128)(2,1)}', space=vmem, size = 0x1000, scoped, tag = 'scratch operand']
  #allocation3 [shape = 'bf16[2,8,16]{2,1,0:T(8,128)(2,1)}', space=vmem, size = 0x1000, scoped, tag = 'scratch operand']
  %s0 = inlined_call_operand.vmem [shape: f32[2,8,32], index: 0, kind: input, shape index: {}]
  %s1 = inlined_call_operand.hbm [shape: f32[2,1,8], index: 1, kind: input, shape index: {}]
  %s2 = inlined_call_operand.vmem [shape: f32[1,32], index: 2, kind: input, shape index: {}]
  %s3 = inlined_call_operand.hbm [shape: f32[1,32], index: 3, kind: input, shape index: {}]
  %s4 = inlined_call_operand.hbm [shape: f32[1,32], index: 4, kind: input, shape index: {}]
  %s5 = inlined_call_operand.hbm [shape: f32[1,32], index: 5, kind: input, shape index: {}]
  %s6 = inlined_call_operand.vmem [shape: bf16[32,32], index: 6, kind: input, shape index: {}]
  %s7 = inlined_call_operand.hbm [shape: f32[1,32], index: 7, kind: input, shape index: {}]
  %s8 = inlined_call_operand.vmem [shape: bf16[32,32], index: 8, kind: input, shape index: {}]
  %s9 = inlined_call_operand.hbm [shape: f32[1,32], index: 9, kind: input, shape index: {}]
  %s10 = inlined_call_operand.hbm [shape: bf16[32,32], index: 10, kind: input, shape index: {}]
  %s11 = inlined_call_operand.hbm [shape: f32[1,32], index: 11, kind: input, shape index: {}]
  %s12 = inlined_call_operand.hbm [shape: bf16[32,32], index: 12, kind: input, shape index: {}]
  %s13 = inlined_call_operand.hbm [shape: f32[1,32], index: 13, kind: input, shape index: {}]
  %s14 = inlined_call_operand.hbm [shape: f32[1,32], index: 14, kind: input, shape index: {}]
  %s15 = inlined_call_operand.hbm [shape: f32[1,32], index: 15, kind: input, shape index: {}]
  %s16 = inlined_call_operand.hbm [shape: bf16[32,64], index: 16, kind: input, shape index: {}]
  %s17 = inlined_call_operand.hbm [shape: f32[1,64], index: 17, kind: input, shape index: {}]
  %s18 = inlined_call_operand.vmem [shape: bf16[64,32], index: 18, kind: input, shape index: {}]
  %s19 = inlined_call_operand.vmem [shape: f32[1,32], index: 19, kind: input, shape index: {}]
  %s20 = inlined_call_operand.vmem [shape: f32[1,32], index: 20, kind: input, shape index: {}]
  %s21 = inlined_call_operand.vmem [shape: f32[1,32], index: 21, kind: input, shape index: {}]
  %s22 = inlined_call_operand.hbm [shape: f32[2,8,32], index: 22, kind: output, shape index: {}]
  %s23 = sld [smem:[#allocation0]]
  $region181: #{tpu_custom_call.1} parent=0
    _
  %s25 = ssub.s32 1, %s23
  %s26 = scalar_select 0, %s25, %s23
  $region1: #{tpu_custom_call.1} parent=0
    #allocation4 [shape = 'u8[1024]{0}', space=vmem, size = 0x400, scoped, tag = 'input window, operand 1']
    #allocation5 [shape = 's32[2]{0}', space=sflag, size = 0x8, scoped, tag = 'scoped memory for tpu_custom_call.1']
    #allocation6 [shape = 's32[2]{0}', space=sflag, size = 0x8, scoped, tag = 'scoped memory for tpu_custom_call.1']
    #allocation7 [shape = 'u8[512]{0}', space=vmem, size = 0x400, scoped, tag = 'input window, operand 3, single buffered']
    #allocation8 [shape = 's32[1]{0}', space=sflag, size = 0x4, scoped, tag = 'scoped memory for tpu_custom_call.1']
    #allocation9 [shape = 'u8[512]{0}', space=vmem, size = 0x400, scoped, tag = 'input window, operand 4, single buffered']
    #allocation10 [shape = 'u8[512]{0}', space=vmem, size = 0x400, scoped, tag = 'input window, operand 5, single buffered']
    #allocation11 [shape = 's32[1]{0}', space=sflag, size = 0x4, scoped, tag = 'scoped memory for tpu_custom_call.1']
    #allocation12 [shape = 'u8[512]{0}', space=vmem, size = 0x400, scoped, tag = 'input window, operand 7, single buffered']
    #allocation13 [shape = 'u8[512]{0}', space=vmem, size = 0x400, scoped, tag = 'input window, operand 9, single buffered']
    #allocation14 [shape = 's32[1]{0}', space=sflag, size = 0x4, scoped, tag = 'scoped memory for tpu_custom_call.1']
    #allocation15 [shape = 'u8[8192]{0}', space=vmem, size = 0x2000, scoped, tag = 'input window, operand 10, single buffered']
    #allocation16 [shape = 'u8[512]{0}', space=vmem, size = 0x400, scoped, tag = 'input window, operand 11, single buffered']
    #allocation17 [shape = 's32[1]{0}', space=sflag, size = 0x4, scoped, tag = 'scoped memory for tpu_custom_call.1']
    #allocation18 [shape = 'u8[8192]{0}', space=vmem, size = 0x2000, scoped, tag = 'input window, operand 12, single buffered']
    #allocation19 [shape = 'u8[512]{0}', space=vmem, size = 0x400, scoped, tag = 'input window, operand 13, single buffered']
    #allocation20 [shape = 's32[1]{0}', space=sflag, size = 0x4, scoped, tag = 'scoped memory for tpu_custom_call.1']
    #allocation21 [shape = 'u8[512]{0}', space=vmem, size = 0x400, scoped, tag = 'input window, operand 14, single buffered']
    #allocation22 [shape = 'u8[512]{0}', space=vmem, size = 0x400, scoped, tag = 'input window, operand 15, single buffered']
    #allocation23 [shape = 's32[1]{0}', space=sflag, size = 0x4, scoped, tag = 'scoped memory for tpu_custom_call.1']
    #allocation24 [shape = 'u8[8192]{0}', space=vmem, size = 0x2000, scoped, tag = 'input window, operand 16, single buffered']
    #allocation25 [shape = 'u8[512]{0}', space=vmem, size = 0x400, scoped, tag = 'input window, operand 17, single buffered']
    #allocation26 [shape = 's32[1]{0}', space=sflag, size = 0x4, scoped, tag = 'scoped memory for tpu_custom_call.1']
    #allocation27 [shape = 'u8[8192]{0}', space=vmem, size = 0x2000, scoped, tag = 'output window, operand 0']
    %27 = vsyncpa [#allocation5], 0
    %s28 = scalar_lea.sflag [#allocation5], 1
    %29 = vsyncpa %s28, 0
    %30 = vsyncpa [#allocation8], 0
    %31 = vsyncpa [#allocation11], 0
    %32 = vsyncpa [#allocation14], 0
    %33 = vsyncpa [#allocation17], 0
    %34 = vsyncpa [#allocation20], 0
    %35 = vsyncpa [#allocation23], 0
    %36 = vsyncpa [#allocation26], 0
    %37 = vsyncpa [#allocation6], 0
    %s38 = scalar_lea.sflag [#allocation6], 1
    %39 = vsyncpa %s38, 0
    loop: start=0, step=1, limit=4
    $region2: #{tpu_custom_call.1} parent=1 // loop_pre_header
      _
    $region3: #{tpu_custom_call.1} parent=1 // loop_header
      %s41 = sphi 0, %s45
      %p42 = scmp.ge.s32.totalorder %s41, 4
      %s48 = sphi 0, %s60
      %s49 = sphi 0, %s56
      %s50 = sphi 0, %s48
      %s51 = sphi 0, %s49
      %s52 = sphi 0, %s50
      %s53 = sphi 0, %s51
      %s63 = sphi 0, %s65
      %s66 = sphi 0, %s63
      %s67 = sphi 0, %s66
      %s83 = sphi 0, %s67
      %s89 = sphi 0, %s91
      %s92 = sphi 0, %s89
      %s93 = sphi 0, %s92
      %s109 = sphi 0, %s93
      %s113 = sphi 0, %s113
      %s115 = sphi 0, %s113
      %s116 = sphi 0, %s115
      %s130 = sphi 0, %s116
      %s134 = sphi 0, %s134
      %s136 = sphi 0, %s134
      %s137 = sphi 0, %s136
      %s151 = sphi 0, %s137
      %s155 = sphi 0, %s155
      %s157 = sphi 0, %s155
      %s158 = sphi 0, %s157
      %s172 = sphi 0, %s158
      %s176 = sphi 0, %s176
      %s178 = sphi 0, %s176
      %s179 = sphi 0, %s178
      %s193 = sphi 0, %s179
      %s197 = sphi 0, %s197
      %s199 = sphi 0, %s197
      %s200 = sphi 0, %s199
      %s214 = sphi 0, %s200
      %s218 = sphi 0, %s218
      %s220 = sphi 0, %s218
      %s221 = sphi 0, %s220
      %s235 = sphi 0, %s221
      %s239 = sphi 0, %s239
      %s241 = sphi 0, %s239
      %s242 = sphi 0, %s241
      %s256 = sphi 0, %s242
      %s260 = sphi 0, %s260
      %s262 = sphi 0, %s260
      %s263 = sphi 0, %s262
      %s277 = sphi 0, %s263
      %s281 = sphi 0, %s281
      %s283 = sphi 0, %s281
      %s284 = sphi 0, %s283
      %s298 = sphi 0, %s284
      %s302 = sphi 0, %s302
      %s304 = sphi 0, %s302
      %s305 = sphi 0, %s304
      %s319 = sphi 0, %s305
      %s323 = sphi 0, %s323
      %s325 = sphi 0, %s323
      %s326 = sphi 0, %s325
      %s340 = sphi 0, %s326
      %s344 = sphi 0, %s344
      %s346 = sphi 0, %s344
      %s347 = sphi 0, %s346
      %s361 = sphi 0, %s347
      %s365 = sphi 0, %s365
      %s367 = sphi 0, %s365
      %s368 = sphi 0, %s367
      %s382 = sphi 0, %s368
      %s386 = sphi 0, %s386
      %s388 = sphi 0, %s386
      %s389 = sphi 0, %s388
      %s403 = sphi 0, %s389
      %s407 = sphi 0, %s407
      %s409 = sphi 0, %s407
      %s410 = sphi 0, %s409
      %s424 = sphi 0, %s410
      %s428 = sphi 0, %s428
      %s430 = sphi 0, %s428
      %s431 = sphi 0, %s430
      %s445 = sphi 0, %s431
      %s449 = sphi 0, %s449
      %s451 = sphi 0, %s449
      %s452 = sphi 0, %s451
      %s466 = sphi 0, %s452
      %s470 = sphi 0, %s470
      %s472 = sphi 0, %s470
      %s473 = sphi 0, %s472
      %s487 = sphi 0, %s473
      %s491 = sphi 0, %s491
      %s493 = sphi 0, %s491
      %s494 = sphi 0, %s493
      %s508 = sphi 0, %s494
      %s512 = sphi 0, %s512
      %s514 = sphi 0, %s512
      %s515 = sphi 0, %s514
      %s529 = sphi 0, %s515
      %s537 = sphi 0, %s539
      %s540 = sphi 0, %s537
      %s541 = sphi 0, %s540
      %s557 = sphi 0, %s541
    $region4: #{tpu_custom_call.1} parent=1 // loop_header_branch
      %44 = sbr.rel (%p42) target = $region8
    $region5: #{tpu_custom_call.1} parent=1 // loop_body
      %s46 = ssub.s32 %s41, 1
      %s47 = ssub.s32 %s41, 2
      %s54 = sadd.s32 1, %s49
      %p55 = scmp.ge.s32.totalorder %s54, 1
      %s56 = scalar_select %p55, 0, %s54
      %s57 = sadd.s32 1, %s48
      %s58 = scalar_select %p55, %s57, %s48
      %p59 = scmp.ge.s32.totalorder %s58, 2
      %s60 = scalar_select %p59, 0, %s58
      %s61 = ssub.s32 %s48, %s60
      %p62 = scmp.eq.s32.totalorder %s61, 0
      %s64 = sadd.s32 %s63, 1
      %s65 = scalar_select %p62, %s63, %s64
      %p68 = pneg %p62
      %p69 = scmp.eq.s32.totalorder %s41, 1
      %p70 = por %p68, %p69
      %p71 = scmp.ne.s32.totalorder %s63, %s66
      %p72 = scmp.eq.s32.totalorder %s41, 0
      %p73 = por %p71, %p72
      %p74 = scmp.ne.s32.totalorder %s63, %s66
      %p75 = scmp.eq.s32.totalorder %s46, 1
      %p76 = por %p74, %p75
      %p77 = scmp.ne.s32.totalorder %s66, %s67
      %p78 = scmp.eq.s32.totalorder %s46, 0
      %p79 = por %p77, %p78
      %p80 = scmp.ne.s32.totalorder %s66, %s67
      %p81 = scmp.eq.s32.totalorder %s47, 1
      %p82 = por %p80, %p81
      %p84 = scmp.ne.s32.totalorder %s67, %s83
      %p85 = scmp.eq.s32.totalorder %s47, 0
      %p86 = por %p84, %p85
      %s87 = ssub.s32 %s48, %s60
      %p88 = scmp.eq.s32.totalorder %s87, 0
      %s90 = sadd.s32 %s89, 1
      %s91 = scalar_select %p88, %s89, %s90
      %p94 = pneg %p88
      %p95 = scmp.eq.s32.totalorder %s41, 1
      %p96 = por %p94, %p95
      %p97 = scmp.ne.s32.totalorder %s89, %s92
      %p98 = scmp.eq.s32.totalorder %s41, 0
      %p99 = por %p97, %p98
      %p100 = scmp.ne.s32.totalorder %s89, %s92
      %p101 = scmp.eq.s32.totalorder %s46, 1
      %p102 = por %p100, %p101
      %p103 = scmp.ne.s32.totalorder %s92, %s93
      %p104 = scmp.eq.s32.totalorder %s46, 0
      %p105 = por %p103, %p104
      %p106 = scmp.ne.s32.totalorder %s92, %s93
      %p107 = scmp.eq.s32.totalorder %s47, 1
      %p108 = por %p106, %p107
      %p110 = scmp.ne.s32.totalorder %s93, %s109
      %p111 = scmp.eq.s32.totalorder %s47, 0
      %p112 = por %p110, %p111
      %s114 = sadd.s32 %s113, 1
      %p117 = scmp.eq.s32.totalorder %s41, 1
      %p118 = scmp.ne.s32.totalorder %s113, %s115
      %p119 = scmp.eq.s32.totalorder %s41, 0
      %p120 = por %p118, %p119
      %p121 = scmp.ne.s32.totalorder %s113, %s115
      %p122 = scmp.eq.s32.totalorder %s46, 1
      %p123 = por %p121, %p122
      %p124 = scmp.ne.s32.totalorder %s115, %s116
      %p125 = scmp.eq.s32.totalorder %s46, 0
      %p126 = por %p124, %p125
      %p127 = scmp.ne.s32.totalorder %s115, %s116
      %p128 = scmp.eq.s32.totalorder %s47, 1
      %p129 = por %p127, %p128
      %p131 = scmp.ne.s32.totalorder %s116, %s130
      %p132 = scmp.eq.s32.totalorder %s47, 0
      %p133 = por %p131, %p132
      %s135 = sadd.s32 %s134, 1
      %p138 = scmp.eq.s32.totalorder %s41, 1
      %p139 = scmp.ne.s32.totalorder %s134, %s136
      %p140 = scmp.eq.s32.totalorder %s41, 0
      %p141 = por %p139, %p140
      %p142 = scmp.ne.s32.totalorder %s134, %s136
      %p143 = scmp.eq.s32.totalorder %s46, 1
      %p144 = por %p142, %p143
      %p145 = scmp.ne.s32.totalorder %s136, %s137
      %p146 = scmp.eq.s32.totalorder %s46, 0
      %p147 = por %p145, %p146
      %p148 = scmp.ne.s32.totalorder %s136, %s137
      %p149 = scmp.eq.s32.totalorder %s47, 1
      %p150 = por %p148, %p149
      %p152 = scmp.ne.s32.totalorder %s137, %s151
      %p153 = scmp.eq.s32.totalorder %s47, 0
      %p154 = por %p152, %p153
      %s156 = sadd.s32 %s155, 1
      %p159 = scmp.eq.s32.totalorder %s41, 1
      %p160 = scmp.ne.s32.totalorder %s155, %s157
      %p161 = scmp.eq.s32.totalorder %s41, 0
      %p162 = por %p160, %p161
      %p163 = scmp.ne.s32.totalorder %s155, %s157
      %p164 = scmp.eq.s32.totalorder %s46, 1
      %p165 = por %p163, %p164
      %p166 = scmp.ne.s32.totalorder %s157, %s158
      %p167 = scmp.eq.s32.totalorder %s46, 0
      %p168 = por %p166, %p167
      %p169 = scmp.ne.s32.totalorder %s157, %s158
      %p170 = scmp.eq.s32.totalorder %s47, 1
      %p171 = por %p169, %p170
      %p173 = scmp.ne.s32.totalorder %s158, %s172
      %p174 = scmp.eq.s32.totalorder %s47, 0
      %p175 = por %p173, %p174
      %s177 = sadd.s32 %s176, 1
      %p180 = scmp.eq.s32.totalorder %s41, 1
      %p181 = scmp.ne.s32.totalorder %s176, %s178
      %p182 = scmp.eq.s32.totalorder %s41, 0
      %p183 = por %p181, %p182
      %p184 = scmp.ne.s32.totalorder %s176, %s178
      %p185 = scmp.eq.s32.totalorder %s46, 1
      %p186 = por %p184, %p185
      %p187 = scmp.ne.s32.totalorder %s178, %s179
      %p188 = scmp.eq.s32.totalorder %s46, 0
      %p189 = por %p187, %p188
      %p190 = scmp.ne.s32.totalorder %s178, %s179
      %p191 = scmp.eq.s32.totalorder %s47, 1
      %p192 = por %p190, %p191
      %p194 = scmp.ne.s32.totalorder %s179, %s193
      %p195 = scmp.eq.s32.totalorder %s47, 0
      %p196 = por %p194, %p195
      %s198 = sadd.s32 %s197, 1
      %p201 = scmp.eq.s32.totalorder %s41, 1
      %p202 = scmp.ne.s32.totalorder %s197, %s199
      %p203 = scmp.eq.s32.totalorder %s41, 0
      %p204 = por %p202, %p203
      %p205 = scmp.ne.s32.totalorder %s197, %s199
      %p206 = scmp.eq.s32.totalorder %s46, 1
      %p207 = por %p205, %p206
      %p208 = scmp.ne.s32.totalorder %s199, %s200
      %p209 = scmp.eq.s32.totalorder %s46, 0
      %p210 = por %p208, %p209
      %p211 = scmp.ne.s32.totalorder %s199, %s200
      %p212 = scmp.eq.s32.totalorder %s47, 1
      %p213 = por %p211, %p212
      %p215 = scmp.ne.s32.totalorder %s200, %s214
      %p216 = scmp.eq.s32.totalorder %s47, 0
      %p217 = por %p215, %p216
      %s219 = sadd.s32 %s218, 1
      %p222 = scmp.eq.s32.totalorder %s41, 1
      %p223 = scmp.ne.s32.totalorder %s218, %s220
      %p224 = scmp.eq.s32.totalorder %s41, 0
      %p225 = por %p223, %p224
      %p226 = scmp.ne.s32.totalorder %s218, %s220
      %p227 = scmp.eq.s32.totalorder %s46, 1
      %p228 = por %p226, %p227
      %p229 = scmp.ne.s32.totalorder %s220, %s221
      %p230 = scmp.eq.s32.totalorder %s46, 0
      %p231 = por %p229, %p230
      %p232 = scmp.ne.s32.totalorder %s220, %s221
      %p233 = scmp.eq.s32.totalorder %s47, 1
      %p234 = por %p232, %p233
      %p236 = scmp.ne.s32.totalorder %s221, %s235
      %p237 = scmp.eq.s32.totalorder %s47, 0
      %p238 = por %p236, %p237
      %s240 = sadd.s32 %s239, 1
      %p243 = scmp.eq.s32.totalorder %s41, 1
      %p244 = scmp.ne.s32.totalorder %s239, %s241
      %p245 = scmp.eq.s32.totalorder %s41, 0
      %p246 = por %p244, %p245
      %p247 = scmp.ne.s32.totalorder %s239, %s241
      %p248 = scmp.eq.s32.totalorder %s46, 1
      %p249 = por %p247, %p248
      %p250 = scmp.ne.s32.totalorder %s241, %s242
      %p251 = scmp.eq.s32.totalorder %s46, 0
      %p252 = por %p250, %p251
      %p253 = scmp.ne.s32.totalorder %s241, %s242
      %p254 = scmp.eq.s32.totalorder %s47, 1
      %p255 = por %p253, %p254
      %p257 = scmp.ne.s32.totalorder %s242, %s256
      %p258 = scmp.eq.s32.totalorder %s47, 0
      %p259 = por %p257, %p258
      %s261 = sadd.s32 %s260, 1
      %p264 = scmp.eq.s32.totalorder %s41, 1
      %p265 = scmp.ne.s32.totalorder %s260, %s262
      %p266 = scmp.eq.s32.totalorder %s41, 0
      %p267 = por %p265, %p266
      %p268 = scmp.ne.s32.totalorder %s260, %s262
      %p269 = scmp.eq.s32.totalorder %s46, 1
      %p270 = por %p268, %p269
      %p271 = scmp.ne.s32.totalorder %s262, %s263
      %p272 = scmp.eq.s32.totalorder %s46, 0
      %p273 = por %p271, %p272
      %p274 = scmp.ne.s32.totalorder %s262, %s263
      %p275 = scmp.eq.s32.totalorder %s47, 1
      %p276 = por %p274, %p275
      %p278 = scmp.ne.s32.totalorder %s263, %s277
      %p279 = scmp.eq.s32.totalorder %s47, 0
      %p280 = por %p278, %p279
      %s282 = sadd.s32 %s281, 1
      %p285 = scmp.eq.s32.totalorder %s41, 1
      %p286 = scmp.ne.s32.totalorder %s281, %s283
      %p287 = scmp.eq.s32.totalorder %s41, 0
      %p288 = por %p286, %p287
      %p289 = scmp.ne.s32.totalorder %s281, %s283
      %p290 = scmp.eq.s32.totalorder %s46, 1
      %p291 = por %p289, %p290
      %p292 = scmp.ne.s32.totalorder %s283, %s284
      %p293 = scmp.eq.s32.totalorder %s46, 0
      %p294 = por %p292, %p293
      %p295 = scmp.ne.s32.totalorder %s283, %s284
      %p296 = scmp.eq.s32.totalorder %s47, 1
      %p297 = por %p295, %p296
      %p299 = scmp.ne.s32.totalorder %s284, %s298
      %p300 = scmp.eq.s32.totalorder %s47, 0
      %p301 = por %p299, %p300
      %s303 = sadd.s32 %s302, 1
      %p306 = scmp.eq.s32.totalorder %s41, 1
      %p307 = scmp.ne.s32.totalorder %s302, %s304
      %p308 = scmp.eq.s32.totalorder %s41, 0
      %p309 = por %p307, %p308
      %p310 = scmp.ne.s32.totalorder %s302, %s304
      %p311 = scmp.eq.s32.totalorder %s46, 1
      %p312 = por %p310, %p311
      %p313 = scmp.ne.s32.totalorder %s304, %s305
      %p314 = scmp.eq.s32.totalorder %s46, 0
      %p315 = por %p313, %p314
      %p316 = scmp.ne.s32.totalorder %s304, %s305
      %p317 = scmp.eq.s32.totalorder %s47, 1
      %p318 = por %p316, %p317
      %p320 = scmp.ne.s32.totalorder %s305, %s319
      %p321 = scmp.eq.s32.totalorder %s47, 0
      %p322 = por %p320, %p321
      %s324 = sadd.s32 %s323, 1
      %p327 = scmp.eq.s32.totalorder %s41, 1
      %p328 = scmp.ne.s32.totalorder %s323, %s325
      %p329 = scmp.eq.s32.totalorder %s41, 0
      %p330 = por %p328, %p329
      %p331 = scmp.ne.s32.totalorder %s323, %s325
      %p332 = scmp.eq.s32.totalorder %s46, 1
      %p333 = por %p331, %p332
      %p334 = scmp.ne.s32.totalorder %s325, %s326
      %p335 = scmp.eq.s32.totalorder %s46, 0
      %p336 = por %p334, %p335
      %p337 = scmp.ne.s32.totalorder %s325, %s326
      %p338 = scmp.eq.s32.totalorder %s47, 1
      %p339 = por %p337, %p338
      %p341 = scmp.ne.s32.totalorder %s326, %s340
      %p342 = scmp.eq.s32.totalorder %s47, 0
      %p343 = por %p341, %p342
      %s345 = sadd.s32 %s344, 1
      %p348 = scmp.eq.s32.totalorder %s41, 1
      %p349 = scmp.ne.s32.totalorder %s344, %s346
      %p350 = scmp.eq.s32.totalorder %s41, 0
      %p351 = por %p349, %p350
      %p352 = scmp.ne.s32.totalorder %s344, %s346
      %p353 = scmp.eq.s32.totalorder %s46, 1
      %p354 = por %p352, %p353
      %p355 = scmp.ne.s32.totalorder %s346, %s347
      %p356 = scmp.eq.s32.totalorder %s46, 0
      %p357 = por %p355, %p356
      %p358 = scmp.ne.s32.totalorder %s346, %s347
      %p359 = scmp.eq.s32.totalorder %s47, 1
      %p360 = por %p358, %p359
      %p362 = scmp.ne.s32.totalorder %s347, %s361
      %p363 = scmp.eq.s32.totalorder %s47, 0
      %p364 = por %p362, %p363
      %s366 = sadd.s32 %s365, 1
      %p369 = scmp.eq.s32.totalorder %s41, 1
      %p370 = scmp.ne.s32.totalorder %s365, %s367
      %p371 = scmp.eq.s32.totalorder %s41, 0
      %p372 = por %p370, %p371
      %p373 = scmp.ne.s32.totalorder %s365, %s367
      %p374 = scmp.eq.s32.totalorder %s46, 1
      %p375 = por %p373, %p374
      %p376 = scmp.ne.s32.totalorder %s367, %s368
      %p377 = scmp.eq.s32.totalorder %s46, 0
      %p378 = por %p376, %p377
      %p379 = scmp.ne.s32.totalorder %s367, %s368
      %p380 = scmp.eq.s32.totalorder %s47, 1
      %p381 = por %p379, %p380
      %p383 = scmp.ne.s32.totalorder %s368, %s382
      %p384 = scmp.eq.s32.totalorder %s47, 0
      %p385 = por %p383, %p384
      %s387 = sadd.s32 %s386, 1
      %p390 = scmp.eq.s32.totalorder %s41, 1
      %p391 = scmp.ne.s32.totalorder %s386, %s388
      %p392 = scmp.eq.s32.totalorder %s41, 0
      %p393 = por %p391, %p392
      %p394 = scmp.ne.s32.totalorder %s386, %s388
      %p395 = scmp.eq.s32.totalorder %s46, 1
      %p396 = por %p394, %p395
      %p397 = scmp.ne.s32.totalorder %s388, %s389
      %p398 = scmp.eq.s32.totalorder %s46, 0
      %p399 = por %p397, %p398
      %p400 = scmp.ne.s32.totalorder %s388, %s389
      %p401 = scmp.eq.s32.totalorder %s47, 1
      %p402 = por %p400, %p401
      %p404 = scmp.ne.s32.totalorder %s389, %s403
      %p405 = scmp.eq.s32.totalorder %s47, 0
      %p406 = por %p404, %p405
      %s408 = sadd.s32 %s407, 1
      %p411 = scmp.eq.s32.totalorder %s41, 1
      %p412 = scmp.ne.s32.totalorder %s407, %s409
      %p413 = scmp.eq.s32.totalorder %s41, 0
      %p414 = por %p412, %p413
      %p415 = scmp.ne.s32.totalorder %s407, %s409
      %p416 = scmp.eq.s32.totalorder %s46, 1
      %p417 = por %p415, %p416
      %p418 = scmp.ne.s32.totalorder %s409, %s410
      %p419 = scmp.eq.s32.totalorder %s46, 0
      %p420 = por %p418, %p419
      %p421 = scmp.ne.s32.totalorder %s409, %s410
      %p422 = scmp.eq.s32.totalorder %s47, 1
      %p423 = por %p421, %p422
      %p425 = scmp.ne.s32.totalorder %s410, %s424
      %p426 = scmp.eq.s32.totalorder %s47, 0
      %p427 = por %p425, %p426
      %s429 = sadd.s32 %s428, 1
      %p432 = scmp.eq.s32.totalorder %s41, 1
      %p433 = scmp.ne.s32.totalorder %s428, %s430
      %p434 = scmp.eq.s32.totalorder %s41, 0
      %p435 = por %p433, %p434
      %p436 = scmp.ne.s32.totalorder %s428, %s430
      %p437 = scmp.eq.s32.totalorder %s46, 1
      %p438 = por %p436, %p437
      %p439 = scmp.ne.s32.totalorder %s430, %s431
      %p440 = scmp.eq.s32.totalorder %s46, 0
      %p441 = por %p439, %p440
      %p442 = scmp.ne.s32.totalorder %s430, %s431
      %p443 = scmp.eq.s32.totalorder %s47, 1
      %p444 = por %p442, %p443
      %p446 = scmp.ne.s32.totalorder %s431, %s445
      %p447 = scmp.eq.s32.totalorder %s47, 0
      %p448 = por %p446, %p447
      %s450 = sadd.s32 %s449, 1
      %p453 = scmp.eq.s32.totalorder %s41, 1
      %p454 = scmp.ne.s32.totalorder %s449, %s451
      %p455 = scmp.eq.s32.totalorder %s41, 0
      %p456 = por %p454, %p455
      %p457 = scmp.ne.s32.totalorder %s449, %s451
      %p458 = scmp.eq.s32.totalorder %s46, 1
      %p459 = por %p457, %p458
      %p460 = scmp.ne.s32.totalorder %s451, %s452
      %p461 = scmp.eq.s32.totalorder %s46, 0
      %p462 = por %p460, %p461
      %p463 = scmp.ne.s32.totalorder %s451, %s452
      %p464 = scmp.eq.s32.totalorder %s47, 1
      %p465 = por %p463, %p464
      %p467 = scmp.ne.s32.totalorder %s452, %s466
      %p468 = scmp.eq.s32.totalorder %s47, 0
      %p469 = por %p467, %p468
      %s471 = sadd.s32 %s470, 1
      %p474 = scmp.eq.s32.totalorder %s41, 1
      %p475 = scmp.ne.s32.totalorder %s470, %s472
      %p476 = scmp.eq.s32.totalorder %s41, 0
      %p477 = por %p475, %p476
      %p478 = scmp.ne.s32.totalorder %s470, %s472
      %p479 = scmp.eq.s32.totalorder %s46, 1
      %p480 = por %p478, %p479
      %p481 = scmp.ne.s32.totalorder %s472, %s473
      %p482 = scmp.eq.s32.totalorder %s46, 0
      %p483 = por %p481, %p482
      %p484 = scmp.ne.s32.totalorder %s472, %s473
      %p485 = scmp.eq.s32.totalorder %s47, 1
      %p486 = por %p484, %p485
      %p488 = scmp.ne.s32.totalorder %s473, %s487
      %p489 = scmp.eq.s32.totalorder %s47, 0
      %p490 = por %p488, %p489
      %s492 = sadd.s32 %s491, 1
      %p495 = scmp.eq.s32.totalorder %s41, 1
      %p496 = scmp.ne.s32.totalorder %s491, %s493
      %p497 = scmp.eq.s32.totalorder %s41, 0
      %p498 = por %p496, %p497
      %p499 = scmp.ne.s32.totalorder %s491, %s493
      %p500 = scmp.eq.s32.totalorder %s46, 1
      %p501 = por %p499, %p500
      %p502 = scmp.ne.s32.totalorder %s493, %s494
      %p503 = scmp.eq.s32.totalorder %s46, 0
      %p504 = por %p502, %p503
      %p505 = scmp.ne.s32.totalorder %s493, %s494
      %p506 = scmp.eq.s32.totalorder %s47, 1
      %p507 = por %p505, %p506
      %p509 = scmp.ne.s32.totalorder %s494, %s508
      %p510 = scmp.eq.s32.totalorder %s47, 0
      %p511 = por %p509, %p510
      %s513 = sadd.s32 %s512, 1
      %p516 = scmp.eq.s32.totalorder %s41, 1
      %p517 = scmp.ne.s32.totalorder %s512, %s514
      %p518 = scmp.eq.s32.totalorder %s41, 0
      %p519 = por %p517, %p518
      %p520 = scmp.ne.s32.totalorder %s512, %s514
      %p521 = scmp.eq.s32.totalorder %s46, 1
      %p522 = por %p520, %p521
      %p523 = scmp.ne.s32.totalorder %s514, %s515
      %p524 = scmp.eq.s32.totalorder %s46, 0
      %p525 = por %p523, %p524
      %p526 = scmp.ne.s32.totalorder %s514, %s515
      %p527 = scmp.eq.s32.totalorder %s47, 1
      %p528 = por %p526, %p527
      %p530 = scmp.ne.s32.totalorder %s515, %s529
      %p531 = scmp.eq.s32.totalorder %s47, 0
      %p532 = por %p530, %p531
      %s533 = ssub.s32 %s48, %s60
      %s534 = ssub.s32 %s49, %s56
      %s535 = sor.u32 %s533, %s534
      %p536 = scmp.eq.s32.totalorder %s535, 0
      %s538 = sadd.s32 %s537, 1
      %s539 = scalar_select %p536, %s537, %s538
      %p542 = pneg %p536
      %p543 = scmp.eq.s32.totalorder %s41, 1
      %p544 = por %p542, %p543
      %p545 = scmp.ne.s32.totalorder %s537, %s540
      %p546 = scmp.eq.s32.totalorder %s41, 0
      %p547 = por %p545, %p546
      %p548 = scmp.ne.s32.totalorder %s537, %s540
      %p549 = scmp.eq.s32.totalorder %s46, 1
      %p550 = por %p548, %p549
      %p551 = scmp.ne.s32.totalorder %s540, %s541
      %p552 = scmp.eq.s32.totalorder %s46, 0
      %p553 = por %p551, %p552
      %p554 = scmp.ne.s32.totalorder %s540, %s541
      %p555 = scmp.eq.s32.totalorder %s47, 1
      %p556 = por %p554, %p555
      %p558 = scmp.ne.s32.totalorder %s541, %s557
      %p559 = scmp.eq.s32.totalorder %s47, 0
      %p560 = por %p558, %p559
      %p561 = scmp.le.s32.totalorder 1, %s41
      %p562 = scmp.lt.s32.totalorder %s41, 3
      %p563 = pnand %p561, %p562
      %p564 = pneg %p563
      // Predicated region
      $region9: #{tpu_custom_call.1} parent=5 // pred_check
        _
      $region10: #{tpu_custom_call.1} parent=5 // pred_check_branch
        %566 = sbr.rel (%p563) target = $region12
      $region11: #{tpu_custom_call.1} parent=5 // pred_region
        %s567 = ssub.s32 %s41, 1
        // Predicated region
        $region13: #{tpu_custom_call.1} parent=11 // pred_check
          %p568 = pneg %p126
        $region14: #{tpu_custom_call.1} parent=11 // pred_check_branch
          %570 = sbr.rel (%p568) target = $region16
        $region15: #{tpu_custom_call.1} parent=11 // pred_region
          _
        $region16: #{tpu_custom_call.1} parent=11 // pred_fallthru
          _
        // Predicated region
        $region17: #{tpu_custom_call.1} parent=11 // pred_check
          %p571 = pneg %p147
        $region18: #{tpu_custom_call.1} parent=11 // pred_check_branch
          %573 = sbr.rel (%p571) target = $region20
        $region19: #{tpu_custom_call.1} parent=11 // pred_region
          %575 = vsyncadd [#allocation8], 0
          %s577 = sshll.u32 %s3, 4
          %s578 = int_to_ptr.hbm [resolvable:$true] %s577
          %s579 = sshll.u32 [#allocation7], 4
          %s580 = int_to_ptr.vmem [resolvable:$true] %s579
          %582 = dma.hbm_to_vmem [thread:$0]  %s578, 16, %s580, [#allocation8]
        $region20: #{tpu_custom_call.1} parent=11 // pred_fallthru
          _
        // Predicated region
        $region21: #{tpu_custom_call.1} parent=11 // pred_check
          %p583 = pneg %p168
        $region22: #{tpu_custom_call.1} parent=11 // pred_check_branch
          %585 = sbr.rel (%p583) target = $region24
        $region23: #{tpu_custom_call.1} parent=11 // pred_region
          %587 = vsyncadd [#allocation8], 0
          %s589 = sshll.u32 %s4, 4
          %s590 = int_to_ptr.hbm [resolvable:$true] %s589
          %s591 = sshll.u32 [#allocation9], 4
          %s592 = int_to_ptr.vmem [resolvable:$true] %s591
          %594 = dma.hbm_to_vmem [thread:$0]  %s590, 16, %s592, [#allocation8]
        $region24: #{tpu_custom_call.1} parent=11 // pred_fallthru
          _
        // Predicated region
        $region25: #{tpu_custom_call.1} parent=11 // pred_check
          %p595 = pneg %p189
        $region26: #{tpu_custom_call.1} parent=11 // pred_check_branch
          %597 = sbr.rel (%p595) target = $region28
        $region27: #{tpu_custom_call.1} parent=11 // pred_region
          %599 = vsyncadd [#allocation11], 0
          %s601 = sshll.u32 %s5, 4
          %s602 = int_to_ptr.hbm [resolvable:$true] %s601
          %s603 = sshll.u32 [#allocation10], 4
          %s604 = int_to_ptr.vmem [resolvable:$true] %s603
          %606 = dma.hbm_to_vmem [thread:$0]  %s602, 16, %s604, [#allocation11]
        $region28: #{tpu_custom_call.1} parent=11 // pred_fallthru
          _
        // Predicated region
        $region29: #{tpu_custom_call.1} parent=11 // pred_check
          %p607 = pneg %p210
        $region30: #{tpu_custom_call.1} parent=11 // pred_check_branch
          %609 = sbr.rel (%p607) target = $region32
        $region31: #{tpu_custom_call.1} parent=11 // pred_region
          _
        $region32: #{tpu_custom_call.1} parent=11 // pred_fallthru
          _
        // Predicated region
        $region33: #{tpu_custom_call.1} parent=11 // pred_check
          %p610 = pneg %p231
        $region34: #{tpu_custom_call.1} parent=11 // pred_check_branch
          %612 = sbr.rel (%p610) target = $region36
        $region35: #{tpu_custom_call.1} parent=11 // pred_region
          %614 = vsyncadd [#allocation11], 0
          %s616 = sshll.u32 %s7, 4
          %s617 = int_to_ptr.hbm [resolvable:$true] %s616
          %s618 = sshll.u32 [#allocation12], 4
          %s619 = int_to_ptr.vmem [resolvable:$true] %s618
          %621 = dma.hbm_to_vmem [thread:$0]  %s617, 16, %s619, [#allocation11]
        $region36: #{tpu_custom_call.1} parent=11 // pred_fallthru
          _
        // Predicated region
        $region37: #{tpu_custom_call.1} parent=11 // pred_check
          %p622 = pneg %p252
        $region38: #{tpu_custom_call.1} parent=11 // pred_check_branch
          %624 = sbr.rel (%p622) target = $region40
        $region39: #{tpu_custom_call.1} parent=11 // pred_region
          _
        $region40: #{tpu_custom_call.1} parent=11 // pred_fallthru
          _
        // Predicated region
        $region41: #{tpu_custom_call.1} parent=11 // pred_check
          %p625 = pneg %p273
        $region42: #{tpu_custom_call.1} parent=11 // pred_check_branch
          %627 = sbr.rel (%p625) target = $region44
        $region43: #{tpu_custom_call.1} parent=11 // pred_region
          %629 = vsyncadd [#allocation14], 0
          %s631 = sshll.u32 %s9, 4
          %s632 = int_to_ptr.hbm [resolvable:$true] %s631
          %s633 = sshll.u32 [#allocation13], 4
          %s634 = int_to_ptr.vmem [resolvable:$true] %s633
          %636 = dma.hbm_to_vmem [thread:$0]  %s632, 16, %s634, [#allocation14]
        $region44: #{tpu_custom_call.1} parent=11 // pred_fallthru
          _
        // Predicated region
        $region45: #{tpu_custom_call.1} parent=11 // pred_check
          %p637 = pneg %p294
        $region46: #{tpu_custom_call.1} parent=11 // pred_check_branch
          %639 = sbr.rel (%p637) target = $region48
        $region47: #{tpu_custom_call.1} parent=11 // pred_region
          %641 = vsyncadd [#allocation14], 0
          %s642 = sshll.u32 %s10, 4
          %s643 = int_to_ptr.hbm [resolvable:$true] %s642
          %s644 = sshll.u32 [#allocation15], 4
          %s645 = int_to_ptr.vmem [resolvable:$true] %s644
          %650 = dma.hbm_to_vmem [thread:$0]  %s643, 256, %s645, [#allocation14], 64, 64, 4
        $region48: #{tpu_custom_call.1} parent=11 // pred_fallthru
          _
        // Predicated region
        $region49: #{tpu_custom_call.1} parent=11 // pred_check
          %p651 = pneg %p315
        $region50: #{tpu_custom_call.1} parent=11 // pred_check_branch
          %653 = sbr.rel (%p651) target = $region52
        $region51: #{tpu_custom_call.1} parent=11 // pred_region
          %655 = vsyncadd [#allocation17], 0
          %s657 = sshll.u32 %s11, 4
          %s658 = int_to_ptr.hbm [resolvable:$true] %s657
          %s659 = sshll.u32 [#allocation16], 4
          %s660 = int_to_ptr.vmem [resolvable:$true] %s659
          %662 = dma.hbm_to_vmem [thread:$0]  %s658, 16, %s660, [#allocation17]
        $region52: #{tpu_custom_call.1} parent=11 // pred_fallthru
          _
        // Predicated region
        $region53: #{tpu_custom_call.1} parent=11 // pred_check
          %p663 = pneg %p336
        $region54: #{tpu_custom_call.1} parent=11 // pred_check_branch
          %665 = sbr.rel (%p663) target = $region56
        $region55: #{tpu_custom_call.1} parent=11 // pred_region
          %667 = vsyncadd [#allocation17], 0
          %s668 = sshll.u32 %s12, 4
          %s669 = int_to_ptr.hbm [resolvable:$true] %s668
          %s670 = sshll.u32 [#allocation18], 4
          %s671 = int_to_ptr.vmem [resolvable:$true] %s670
          %676 = dma.hbm_to_vmem [thread:$0]  %s669, 256, %s671, [#allocation17], 64, 64, 4
        $region56: #{tpu_custom_call.1} parent=11 // pred_fallthru
          _
        // Predicated region
        $region57: #{tpu_custom_call.1} parent=11 // pred_check
          %p677 = pneg %p357
        $region58: #{tpu_custom_call.1} parent=11 // pred_check_branch
          %679 = sbr.rel (%p677) target = $region60
        $region59: #{tpu_custom_call.1} parent=11 // pred_region
          %681 = vsyncadd [#allocation20], 0
          %s683 = sshll.u32 %s13, 4
          %s684 = int_to_ptr.hbm [resolvable:$true] %s683
          %s685 = sshll.u32 [#allocation19], 4
          %s686 = int_to_ptr.vmem [resolvable:$true] %s685
          %688 = dma.hbm_to_vmem [thread:$0]  %s684, 16, %s686, [#allocation20]
        $region60: #{tpu_custom_call.1} parent=11 // pred_fallthru
          _
        // Predicated region
        $region61: #{tpu_custom_call.1} parent=11 // pred_check
          %p689 = pneg %p378
        $region62: #{tpu_custom_call.1} parent=11 // pred_check_branch
          %691 = sbr.rel (%p689) target = $region64
        $region63: #{tpu_custom_call.1} parent=11 // pred_region
          %693 = vsyncadd [#allocation20], 0
          %s695 = sshll.u32 %s14, 4
          %s696 = int_to_ptr.hbm [resolvable:$true] %s695
          %s697 = sshll.u32 [#allocation21], 4
          %s698 = int_to_ptr.vmem [resolvable:$true] %s697
          %700 = dma.hbm_to_vmem [thread:$0]  %s696, 16, %s698, [#allocation20]
        $region64: #{tpu_custom_call.1} parent=11 // pred_fallthru
          _
        // Predicated region
        $region65: #{tpu_custom_call.1} parent=11 // pred_check
          %p701 = pneg %p399
        $region66: #{tpu_custom_call.1} parent=11 // pred_check_branch
          %703 = sbr.rel (%p701) target = $region68
        $region67: #{tpu_custom_call.1} parent=11 // pred_region
          %705 = vsyncadd [#allocation23], 0
          %s707 = sshll.u32 %s15, 4
          %s708 = int_to_ptr.hbm [resolvable:$true] %s707
          %s709 = sshll.u32 [#allocation22], 4
          %s710 = int_to_ptr.vmem [resolvable:$true] %s709
          %712 = dma.hbm_to_vmem [thread:$0]  %s708, 16, %s710, [#allocation23]
        $region68: #{tpu_custom_call.1} parent=11 // pred_fallthru
          _
        // Predicated region
        $region69: #{tpu_custom_call.1} parent=11 // pred_check
          %p713 = pneg %p420
        $region70: #{tpu_custom_call.1} parent=11 // pred_check_branch
          %715 = sbr.rel (%p713) target = $region72
        $region71: #{tpu_custom_call.1} parent=11 // pred_region
          %717 = vsyncadd [#allocation23], 0
          %s718 = sshll.u32 %s16, 4
          %s719 = int_to_ptr.hbm [resolvable:$true] %s718
          %s720 = sshll.u32 [#allocation24], 4
          %s721 = int_to_ptr.vmem [resolvable:$true] %s720
          %726 = dma.hbm_to_vmem [thread:$0]  %s719, 256, %s721, [#allocation23], 64, 64, 4
        $region72: #{tpu_custom_call.1} parent=11 // pred_fallthru
          _
        // Predicated region
        $region73: #{tpu_custom_call.1} parent=11 // pred_check
          %p727 = pneg %p441
        $region74: #{tpu_custom_call.1} parent=11 // pred_check_branch
          %729 = sbr.rel (%p727) target = $region76
        $region75: #{tpu_custom_call.1} parent=11 // pred_region
          %731 = vsyncadd [#allocation26], 0
          %s733 = sshll.u32 %s17, 4
          %s734 = int_to_ptr.hbm [resolvable:$true] %s733
          %s735 = sshll.u32 [#allocation25], 4
          %s736 = int_to_ptr.vmem [resolvable:$true] %s735
          %738 = dma.hbm_to_vmem [thread:$0]  %s734, 16, %s736, [#allocation26]
        $region76: #{tpu_custom_call.1} parent=11 // pred_fallthru
          _
        // Predicated region
        $region77: #{tpu_custom_call.1} parent=11 // pred_check
          %p739 = pneg %p462
        $region78: #{tpu_custom_call.1} parent=11 // pred_check_branch
          %741 = sbr.rel (%p739) target = $region80
        $region79: #{tpu_custom_call.1} parent=11 // pred_region
          _
        $region80: #{tpu_custom_call.1} parent=11 // pred_fallthru
          _
        // Predicated region
        $region81: #{tpu_custom_call.1} parent=11 // pred_check
          %p742 = pneg %p483
        $region82: #{tpu_custom_call.1} parent=11 // pred_check_branch
          %744 = sbr.rel (%p742) target = $region84
        $region83: #{tpu_custom_call.1} parent=11 // pred_region
          _
        $region84: #{tpu_custom_call.1} parent=11 // pred_fallthru
          _
        // Predicated region
        $region85: #{tpu_custom_call.1} parent=11 // pred_check
          %p745 = pneg %p504
        $region86: #{tpu_custom_call.1} parent=11 // pred_check_branch
          %747 = sbr.rel (%p745) target = $region88
        $region87: #{tpu_custom_call.1} parent=11 // pred_region
          _
        $region88: #{tpu_custom_call.1} parent=11 // pred_fallthru
          _
        // Predicated region
        $region89: #{tpu_custom_call.1} parent=11 // pred_check
          %p748 = pneg %p525
        $region90: #{tpu_custom_call.1} parent=11 // pred_check_branch
          %750 = sbr.rel (%p748) target = $region92
        $region91: #{tpu_custom_call.1} parent=11 // pred_region
          _
        $region92: #{tpu_custom_call.1} parent=11 // pred_fallthru
          _
      $region12: #{tpu_custom_call.1} parent=5 // pred_fallthru
        _
      %p751 = scmp.lt.s32.totalorder %s41, 2
      // Predicated region
      $region93: #{tpu_custom_call.1} parent=5 // pred_check
        %p752 = pneg %p751
      $region94: #{tpu_custom_call.1} parent=5 // pred_check_branch
        %754 = sbr.rel (%p752) target = $region96
      $region95: #{tpu_custom_call.1} parent=5 // pred_region
        // Predicated region
        $region97: #{tpu_custom_call.1} parent=95 // pred_check
          %p755 = pneg %p73
        $region98: #{tpu_custom_call.1} parent=95 // pred_check_branch
          %757 = sbr.rel (%p755) target = $region100
        $region99: #{tpu_custom_call.1} parent=95 // pred_region
          %p758 = scmp.lt.s32.totalorder %s48, 1
          %s759 = scalar_select %p758, %s48, 1
          %s760 = smul.addr %s759, 8
          %s761 = scalar_lea.vmem %s0, %s760
        $region100: #{tpu_custom_call.1} parent=95 // pred_fallthru
          _
        // Predicated region
        $region101: #{tpu_custom_call.1} parent=95 // pred_check
          %p762 = pneg %p99
        $region102: #{tpu_custom_call.1} parent=95 // pred_check_branch
          %764 = sbr.rel (%p762) target = $region104
        $region103: #{tpu_custom_call.1} parent=95 // pred_region
          %s765 = sand.u32 %s89, 1
          %s766 = scalar_lea.sflag [#allocation5], %s765
          %s767 = sand.u32 %s89, 1
          %s768 = scalar_lea.vmem [#allocation4], %s767
          %770 = vsyncadd %s766, 0
          %s771 = scalar_lea.hbm %s1, %s48
          %s773 = sshll.u32 %s771, 4
          %s774 = int_to_ptr.hbm [resolvable:$true] %s773
          %s775 = sshll.u32 %s768, 4
          %s776 = int_to_ptr.vmem [resolvable:$true] %s775
          %778 = dma.hbm_to_vmem [thread:$0]  %s774, 16, %s776, %s766
        $region104: #{tpu_custom_call.1} parent=95 // pred_fallthru
          _
      $region96: #{tpu_custom_call.1} parent=5 // pred_fallthru
        _
      %p779 = scmp.le.s32.totalorder 1, %s41
      %p780 = scmp.lt.s32.totalorder %s41, 3
      %p781 = pnand %p779, %p780
      %p782 = pneg %p781
      // Predicated region
      $region105: #{tpu_custom_call.1} parent=5 // pred_check
        _
      $region106: #{tpu_custom_call.1} parent=5 // pred_check_branch
        %784 = sbr.rel (%p781) target = $region108
      $region107: #{tpu_custom_call.1} parent=5 // pred_region
        %s785 = ssub.s32 %s41, 1
        %s786 = sand.u32 %s92, 1
        %s787 = scalar_lea.sflag [#allocation5], %s786
        %s788 = sand.u32 %s92, 1
        %s789 = scalar_lea.vmem [#allocation4], %s788
        // Predicated region
        $region109: #{tpu_custom_call.1} parent=107 // pred_check
          %p790 = pneg %p105
        $region110: #{tpu_custom_call.1} parent=107 // pred_check_branch
          %792 = sbr.rel (%p790) target = $region112
        $region111: #{tpu_custom_call.1} parent=107 // pred_region
          %794 = dma.done %s787, 16
        $region112: #{tpu_custom_call.1} parent=107 // pred_fallthru
          _
        // Predicated region
        $region113: #{tpu_custom_call.1} parent=107 // pred_check
          %p795 = pneg %p147
        $region114: #{tpu_custom_call.1} parent=107 // pred_check_branch
          %797 = sbr.rel (%p795) target = $region116
        $region115: #{tpu_custom_call.1} parent=107 // pred_region
          %799 = dma.done [#allocation8], 16
        $region116: #{tpu_custom_call.1} parent=107 // pred_fallthru
          _
        // Predicated region
        $region117: #{tpu_custom_call.1} parent=107 // pred_check
          %p800 = pneg %p168
        $region118: #{tpu_custom_call.1} parent=107 // pred_check_branch
          %802 = sbr.rel (%p800) target = $region120
        $region119: #{tpu_custom_call.1} parent=107 // pred_region
          %804 = dma.done [#allocation8], 16
        $region120: #{tpu_custom_call.1} parent=107 // pred_fallthru
          _
        // Predicated region
        $region121: #{tpu_custom_call.1} parent=107 // pred_check
          %p805 = pneg %p189
        $region122: #{tpu_custom_call.1} parent=107 // pred_check_branch
          %807 = sbr.rel (%p805) target = $region124
        $region123: #{tpu_custom_call.1} parent=107 // pred_region
          %809 = dma.done [#allocation11], 16
        $region124: #{tpu_custom_call.1} parent=107 // pred_fallthru
          _
        // Predicated region
        $region125: #{tpu_custom_call.1} parent=107 // pred_check
          %p810 = pneg %p231
        $region126: #{tpu_custom_call.1} parent=107 // pred_check_branch
          %812 = sbr.rel (%p810) target = $region128
        $region127: #{tpu_custom_call.1} parent=107 // pred_region
          %814 = dma.done [#allocation11], 16
        $region128: #{tpu_custom_call.1} parent=107 // pred_fallthru
          _
        // Predicated region
        $region129: #{tpu_custom_call.1} parent=107 // pred_check
          %p815 = pneg %p273
        $region130: #{tpu_custom_call.1} parent=107 // pred_check_branch
          %817 = sbr.rel (%p815) target = $region132
        $region131: #{tpu_custom_call.1} parent=107 // pred_region
          %819 = dma.done [#allocation14], 16
        $region132: #{tpu_custom_call.1} parent=107 // pred_fallthru
          _
        // Predicated region
        $region133: #{tpu_custom_call.1} parent=107 // pred_check
          %p820 = pneg %p294
        $region134: #{tpu_custom_call.1} parent=107 // pred_check_branch
          %822 = sbr.rel (%p820) target = $region136
        $region135: #{tpu_custom_call.1} parent=107 // pred_region
          %824 = dma.done [#allocation14], 256
        $region136: #{tpu_custom_call.1} parent=107 // pred_fallthru
          _
        // Predicated region
        $region137: #{tpu_custom_call.1} parent=107 // pred_check
          %p825 = pneg %p315
        $region138: #{tpu_custom_call.1} parent=107 // pred_check_branch
          %827 = sbr.rel (%p825) target = $region140
        $region139: #{tpu_custom_call.1} parent=107 // pred_region
          %829 = dma.done [#allocation17], 16
        $region140: #{tpu_custom_call.1} parent=107 // pred_fallthru
          _
        // Predicated region
        $region141: #{tpu_custom_call.1} parent=107 // pred_check
          %p830 = pneg %p336
        $region142: #{tpu_custom_call.1} parent=107 // pred_check_branch
          %832 = sbr.rel (%p830) target = $region144
        $region143: #{tpu_custom_call.1} parent=107 // pred_region
          %834 = dma.done [#allocation17], 256
        $region144: #{tpu_custom_call.1} parent=107 // pred_fallthru
          _
        // Predicated region
        $region145: #{tpu_custom_call.1} parent=107 // pred_check
          %p835 = pneg %p357
        $region146: #{tpu_custom_call.1} parent=107 // pred_check_branch
          %837 = sbr.rel (%p835) target = $region148
        $region147: #{tpu_custom_call.1} parent=107 // pred_region
          %839 = dma.done [#allocation20], 16
        $region148: #{tpu_custom_call.1} parent=107 // pred_fallthru
          _
        // Predicated region
        $region149: #{tpu_custom_call.1} parent=107 // pred_check
          %p840 = pneg %p378
        $region150: #{tpu_custom_call.1} parent=107 // pred_check_branch
          %842 = sbr.rel (%p840) target = $region152
        $region151: #{tpu_custom_call.1} parent=107 // pred_region
          %844 = dma.done [#allocation20], 16
        $region152: #{tpu_custom_call.1} parent=107 // pred_fallthru
          _
        // Predicated region
        $region153: #{tpu_custom_call.1} parent=107 // pred_check
          %p845 = pneg %p399
        $region154: #{tpu_custom_call.1} parent=107 // pred_check_branch
          %847 = sbr.rel (%p845) target = $region156
        $region155: #{tpu_custom_call.1} parent=107 // pred_region
          %849 = dma.done [#allocation23], 16
        $region156: #{tpu_custom_call.1} parent=107 // pred_fallthru
          _
        // Predicated region
        $region157: #{tpu_custom_call.1} parent=107 // pred_check
          %p850 = pneg %p420
        $region158: #{tpu_custom_call.1} parent=107 // pred_check_branch
          %852 = sbr.rel (%p850) target = $region160
        $region159: #{tpu_custom_call.1} parent=107 // pred_region
          %854 = dma.done [#allocation23], 256
        $region160: #{tpu_custom_call.1} parent=107 // pred_fallthru
          _
        // Predicated region
        $region161: #{tpu_custom_call.1} parent=107 // pred_check
          %p855 = pneg %p441
        $region162: #{tpu_custom_call.1} parent=107 // pred_check_branch
          %857 = sbr.rel (%p855) target = $region164
        $region163: #{tpu_custom_call.1} parent=107 // pred_region
          %859 = dma.done [#allocation26], 16
        $region164: #{tpu_custom_call.1} parent=107 // pred_fallthru
          _
        %p860 = scmp.lt.s32.totalorder %s50, 1
        %s861 = scalar_select %p860, %s50, 1
        %s862 = smul.addr %s861, 8
        %s863 = scalar_lea.vmem %s0, %s862
        %p864 = pneg %p79
        %p865 = pneg %p76
        %s866 = sand.u32 %s92, 1
        %s867 = scalar_lea.sflag [#allocation5], %s866
        %s868 = sand.u32 %s92, 1
        %s869 = scalar_lea.vmem [#allocation4], %s868
        %p870 = pneg %p105
        %p871 = pneg %p102
        %p872 = pneg %p126
        %p873 = pneg %p123
        %p874 = pneg %p147
        %p875 = pneg %p144
        %p876 = pneg %p168
        %p877 = pneg %p165
        %p878 = pneg %p189
        %p879 = pneg %p186
        %p880 = pneg %p210
        %p881 = pneg %p207
        %p882 = pneg %p231
        %p883 = pneg %p228
        %p884 = pneg %p252
        %p885 = pneg %p249
        %p886 = pneg %p273
        %p887 = pneg %p270
        %p888 = pneg %p294
        %p889 = pneg %p291
        %p890 = pneg %p315
        %p891 = pneg %p312
        %p892 = pneg %p336
        %p893 = pneg %p333
        %p894 = pneg %p357
        %p895 = pneg %p354
        %p896 = pneg %p378
        %p897 = pneg %p375
        %p898 = pneg %p399
        %p899 = pneg %p396
        %p900 = pneg %p420
        %p901 = pneg %p417
        %p902 = pneg %p441
        %p903 = pneg %p438
        %p904 = pneg %p462
        %p905 = pneg %p459
        %p906 = pneg %p483
        %p907 = pneg %p480
        %p908 = pneg %p504
        %p909 = pneg %p501
        %p910 = pneg %p525
        %p911 = pneg %p522
        %p912 = pneg %p553
        %p913 = pneg %p550
        %s914 = sand.u32 %s540, 1
        %s915 = scalar_lea.sflag [#allocation6], %s914
        %s916 = sand.u32 %s540, 1
        %s917 = smul.addr %s916, 8
        %s918 = scalar_lea.vmem [#allocation27], %s917
        %p919 = scmp.lt.s32.totalorder %s50, 1
        %s920 = scalar_select %p919, %s50, 1
        %s921 = smul.addr %s920, 8
        %s922 = scalar_lea.vmem %s0, %s921
        %p924 = scmp.eq.s32.totalorder %s51, 0
        // Predicated region
        $region165: #{tpu_custom_call.1} parent=107 // pred_check
          %p925 = pneg %p924
        $region166: #{tpu_custom_call.1} parent=107 // pred_check_branch
          %927 = sbr.rel (%p925) target = $region168
        $region167: #{tpu_custom_call.1} parent=107 // pred_region
          %v928 = vld [vmem:[%s922] sm:$0xff]
          %v929 = vld [vmem:[%s2] sm:$0x1]
          %v930 = vld [vmem:[#allocation7] sm:$0x1]
          %vm931 = vcmask 261120
          %v932 = vsel %vm931, %v928, 0.0
          %933 = vadd.xlane.f32.xlu0 %v932
          %v934 = vpop.xlane.xlu0 %933
          %v935 = vrcp.pop 32.0
          %v936 = vmul.f32 32.0, %v935
          %v937 = vsub.f32 1.0, %v936
          %v938 = vmul.f32 %v935, %v937
          %v939 = vadd.f32 %v935, %v938
          %vm940 = vweird.f32 %v935
          %v941 = vsel %vm940, %v935, %v939
          %v942 = vmul.f32 %v934, %v941
          %v943 = vsub.f32 %v928, %v942
          %v944 = vmul.f32 %v943, %v943
          %v945 = vsel %vm931, %v944, 0.0
          %946 = vadd.xlane.f32.xlu0 %v945
          %v947 = vpop.xlane.xlu0 %946
          %v948 = vmul.f32 %v947, %v941
          %v949 = vadd.f32 %v948, 1e-05
          %v950 = vrsqrt.pop %v949
          %v951 = vmul.f32 %v950, %v949
          %v952 = vmul.f32 %v951, %v950
          %v953 = vmul.f32 0.5, %v952
          %v954 = vsub.f32 1.5, %v953
          %v955 = vmul.f32 %v950, %v954
          %vm956 = vweird.f32 %v949
          %vm957 = vweird.f32 %v950
          %vm958 = vmor %vm956, %vm957
          %v959 = vsel %vm958, %v950, %v955
          %v960 = vmul.f32 %v943, %v959
          %v962 = vperm.slane %v929, 0
          %v964 = vmul.f32 %v960, %v962
          %v966 = vperm.slane %v930, 0
          %v968 = vadd.f32 %v964, %v966
          %v969 = vld [vmem:[#allocation9] sm:$0x1]
          %v970 = vld [vmem:[#allocation10] sm:$0x1]
          %v971 = vsel %vm931, %v968, 0.0
          %972 = vadd.xlane.f32.xlu0 %v971
          %v973 = vpop.xlane.xlu0 %972
          %v974 = vmul.f32 %v973, %v941
          %v975 = vsub.f32 %v968, %v974
          %v976 = vmul.f32 %v975, %v975
          %v977 = vsel %vm931, %v976, 0.0
          %978 = vadd.xlane.f32.xlu0 %v977
          %v979 = vpop.xlane.xlu0 %978
          %v980 = vmul.f32 %v979, %v941
          %v981 = vadd.f32 %v980, 1e-05
          %v982 = vrsqrt.pop %v981
          %v983 = vmul.f32 %v982, %v981
          %v984 = vmul.f32 %v983, %v982
          %v985 = vmul.f32 0.5, %v984
          %v986 = vsub.f32 1.5, %v985
          %v987 = vmul.f32 %v982, %v986
          %vm988 = vweird.f32 %v981
          %vm989 = vweird.f32 %v982
          %vm990 = vmor %vm988, %vm989
          %v991 = vsel %vm990, %v982, %v987
          %v992 = vmul.f32 %v975, %v991
          %v994 = vperm.slane %v969, 0
          %v996 = vmul.f32 %v992, %v994
          %v998 = vperm.slane %v970, 0
          %v1000 = vadd.f32 %v996, %v998
          %v1001 = vpack.c.bf16 %v1000, %v1000
          %v1002 = vld [vmem:[%s8] sm:$0xf]
          %v1003 = vld [vmem:[%s8 + $0x4] sm:$0xf]
          %v1004 = vld [vmem:[%s8 + $0x8] sm:$0xf]
          %v1005 = vld [vmem:[%s8 + $0xc] sm:$0xf]
          %v1006 = vld [vmem:[#allocation13] sm:$0x1]
          %v1008 = vperm.slane %v1006, 0
          %v1014 = vunpack.c.l.b16 %v1002
          %v1015 = vunpack.c.l.b16 %v1003
          %v1016 = vunpack.c.l.b16 %v1004
          %v1017 = vunpack.c.l.b16 %v1005
          %v1018 = vpack.c.b16 %v1015, %v1014
          %v1019 = vpack.c.b16 %v1017, %v1016
          %v1023 = vsel %vm931, %v1001, 0
          %1025 = vmatpush.bf16.msra.mxu0 0
          %1026 = vmatpush.bf16.msra.mxu0 0
          %1027 = vmatpush.bf16.msra.mxu0 0
          %1028 = vmatpush.bf16.msra.mxu0 0
          %1029 = vmatpush.bf16.msra.mxu0 0
          %1030 = vmatpush.bf16.msra.mxu0 0
          %1031 = vmatpush.bf16.msra.mxu0 %v1019
          %1032 = vmatpush.bf16.msra.mxu0 %v1018
          %1033 = vmatmul.bf16.gmra.mxu0 %v1023
          %v1034 = vpop.f32.mrf.mxu0
          %v1035 = vadd.f32 %v1008, %v1034
          %v1036 = vpop.f32.mrf.mxu0
          %1037 = vdwg.mxu0
          %v1038 = vld [vmem:[#allocation15] sm:$0xf]
          %v1039 = vld [vmem:[#allocation15 + $0x4] sm:$0xf]
          %v1040 = vld [vmem:[#allocation15 + $0x8] sm:$0xf]
          %v1041 = vld [vmem:[#allocation15 + $0xc] sm:$0xf]
          %v1042 = vld [vmem:[#allocation16] sm:$0x1]
          %v1044 = vperm.slane %v1042, 0
          %v1050 = vunpack.c.l.b16 %v1038
          %v1051 = vunpack.c.l.b16 %v1039
          %v1052 = vunpack.c.l.b16 %v1040
          %v1053 = vunpack.c.l.b16 %v1041
          %v1054 = vpack.c.b16 %v1051, %v1050
          %v1055 = vpack.c.b16 %v1053, %v1052
          %1058 = vmatpush.bf16.msra.mxu0 0
          %1059 = vmatpush.bf16.msra.mxu0 0
          %1060 = vmatpush.bf16.msra.mxu0 0
          %1061 = vmatpush.bf16.msra.mxu0 0
          %1062 = vmatpush.bf16.msra.mxu0 0
          %1063 = vmatpush.bf16.msra.mxu0 0
          %1064 = vmatpush.bf16.msra.mxu0 %v1055
          %1065 = vmatpush.bf16.msra.mxu0 %v1054
          %1066 = vmatmul.bf16.gmra.mxu0 %v1023
          %v1067 = vpop.f32.mrf.mxu0
          %v1068 = vadd.f32 %v1044, %v1067
          %v1069 = vpop.f32.mrf.mxu0
          %1070 = vdwg.mxu0
          %v1071 = vpack.c.bf16 %v1035, %v1035
          %vm1072 = vcmask 125952
          %1073 = vst.msk [vmem:[#allocation2] sm:$0xf] %vm1072, %v1071
          %v1074 = vpack.c.bf16 %v1068, %v1068
          %1075 = vst.msk [vmem:[#allocation3] sm:$0xf] %vm1072, %v1074
          %1077 = vrot.lane.b32.xlu0 %v1071, 112
          %v1078 = vpop.permute.xlu0 %1077
          %s1080 = scalar_lea.vmem [#allocation2], 4
          %1081 = vst.msk [vmem:[%s1080] sm:$0xf] %vm1072, %v1078
          %1083 = vrot.lane.b32.xlu0 %v1074, 112
          %v1084 = vpop.permute.xlu0 %1083
          %s1086 = scalar_lea.vmem [#allocation3], 4
          %1087 = vst.msk [vmem:[%s1086] sm:$0xf] %vm1072, %v1084
        $region168: #{tpu_custom_call.1} parent=107 // pred_fallthru
          _
        %s1088 = smul.u32 %s51, 8
        %s1089 = scalar_lea.vmem %s922, %s1088
        %v1090 = vld [vmem:[%s1089] sm:$0xff]
        %v1091 = vld [vmem:[%s2] sm:$0x1]
        %v1092 = vld [vmem:[#allocation7] sm:$0x1]
        %vm1093 = vcmask 261120
        %v1094 = vsel %vm1093, %v1090, 0.0
        %1095 = vadd.xlane.f32.xlu0 %v1094
        %v1096 = vpop.xlane.xlu0 %1095
        %v1097 = vrcp.pop 32.0
        %v1098 = vmul.f32 32.0, %v1097
        %v1099 = vsub.f32 1.0, %v1098
        %v1100 = vmul.f32 %v1097, %v1099
        %v1101 = vadd.f32 %v1097, %v1100
        %vm1102 = vweird.f32 %v1097
        %v1103 = vsel %vm1102, %v1097, %v1101
        %v1104 = vmul.f32 %v1096, %v1103
        %v1105 = vsub.f32 %v1090, %v1104
        %v1106 = vmul.f32 %v1105, %v1105
        %v1107 = vsel %vm1093, %v1106, 0.0
        %1108 = vadd.xlane.f32.xlu0 %v1107
        %v1109 = vpop.xlane.xlu0 %1108
        %v1110 = vmul.f32 %v1109, %v1103
        %v1111 = vadd.f32 %v1110, 1e-05
        %v1112 = vrsqrt.pop %v1111
        %v1113 = vmul.f32 %v1112, %v1111
        %v1114 = vmul.f32 %v1113, %v1112
        %v1115 = vmul.f32 0.5, %v1114
        %v1116 = vsub.f32 1.5, %v1115
        %v1117 = vmul.f32 %v1112, %v1116
        %vm1118 = vweird.f32 %v1111
        %vm1119 = vweird.f32 %v1112
        %vm1120 = vmor %vm1118, %vm1119
        %v1121 = vsel %vm1120, %v1112, %v1117
        %v1122 = vmul.f32 %v1105, %v1121
        %v1124 = vperm.slane %v1091, 0
        %v1126 = vmul.f32 %v1122, %v1124
        %v1128 = vperm.slane %v1092, 0
        %v1130 = vadd.f32 %v1126, %v1128
        %v1131 = vld [vmem:[#allocation9] sm:$0x1]
        %v1132 = vld [vmem:[#allocation10] sm:$0x1]
        %v1133 = vsel %vm1093, %v1130, 0.0
        %1134 = vadd.xlane.f32.xlu0 %v1133
        %v1135 = vpop.xlane.xlu0 %1134
        %v1136 = vmul.f32 %v1135, %v1103
        %v1137 = vsub.f32 %v1130, %v1136
        %v1138 = vmul.f32 %v1137, %v1137
        %v1139 = vsel %vm1093, %v1138, 0.0
        %1140 = vadd.xlane.f32.xlu0 %v1139
        %v1141 = vpop.xlane.xlu0 %1140
        %v1142 = vmul.f32 %v1141, %v1103
        %v1143 = vadd.f32 %v1142, 1e-05
        %v1144 = vrsqrt.pop %v1143
        %v1145 = vmul.f32 %v1144, %v1143
        %v1146 = vmul.f32 %v1145, %v1144
        %v1147 = vmul.f32 0.5, %v1146
        %v1148 = vsub.f32 1.5, %v1147
        %v1149 = vmul.f32 %v1144, %v1148
        %vm1150 = vweird.f32 %v1143
        %vm1151 = vweird.f32 %v1144
        %vm1152 = vmor %vm1150, %vm1151
        %v1153 = vsel %vm1152, %v1144, %v1149
        %v1154 = vmul.f32 %v1137, %v1153
        %v1156 = vperm.slane %v1131, 0
        %v1158 = vmul.f32 %v1154, %v1156
        %v1160 = vperm.slane %v1132, 0
        %v1162 = vadd.f32 %v1158, %v1160
        %v1163 = vpack.c.bf16 %v1162, %v1162
        %v1164 = vld [vmem:[%s6] sm:$0xf]
        %v1165 = vld [vmem:[%s6 + $0x4] sm:$0xf]
        %v1166 = vld [vmem:[%s6 + $0x8] sm:$0xf]
        %v1167 = vld [vmem:[%s6 + $0xc] sm:$0xf]
        %v1168 = vld [vmem:[#allocation12] sm:$0x1]
        %v1170 = vperm.slane %v1168, 0
        %v1176 = vunpack.c.l.b16 %v1164
        %v1177 = vunpack.c.l.b16 %v1165
        %v1178 = vunpack.c.l.b16 %v1166
        %v1179 = vunpack.c.l.b16 %v1167
        %v1180 = vpack.c.b16 %v1177, %v1176
        %v1181 = vpack.c.b16 %v1179, %v1178
        %v1185 = vsel %vm1093, %v1163, 0
        %1187 = vmatpush.bf16.msra.mxu0 0
        %1188 = vmatpush.bf16.msra.mxu0 0
        %1189 = vmatpush.bf16.msra.mxu0 0
        %1190 = vmatpush.bf16.msra.mxu0 0
        %1191 = vmatpush.bf16.msra.mxu0 0
        %1192 = vmatpush.bf16.msra.mxu0 0
        %1193 = vmatpush.bf16.msra.mxu0 %v1181
        %1194 = vmatpush.bf16.msra.mxu0 %v1180
        %1195 = vmatmul.bf16.gmra.mxu0 %v1185
        %v1196 = vpop.f32.mrf.mxu0
        %v1197 = vadd.f32 %v1170, %v1196
        %v1198 = vpop.f32.mrf.mxu0
        %1199 = vdwg.mxu0
        %1201 = vrot.lane.b32.xlu0 %v1197, 112
        %v1202 = vpop.permute.xlu0 %1201
        %v1204 = vpack.c.bf16 %v1197, %v1197
        %v1205 = vpack.c.bf16 %v1202, %v1202
        %v1206 = vld [vmem:[%s789] sm:$0x1]
        %v1207 = vld [vmem:[#allocation2] sm:$0xf]
        %v1208 = vld [vmem:[#allocation2 + $0x4] sm:$0xf]
        %v1210 = vperm.slane %v1206, 0
        %vm1212 = vcmask 130048
        %v1214 = vsel %vm1212, %v1204, 0
        %v1217 = vsel %vm1212, %v1207, 0
        %1219 = vmatpush.bf16.xpose.msra.mxu0 0
        %1220 = vmatpush.bf16.xpose.msra.mxu0 0
        %1221 = vmatpush.bf16.xpose.msra.mxu0 0
        %1222 = vmatpush.bf16.xpose.msra.mxu0 0
        %1223 = vmatpush.bf16.xpose.msra.mxu0 0
        %1224 = vmatpush.bf16.xpose.msra.mxu0 0
        %1225 = vmatpush.bf16.xpose.msra.mxu0 0
        %1226 = vmatpush.bf16.xpose.msra.mxu0 %v1217
        %1227 = vmatmul.bf16.gmra.mxu0 %v1214
        %v1228 = vpop.f32.mrf.mxu0
        %v1229 = vadd.f32 %v1210, %v1228
        %v1230 = vpop.f32.mrf.mxu0
        %1231 = vdwg.mxu0
        %v1233 = vsel %vm1212, %v1205, 0
        %v1236 = vsel %vm1212, %v1208, 0
        %1238 = vmatpush.bf16.xpose.msra.mxu0 0
        %1239 = vmatpush.bf16.xpose.msra.mxu0 0
        %1240 = vmatpush.bf16.xpose.msra.mxu0 0
        %1241 = vmatpush.bf16.xpose.msra.mxu0 0
        %1242 = vmatpush.bf16.xpose.msra.mxu0 0
        %1243 = vmatpush.bf16.xpose.msra.mxu0 0
        %1244 = vmatpush.bf16.xpose.msra.mxu0 0
        %1245 = vmatpush.bf16.xpose.msra.mxu0 %v1236
        %1246 = vmatmul.bf16.gmra.mxu0 %v1233
        %v1247 = vpop.f32.mrf.mxu0
        %v1248 = vadd.f32 %v1210, %v1247
        %v1249 = vpop.f32.mrf.mxu0
        %1250 = vdwg.mxu0
        %vm1251 = vcmask 64512
        %v1252 = vsel %vm1251, %v1229, -inf
        %1253 = vmax.xlane.f32.xlu0 %v1252
        %v1254 = vpop.xlane.xlu0 %1253
        %v1255 = vsel %vm1251, %v1248, -inf
        %1256 = vmax.xlane.f32.xlu0 %v1255
        %v1257 = vpop.xlane.xlu0 %1256
        %v1258 = vsub.f32 %v1229, %v1254
        %v1259 = vsub.f32 %v1248, %v1257
        %v1260 = vmul.f32 %v1258, 1.442695
        %v1261 = vpow.pop %v1260
        %v1262 = vmul.f32 %v1259, 1.442695
        %v1263 = vpow.pop %v1262
        %v1264 = vsel %vm1251, %v1261, 0.0
        %1265 = vadd.xlane.f32.xlu0 %v1264
        %v1266 = vpop.xlane.xlu0 %1265
        %v1267 = vsel %vm1251, %v1263, 0.0
        %1268 = vadd.xlane.f32.xlu0 %v1267
        %v1269 = vpop.xlane.xlu0 %1268
        %v1270 = vrcp.pop %v1266
        %v1271 = vrcp.pop %v1269
        %v1272 = vmul.f32 %v1261, %v1270
        %v1273 = vmul.f32 %v1263, %v1271
        %v1274 = vpack.c.bf16 %v1272, %v1272
        %v1275 = vpack.c.bf16 %v1273, %v1273
        %v1276 = vld [vmem:[#allocation3] sm:$0xf]
        %v1277 = vld [vmem:[#allocation3 + $0x4] sm:$0xf]
        %v1279 = vsel %vm1251, %v1274, 0
        %vm1281 = vcmask 1043456
        %v1283 = vsel %vm1281, %v1276, 0
        %1285 = vmatpush.bf16.msra.mxu0 0
        %1286 = vmatpush.bf16.msra.mxu0 0
        %1287 = vmatpush.bf16.msra.mxu0 0
        %1288 = vmatpush.bf16.msra.mxu0 0
        %1289 = vmatpush.bf16.msra.mxu0 0
        %1290 = vmatpush.bf16.msra.mxu0 0
        %1291 = vmatpush.bf16.msra.mxu0 0
        %1292 = vmatpush.bf16.msra.mxu0 %v1283
        %1293 = vmatmul.bf16.gmra.mxu0 %v1279
        %v1294 = vpop.f32.mrf.mxu0
        %v1295 = vadd.f32 0.0, %v1294
        %v1296 = vpop.f32.mrf.mxu0
        %1297 = vdwg.mxu0
        %v1299 = vsel %vm1251, %v1275, 0
        %v1302 = vsel %vm1281, %v1277, 0
        %1304 = vmatpush.bf16.msra.mxu0 0
        %1305 = vmatpush.bf16.msra.mxu0 0
        %1306 = vmatpush.bf16.msra.mxu0 0
        %1307 = vmatpush.bf16.msra.mxu0 0
        %1308 = vmatpush.bf16.msra.mxu0 0
        %1309 = vmatpush.bf16.msra.mxu0 0
        %1310 = vmatpush.bf16.msra.mxu0 0
        %1311 = vmatpush.bf16.msra.mxu0 %v1302
        %1312 = vmatmul.bf16.gmra.mxu0 %v1299
        %v1313 = vpop.f32.mrf.mxu0
        %v1314 = vadd.f32 0.0, %v1313
        %v1315 = vpop.f32.mrf.mxu0
        %1316 = vdwg.mxu0
        %1318 = vrot.lane.b32.xlu0 %v1314, 16
        %v1319 = vpop.permute.xlu0 %1318
        %v1321 = vsel %vm1212, %v1295, %v1319
        %v1322 = vpack.c.bf16 %v1321, %v1321
        %v1323 = vld [vmem:[#allocation18] sm:$0xf]
        %v1324 = vld [vmem:[#allocation18 + $0x4] sm:$0xf]
        %v1325 = vld [vmem:[#allocation18 + $0x8] sm:$0xf]
        %v1326 = vld [vmem:[#allocation18 + $0xc] sm:$0xf]
        %v1327 = vld [vmem:[#allocation19] sm:$0x1]
        %v1329 = vperm.slane %v1327, 0
        %v1335 = vunpack.c.l.b16 %v1323
        %v1336 = vunpack.c.l.b16 %v1324
        %v1337 = vunpack.c.l.b16 %v1325
        %v1338 = vunpack.c.l.b16 %v1326
        %v1339 = vpack.c.b16 %v1336, %v1335
        %v1340 = vpack.c.b16 %v1338, %v1337
        %v1344 = vsel %vm1093, %v1322, 0
        %1346 = vmatpush.bf16.msra.mxu0 0
        %1347 = vmatpush.bf16.msra.mxu0 0
        %1348 = vmatpush.bf16.msra.mxu0 0
        %1349 = vmatpush.bf16.msra.mxu0 0
        %1350 = vmatpush.bf16.msra.mxu0 0
        %1351 = vmatpush.bf16.msra.mxu0 0
        %1352 = vmatpush.bf16.msra.mxu0 %v1340
        %1353 = vmatpush.bf16.msra.mxu0 %v1339
        %1354 = vmatmul.bf16.gmra.mxu0 %v1344
        %v1355 = vpop.f32.mrf.mxu0
        %v1356 = vadd.f32 %v1329, %v1355
        %v1357 = vpop.f32.mrf.mxu0
        %1358 = vdwg.mxu0
        %v1359 = vadd.f32 %v1130, %v1356
        %v1360 = vld [vmem:[#allocation21] sm:$0x1]
        %v1361 = vld [vmem:[#allocation22] sm:$0x1]
        %v1362 = vsel %vm1093, %v1359, 0.0
        %1363 = vadd.xlane.f32.xlu0 %v1362
        %v1364 = vpop.xlane.xlu0 %1363
        %v1365 = vmul.f32 %v1364, %v1103
        %v1366 = vsub.f32 %v1359, %v1365
        %v1367 = vmul.f32 %v1366, %v1366
        %v1368 = vsel %vm1093, %v1367, 0.0
        %1369 = vadd.xlane.f32.xlu0 %v1368
        %v1370 = vpop.xlane.xlu0 %1369
        %v1371 = vmul.f32 %v1370, %v1103
        %v1372 = vadd.f32 %v1371, 1e-05
        %v1373 = vrsqrt.pop %v1372
        %v1374 = vmul.f32 %v1373, %v1372
        %v1375 = vmul.f32 %v1374, %v1373
        %v1376 = vmul.f32 0.5, %v1375
        %v1377 = vsub.f32 1.5, %v1376
        %v1378 = vmul.f32 %v1373, %v1377
        %vm1379 = vweird.f32 %v1372
        %vm1380 = vweird.f32 %v1373
        %vm1381 = vmor %vm1379, %vm1380
        %v1382 = vsel %vm1381, %v1373, %v1378
        %v1383 = vmul.f32 %v1366, %v1382
        %v1385 = vperm.slane %v1360, 0
        %v1387 = vmul.f32 %v1383, %v1385
        %v1389 = vperm.slane %v1361, 0
        %v1391 = vadd.f32 %v1387, %v1389
        %v1392 = vpack.c.bf16 %v1391, %v1391
        %v1393 = vld [vmem:[#allocation24] sm:$0xf]
        %v1394 = vld [vmem:[#allocation24 + $0x4] sm:$0xf]
        %v1395 = vld [vmem:[#allocation24 + $0x8] sm:$0xf]
        %v1396 = vld [vmem:[#allocation24 + $0xc] sm:$0xf]
        %v1397 = vld [vmem:[#allocation25] sm:$0x1]
        %v1399 = vperm.slane %v1397, 0
        %v1405 = vunpack.c.l.b16 %v1393
        %v1406 = vunpack.c.l.b16 %v1394
        %v1407 = vunpack.c.l.b16 %v1395
        %v1408 = vunpack.c.l.b16 %v1396
        %v1409 = vpack.c.b16 %v1406, %v1405
        %v1410 = vpack.c.b16 %v1408, %v1407
        %v1414 = vsel %vm1093, %v1392, 0
        %1416 = vmatpush.bf16.msra.mxu0 0
        %1417 = vmatpush.bf16.msra.mxu0 0
        %1418 = vmatpush.bf16.msra.mxu0 0
        %1419 = vmatpush.bf16.msra.mxu0 0
        %1420 = vmatpush.bf16.msra.mxu0 0
        %1421 = vmatpush.bf16.msra.mxu0 0
        %1422 = vmatpush.bf16.msra.mxu0 %v1410
        %1423 = vmatpush.bf16.msra.mxu0 %v1409
        %1424 = vmatmul.bf16.gmra.mxu0 %v1414
        %v1425 = vpop.f32.mrf.mxu0
        %v1426 = vadd.f32 %v1399, %v1425
        %v1427 = vpop.f32.mrf.mxu0
        %1428 = vdwg.mxu0
        %v1429 = vmul.f32 %v1426, 0.5
        %v1430 = vmul.f32 %v1426, 0.044715
        %v1431 = vmul.f32 %v1430, %v1426
        %v1432 = vmul.f32 %v1431, %v1426
        %v1433 = vadd.f32 %v1426, %v1432
        %v1434 = vmul.f32 %v1433, 0.7978846
        %v1435 = vtanh.pop %v1434
        %v1436 = vadd.f32 %v1435, 1.0
        %v1437 = vmul.f32 %v1429, %v1436
        %v1438 = vpack.c.bf16 %v1437, %v1437
        %v1439 = vld [vmem:[%s18] sm:$0xf]
        %v1440 = vld [vmem:[%s18 + $0x4] sm:$0xf]
        %v1441 = vld [vmem:[%s18 + $0x8] sm:$0xf]
        %v1442 = vld [vmem:[%s18 + $0xc] sm:$0xf]
        %v1443 = vld [vmem:[%s18 + $0x10] sm:$0xf]
        %v1444 = vld [vmem:[%s18 + $0x14] sm:$0xf]
        %v1445 = vld [vmem:[%s18 + $0x18] sm:$0xf]
        %v1446 = vld [vmem:[%s18 + $0x1c] sm:$0xf]
        %v1447 = vld [vmem:[%s19] sm:$0x1]
        %v1449 = vperm.slane %v1447, 0
        %v1459 = vunpack.c.l.b16 %v1439
        %v1460 = vunpack.c.l.b16 %v1440
        %v1461 = vunpack.c.l.b16 %v1441
        %v1462 = vunpack.c.l.b16 %v1442
        %v1463 = vunpack.c.l.b16 %v1443
        %v1464 = vunpack.c.l.b16 %v1444
        %v1465 = vunpack.c.l.b16 %v1445
        %v1466 = vunpack.c.l.b16 %v1446
        %v1467 = vpack.c.b16 %v1460, %v1459
        %v1468 = vpack.c.b16 %v1462, %v1461
        %v1469 = vpack.c.b16 %v1464, %v1463
        %v1470 = vpack.c.b16 %v1466, %v1465
        %vm1475 = vcmask 523264
        %v1477 = vsel %vm1475, %v1438, 0
        %1479 = vmatpush.bf16.msra.mxu0 0
        %1480 = vmatpush.bf16.msra.mxu0 0
        %1481 = vmatpush.bf16.msra.mxu0 0
        %1482 = vmatpush.bf16.msra.mxu0 0
        %1483 = vmatpush.bf16.msra.mxu0 %v1470
        %1484 = vmatpush.bf16.msra.mxu0 %v1469
        %1485 = vmatpush.bf16.msra.mxu0 %v1468
        %1486 = vmatpush.bf16.msra.mxu0 %v1467
        %1487 = vmatmul.bf16.gmra.mxu0 %v1477
        %v1488 = vpop.f32.mrf.mxu0
        %v1489 = vadd.f32 %v1449, %v1488
        %v1490 = vpop.f32.mrf.mxu0
        %1491 = vdwg.mxu0
        %v1492 = vadd.f32 %v1359, %v1489
        %1493 = vst.msk [vmem:[%s918] sm:$0xff] %vm1093, %v1492
        %s1494 = sand.u32 %s540, 1
        %s1495 = scalar_lea.sflag [#allocation6], %s1494
        %s1496 = sand.u32 %s540, 1
        %s1497 = smul.addr %s1496, 8
        %s1498 = scalar_lea.vmem [#allocation27], %s1497
        // Predicated region
        $region169: #{tpu_custom_call.1} parent=107 // pred_check
          %p1499 = pneg %p550
        $region170: #{tpu_custom_call.1} parent=107 // pred_check_branch
          %1501 = sbr.rel (%p1499) target = $region172
        $region171: #{tpu_custom_call.1} parent=107 // pred_region
          %1503 = vsyncadd %s1495, 0
          %s1504 = sadd.s32 %s51, %s50
          %s1505 = smul.addr %s1504, 8
          %s1506 = scalar_lea.hbm %s22, %s1505
          %s1508 = sshll.u32 %s1498, 4
          %s1509 = int_to_ptr.vmem [resolvable:$true] %s1508
          %s1510 = sshll.u32 %s1506, 4
          %s1511 = int_to_ptr.hbm [resolvable:$true] %s1510
          %1513 = dma.vmem_to_hbm [thread:$0]  %s1509, 128, %s1511, %s1495
        $region172: #{tpu_custom_call.1} parent=107 // pred_fallthru
          _
      $region108: #{tpu_custom_call.1} parent=5 // pred_fallthru
        _
      %p1514 = scmp.le.s32.totalorder 2, %s41
      // Predicated region
      $region173: #{tpu_custom_call.1} parent=5 // pred_check
        %p1515 = pneg %p1514
      $region174: #{tpu_custom_call.1} parent=5 // pred_check_branch
        %1517 = sbr.rel (%p1515) target = $region176
      $region175: #{tpu_custom_call.1} parent=5 // pred_region
        %s1518 = ssub.s32 %s41, 2
        // Predicated region
        $region177: #{tpu_custom_call.1} parent=175 // pred_check
          %p1519 = pneg %p556
        $region178: #{tpu_custom_call.1} parent=175 // pred_check_branch
          %1521 = sbr.rel (%p1519) target = $region180
        $region179: #{tpu_custom_call.1} parent=175 // pred_region
          %s1522 = sand.u32 %s541, 1
          %s1523 = scalar_lea.sflag [#allocation6], %s1522
          %s1524 = sand.u32 %s541, 1
          %s1525 = smul.addr %s1524, 8
          %s1526 = scalar_lea.vmem [#allocation27], %s1525
          %1528 = dma.done %s1523, 128
        $region180: #{tpu_custom_call.1} parent=175 // pred_fallthru
          _
      $region176: #{tpu_custom_call.1} parent=5 // pred_fallthru
        _
    $region6: #{tpu_custom_call.1} parent=1 // loop_footer
      %s45 = sadd.s32 1, %s41
    $region7: #{tpu_custom_call.1} parent=1 // loop_footer_branch
      %40 = sbr.rel target = $region3
    $region8: #{tpu_custom_call.1} parent=1 // loop_exit
      _
    %1529 = vsyncpa [#allocation5], 1
    %s1530 = scalar_lea.sflag [#allocation5], 1
    %1531 = vsyncpa %s1530, 1
    %1532 = vsyncpa [#allocation8], 1
    %1533 = vsyncpa [#allocation11], 1
    %1534 = vsyncpa [#allocation14], 1
    %1535 = vsyncpa [#allocation17], 1
    %1536 = vsyncpa [#allocation20], 1
    %1537 = vsyncpa [#allocation23], 1
    %1538 = vsyncpa [#allocation26], 1
    %1539 = vsyncpa [#allocation6], 1
    %s1540 = scalar_lea.sflag [#allocation6], 1
    %1541 = vsyncpa %s1540, 1

</llo_original>
